<compile_context>
chip_gen: v7x
topology: tpu7x:2x2x1
jax: 0.10.0
libtpu: 0.0.40
codegen_flags: <defaults>
</compile_context>

<pallas_src>
import jax
import jax.numpy as jnp
from jax.experimental import pallas as pl
from jax.experimental.pallas import tpu as pltpu

EPS = 1e-5   # LayerNorm / BatchNorm eps (PyTorch default)
CPAD = 128   # lane-dense padding for the class logits


def _ln(v, g, b):
    mu = jnp.mean(v, axis=-1, keepdims=True)
    var = jnp.mean(jnp.square(v - mu), axis=-1, keepdims=True)
    return (v - mu) * jax.lax.rsqrt(var + EPS) * g + b


# ----------------------------------------------------------------------------
# Fused kernel: one grid step == one batch element (num_views rows).
# TODO(synk): the real encoder_net_1 is an external CNN/ViT; a linear
# projection to 512 is used as a deterministic synthetic stand-in.
# ----------------------------------------------------------------------------
def fused_kernel(x_ref, enc_w_ref, enc_b_ref,
                 w1_ref, b1_ref, lng_ref, lnb_ref, wa_ref, ba_ref,
                 w2_ref, b2_ref, w3_ref, b3_ref, w4_ref, b4_ref,
                 w5_ref, b5_ref,
                 fcnn_ref, fvit1_ref, att_ref, fvit2_ref, fglob_ref, pred_ref):
    lng = lng_ref[...]
    lnb = lnb_ref[...]

    # ---- encoder: Linear(C*H*W -> 512), bf16 MXU operands, f32 accumulate
    f_cnn = jnp.dot(x_ref[...], enc_w_ref[...],
                    preferred_element_type=jnp.float32) + enc_b_ref[...]
    fcnn_ref[...] = f_cnn

    # ---- mlp1 + LayerNorm + attention (sigmoid)
    h = jnp.dot(f_cnn.astype(jnp.bfloat16), w1_ref[...],
                preferred_element_type=jnp.float32) + b1_ref[...]
    f1 = _ln(h, lng, lnb)
    fvit1_ref[...] = f1
    # attention as VPU mul + lane reduce (wa is a (1, D) row, ba scalar in SMEM)
    att_ref[...] = jax.nn.sigmoid(
        jnp.sum(f1 * wa_ref[...], axis=-1, keepdims=True) + ba_ref[0])

    # ---- group_pooling + max over per-group maxima == max over this batch
    #      element's views of the pre-norm mlp1 output (exact equivalence:
    #      every sigmoid score lies in exactly one bin, empty bins skipped).
    pooled = jnp.max(h, axis=0, keepdims=True)               # (1, D)

    # ---- mlp2 + LayerNorm (shared self.norm parameters, as in the reference)
    f2 = jnp.dot(pooled.astype(jnp.bfloat16), w2_ref[...],
                 preferred_element_type=jnp.float32) + b2_ref[...]
    f2 = _ln(f2, lng, lnb)
    fvit2_ref[0] = f2

    # ---- cls_head_finetune (BatchNorm folded into w3/b3, w4/b4; Dropout=id)
    g = jnp.dot(f2.astype(jnp.bfloat16), w3_ref[...],
                preferred_element_type=jnp.float32) + b3_ref[...]
    fglob_ref[0] = g                                         # cls_head[:2]
    h1 = jnp.maximum(g, 0.0)
    h2 = jnp.dot(h1.astype(jnp.bfloat16), w4_ref[...],
                 preferred_element_type=jnp.float32) + b4_ref[...]
    h2 = jnp.maximum(h2, 0.0)
    pred_ref[0] = jnp.dot(h2.astype(jnp.bfloat16), w5_ref[...],
                          preferred_element_type=jnp.float32) + b5_ref[...]


# ----------------------------------------------------------------------------
# Wrapper
# ----------------------------------------------------------------------------
def gmvit_mini_forward(x, p, batch, num_views, num_category):
    N = x.shape[0]
    assert N == batch * num_views
    x_flat = x.reshape(N, -1).astype(jnp.bfloat16)       # NCHW -> (N, C*H*W)
    F = x_flat.shape[1]
    D = p["enc_w"].shape[1]
    Dm = p["w4f"].shape[1]
    V = num_views

    def rep(shape):
        zeros = (0,) * len(shape)
        return pl.BlockSpec(shape, lambda i, z=zeros: z)   # weight replicated

    outs = pl.pallas_call(
        fused_kernel,
        out_shape=(
            jax.ShapeDtypeStruct((N, D), jnp.float32),          # f_cnn
            jax.ShapeDtypeStruct((N, D), jnp.float32),          # f_vit1
            jax.ShapeDtypeStruct((N, 1), jnp.float32),          # att
            jax.ShapeDtypeStruct((batch, 1, D), jnp.float32),   # f_vit2
            jax.ShapeDtypeStruct((batch, 1, D), jnp.float32),   # f_global
            jax.ShapeDtypeStruct((batch, 1, CPAD), jnp.float32)  # pred (padded)
        ),
        grid=(batch,),
        in_specs=[
            pl.BlockSpec((V, F), lambda i: (i, 0)),             # x_flat (bf16)
            rep((F, D)), rep((1, D)),                           # enc_w, enc_b
            rep((D, D)), rep((1, D)),                           # w1, b1
            rep((1, D)), rep((1, D)),                           # ln_g, ln_b
            rep((1, D)),                                        # wa_row
            pl.BlockSpec(memory_space=pltpu.MemorySpace.SMEM),  # ba scalar
            rep((D, D)), rep((1, D)),                           # w2, b2
            rep((D, D)), rep((1, D)),                           # w3 (BN1-folded)
            rep((D, Dm)), rep((1, Dm)),                         # w4 (BN2-folded)
            rep((Dm, CPAD)), rep((1, CPAD)),                    # w5, b5 (padded)
        ],
        out_specs=(
            pl.BlockSpec((V, D), lambda i: (i, 0)),
            pl.BlockSpec((V, D), lambda i: (i, 0)),
            pl.BlockSpec((V, 1), lambda i: (i, 0)),
            pl.BlockSpec((1, 1, D), lambda i: (i, 0, 0)),
            pl.BlockSpec((1, 1, D), lambda i: (i, 0, 0)),
            pl.BlockSpec((1, 1, CPAD), lambda i: (i, 0, 0)),
        ),
        compiler_params=pltpu.CompilerParams(
            dimension_semantics=("parallel",)),
    )(x_flat,
      p["enc_w"], p["enc_b"],
      p["w1"], p["b1"], p["ln_g"], p["ln_b"], p["wa_row"], p["ba"],
      p["w2"], p["b2"], p["w3f"], p["b3f"], p["w4f"], p["b4f"],
      p["w5p"], p["b5p"])

    f_cnn, f_vit1, att, f_vit2, f_global, pred_pad = outs
    return (f_cnn,                                     # f_cnn.reshape(-1, 512)
            f_vit1,                                    # f_vit1.reshape(-1, 512)
            att.reshape(batch, num_views),             # att.reshape(-1, views)
            f_vit2.reshape(batch, D),
            f_global.reshape(batch, D),
            pred_pad.reshape(batch, CPAD)[:, :num_category])


# ----------------------------------------------------------------------------
# Parameters: raw f32 params (PyTorch layout) + prep (BN folding, bf16 cast,
# class padding, attention-weight row, scalar bias for SMEM).
# ----------------------------------------------------------------------------
def init_raw_params(key, feat_in, D, Dm, num_cat):
    ks = jax.random.split(key, 8)
    s = 0.02
    f32 = jnp.float32
    return {
        "enc_w": s * jax.random.normal(ks[0], (feat_in, D), f32),
        "enc_b": jnp.zeros((1, D), f32),
        "w1": s * jax.random.normal(ks[1], (D, D), f32),
        "b1": jnp.zeros((1, D), f32),
        "wa": s * jax.random.normal(ks[2], (D, 1), f32),
        "ba": jnp.zeros((1,), f32),
        "ln_g": jnp.ones((1, D), f32),
        "ln_b": jnp.zeros((1, D), f32),
        "w2": s * jax.random.normal(ks[3], (D, D), f32),
        "b2": jnp.zeros((1, D), f32),
        "w3": s * jax.random.normal(ks[4], (D, D), f32),
        "b3": jnp.zeros((1, D), f32),
        "bn1_g": jnp.ones((1, D), f32), "bn1_b": jnp.zeros((1, D), f32),
        "bn1_m": jnp.zeros((1, D), f32), "bn1_v": jnp.ones((1, D), f32),
        "w4": s * jax.random.normal(ks[5], (D, Dm), f32),
        "b4": jnp.zeros((1, Dm), f32),
        "bn2_g": jnp.ones((1, Dm), f32), "bn2_b": jnp.zeros((1, Dm), f32),
        "bn2_m": jnp.zeros((1, Dm), f32), "bn2_v": jnp.ones((1, Dm), f32),
        "w5": s * jax.random.normal(ks[6], (Dm, num_cat), f32),
        "b5": jnp.zeros((1, num_cat), f32),
    }


def prepare_params(raw, num_cat):
    bf16 = jnp.bfloat16
    # fold eval-mode BatchNorm1d into the preceding Linear layers
    s1 = raw["bn1_g"] / jnp.sqrt(raw["bn1_v"] + EPS)
    w3f = raw["w3"] * s1
    b3f = (raw["b3"] - raw["bn1_m"]) * s1 + raw["bn1_b"]
    s2 = raw["bn2_g"] / jnp.sqrt(raw["bn2_v"] + EPS)
    w4f = raw["w4"] * s2
    b4f = (raw["b4"] - raw["bn2_m"]) * s2 + raw["bn2_b"]
    # pad the classifier to a lane-dense 128-wide output
    Dm = raw["w4"].shape[1]
    w5p = jnp.zeros((Dm, CPAD), jnp.float32).at[:, :num_cat].set(raw["w5"])
    b5p = jnp.zeros((1, CPAD), jnp.float32).at[:, :num_cat].set(raw["b5"])
    return {
        "enc_w": raw["enc_w"].astype(bf16), "enc_b": raw["enc_b"],
        "w1": raw["w1"].astype(bf16), "b1": raw["b1"],
        "ln_g": raw["ln_g"], "ln_b": raw["ln_b"],
        "wa_row": raw["wa"].T,          # (1, D) f32 row for VPU mul + reduce
        "ba": raw["ba"],                # (1,) f32 scalar -> SMEM
        "w2": raw["w2"].astype(bf16), "b2": raw["b2"],
        "w3f": w3f.astype(bf16), "b3f": b3f,
        "w4f": w4f.astype(bf16), "b4f": b4f,
        "w5p": w5p.astype(bf16), "b5p": b5p,
    }


if __name__ == "__main__":
    batch, num_views, group_num = 2, 8, 4
    C, H, W = 4, 16, 16
    D, Dm, num_category = 512, 256, 10
    N = batch * num_views
    feat_in = C * H * W

    key = jax.random.PRNGKey(0)
    kp, kx = jax.random.split(key)
    raw = init_raw_params(kp, feat_in, D, Dm, num_category)
    params = prepare_params(raw, num_category)
    x = jax.random.normal(kx, (N, C, H, W), jnp.float32)   # NCHW per-view images

    fwd = jax.jit(gmvit_mini_forward, static_argnums=(2, 3, 4))
    outs = fwd(x, params, batch, num_views, num_category)
    jax.block_until_ready(outs)

    f_cnn, f_vit1, att_r, f_vit2, f_global, pred = outs
    assert f_cnn.shape == (N, D)
    assert f_vit1.shape == (N, D)
    assert att_r.shape == (batch, num_views)
    assert f_vit2.shape == (batch, D)
    assert f_global.shape == (batch, D)
    assert pred.shape == (batch, num_category)
    print("KERNEL_OK")
</pallas_src>

<mosaic_0001>
module attributes {stable_mosaic.version = 11 : i64} {
  func.func @fused_kernel(%arg0: i32, %arg1: memref<8x1024xbf16, #tpu.memory_space<vmem>>, %arg2: memref<1024x512xbf16, #tpu.memory_space<vmem>>, %arg3: memref<1x512xf32, #tpu.memory_space<vmem>>, %arg4: memref<512x512xbf16, #tpu.memory_space<vmem>>, %arg5: memref<1x512xf32, #tpu.memory_space<vmem>>, %arg6: memref<1x512xf32, #tpu.memory_space<vmem>>, %arg7: memref<1x512xf32, #tpu.memory_space<vmem>>, %arg8: memref<1x512xf32, #tpu.memory_space<vmem>>, %arg9: memref<1xf32, #tpu.memory_space<smem>>, %arg10: memref<512x512xbf16, #tpu.memory_space<vmem>>, %arg11: memref<1x512xf32, #tpu.memory_space<vmem>>, %arg12: memref<512x512xbf16, #tpu.memory_space<vmem>>, %arg13: memref<1x512xf32, #tpu.memory_space<vmem>>, %arg14: memref<512x256xbf16, #tpu.memory_space<vmem>>, %arg15: memref<1x256xf32, #tpu.memory_space<vmem>>, %arg16: memref<256x128xbf16, #tpu.memory_space<vmem>>, %arg17: memref<1x128xf32, #tpu.memory_space<vmem>>, %arg18: memref<8x512xf32, #tpu.memory_space<vmem>>, %arg19: memref<8x512xf32, #tpu.memory_space<vmem>>, %arg20: memref<8x1xf32, #tpu.memory_space<vmem>>, %arg21: memref<1x1x512xf32, #tpu.memory_space<vmem>>, %arg22: memref<1x1x512xf32, #tpu.memory_space<vmem>>, %arg23: memref<1x1x128xf32, #tpu.memory_space<vmem>>) attributes {dimension_semantics = [#tpu.dimension_semantics<parallel>], iteration_bounds = array<i64: 2>, scalar_prefetch = 0 : i64, scratch_operands = 0 : i64, tpu.core_type = #tpu.core_type<tc>, window_params = [{transform_indices = @transform_0, window_bounds = array<i64: 8, 1024>}, {pipeline_mode = #tpu.pipeline_mode<synchronous>, transform_indices = @transform_1, window_bounds = array<i64: 1024, 512>}, {pipeline_mode = #tpu.pipeline_mode<synchronous>, transform_indices = @transform_2, window_bounds = array<i64: 1, 512>}, {pipeline_mode = #tpu.pipeline_mode<synchronous>, transform_indices = @transform_3, window_bounds = array<i64: 512, 512>}, {pipeline_mode = #tpu.pipeline_mode<synchronous>, transform_indices = @transform_4, window_bounds = array<i64: 1, 512>}, {pipeline_mode = #tpu.pipeline_mode<synchronous>, transform_indices = @transform_5, window_bounds = array<i64: 1, 512>}, {pipeline_mode = #tpu.pipeline_mode<synchronous>, transform_indices = @transform_6, window_bounds = array<i64: 1, 512>}, {pipeline_mode = #tpu.pipeline_mode<synchronous>, transform_indices = @transform_7, window_bounds = array<i64: 1, 512>}, {transform_indices = @transform_8, window_bounds = array<i64: 1>}, {pipeline_mode = #tpu.pipeline_mode<synchronous>, transform_indices = @transform_9, window_bounds = array<i64: 512, 512>}, {pipeline_mode = #tpu.pipeline_mode<synchronous>, transform_indices = @transform_10, window_bounds = array<i64: 1, 512>}, {pipeline_mode = #tpu.pipeline_mode<synchronous>, transform_indices = @transform_11, window_bounds = array<i64: 512, 512>}, {pipeline_mode = #tpu.pipeline_mode<synchronous>, transform_indices = @transform_12, window_bounds = array<i64: 1, 512>}, {pipeline_mode = #tpu.pipeline_mode<synchronous>, transform_indices = @transform_13, window_bounds = array<i64: 512, 256>}, {pipeline_mode = #tpu.pipeline_mode<synchronous>, transform_indices = @transform_14, window_bounds = array<i64: 1, 256>}, {pipeline_mode = #tpu.pipeline_mode<synchronous>, transform_indices = @transform_15, window_bounds = array<i64: 256, 128>}, {pipeline_mode = #tpu.pipeline_mode<synchronous>, transform_indices = @transform_16, window_bounds = array<i64: 1, 128>}, {transform_indices = @transform_17, window_bounds = array<i64: 8, 512>}, {transform_indices = @transform_18, window_bounds = array<i64: 8, 512>}, {transform_indices = @transform_19, window_bounds = array<i64: 8, 1>}, {transform_indices = @transform_20, window_bounds = array<i64: 1, 1, 512>}, {transform_indices = @transform_21, window_bounds = array<i64: 1, 1, 512>}, {transform_indices = @transform_22, window_bounds = array<i64: 1, 1, 128>}]} {
    %c0 = arith.constant 0 : index
    %c0_0 = arith.constant 0 : index
    %0 = vector.load %arg6[%c0, %c0_0] : memref<1x512xf32, #tpu.memory_space<vmem>>, vector<1x512xf32>
    %c0_1 = arith.constant 0 : index
    %c0_2 = arith.constant 0 : index
    %1 = vector.load %arg7[%c0_1, %c0_2] : memref<1x512xf32, #tpu.memory_space<vmem>>, vector<1x512xf32>
    %c0_3 = arith.constant 0 : index
    %c0_4 = arith.constant 0 : index
    %2 = vector.load %arg1[%c0_3, %c0_4] : memref<8x1024xbf16, #tpu.memory_space<vmem>>, vector<8x1024xbf16>
    %c0_5 = arith.constant 0 : index
    %c0_6 = arith.constant 0 : index
    %3 = vector.load %arg2[%c0_5, %c0_6] : memref<1024x512xbf16, #tpu.memory_space<vmem>>, vector<1024x512xbf16>
    %cst = arith.constant dense<0.000000e+00> : vector<8x512xf32>
    %4 = tpu.matmul %2, %3, %cst {dimension_numbers = #tpu.dot_dimension_numbers<[1], [0], [0], [1], [0, 0, 1, 1], [], []>} : vector<8x1024xbf16>, vector<1024x512xbf16>, vector<8x512xf32> -> vector<8x512xf32>
    %c0_7 = arith.constant 0 : index
    %c0_8 = arith.constant 0 : index
    %5 = vector.load %arg3[%c0_7, %c0_8] : memref<1x512xf32, #tpu.memory_space<vmem>>, vector<1x512xf32>
    %6 = vector.broadcast %5 : vector<1x512xf32> to vector<8x512xf32>
    %7 = arith.addf %4, %6 : vector<8x512xf32>
    %c0_9 = arith.constant 0 : index
    %c0_10 = arith.constant 0 : index
    %8 = vector.load %arg18[%c0_9, %c0_10] : memref<8x512xf32, #tpu.memory_space<vmem>>, vector<8x512xf32>
    tpu.vector_store %arg18[%c0_9, %c0_10], %7 {strides = array<i32>} : memref<8x512xf32, #tpu.memory_space<vmem>>, vector<8x512xf32>,
    %9 = arith.truncf %7 : vector<8x512xf32> to vector<8x512xbf16>
    %c0_11 = arith.constant 0 : index
    %c0_12 = arith.constant 0 : index
    %10 = vector.load %arg4[%c0_11, %c0_12] : memref<512x512xbf16, #tpu.memory_space<vmem>>, vector<512x512xbf16>
    %cst_13 = arith.constant dense<0.000000e+00> : vector<8x512xf32>
    %11 = tpu.matmul %9, %10, %cst_13 {dimension_numbers = #tpu.dot_dimension_numbers<[1], [0], [0], [1], [0, 0, 1, 1], [], []>} : vector<8x512xbf16>, vector<512x512xbf16>, vector<8x512xf32> -> vector<8x512xf32>
    %c0_14 = arith.constant 0 : index
    %c0_15 = arith.constant 0 : index
    %12 = vector.load %arg5[%c0_14, %c0_15] : memref<1x512xf32, #tpu.memory_space<vmem>>, vector<1x512xf32>
    %13 = vector.broadcast %12 : vector<1x512xf32> to vector<8x512xf32>
    %14 = arith.addf %11, %13 : vector<8x512xf32>
    %cst_16 = arith.constant dense<0.000000e+00> : vector<8xf32>
    %15 = vector.multi_reduction <add>, %14, %cst_16 [1] : vector<8x512xf32> to vector<8xf32>
    %16 = vector.shape_cast %15 : vector<8xf32> to vector<8x1xf32>
    %cst_17 = arith.constant 5.120000e+02 : f32
    %17 = vector.broadcast %cst_17 : f32 to vector<8x1xf32>
    %18 = arith.divf %16, %17 : vector<8x1xf32>
    %19 = vector.broadcast %18 : vector<8x1xf32> to vector<8x512xf32>
    %20 = arith.subf %14, %19 : vector<8x512xf32>
    %21 = arith.mulf %20, %20 : vector<8x512xf32>
    %cst_18 = arith.constant dense<0.000000e+00> : vector<8xf32>
    %22 = vector.multi_reduction <add>, %21, %cst_18 [1] : vector<8x512xf32> to vector<8xf32>
    %23 = vector.shape_cast %22 : vector<8xf32> to vector<8x1xf32>
    %cst_19 = arith.constant 5.120000e+02 : f32
    %24 = vector.broadcast %cst_19 : f32 to vector<8x1xf32>
    %25 = arith.divf %23, %24 : vector<8x1xf32>
    %26 = vector.broadcast %18 : vector<8x1xf32> to vector<8x512xf32>
    %27 = arith.subf %14, %26 : vector<8x512xf32>
    %cst_20 = arith.constant 9.99999974E-6 : f32
    %28 = vector.broadcast %cst_20 : f32 to vector<8x1xf32>
    %29 = arith.addf %25, %28 : vector<8x1xf32>
    %30 = math.rsqrt %29 : vector<8x1xf32>
    %31 = vector.broadcast %30 : vector<8x1xf32> to vector<8x512xf32>
    %32 = arith.mulf %27, %31 : vector<8x512xf32>
    %33 = vector.broadcast %0 : vector<1x512xf32> to vector<8x512xf32>
    %34 = arith.mulf %32, %33 : vector<8x512xf32>
    %35 = vector.broadcast %1 : vector<1x512xf32> to vector<8x512xf32>
    %36 = arith.addf %34, %35 : vector<8x512xf32>
    %c0_21 = arith.constant 0 : index
    %c0_22 = arith.constant 0 : index
    %37 = vector.load %arg19[%c0_21, %c0_22] : memref<8x512xf32, #tpu.memory_space<vmem>>, vector<8x512xf32>
    tpu.vector_store %arg19[%c0_21, %c0_22], %36 {strides = array<i32>} : memref<8x512xf32, #tpu.memory_space<vmem>>, vector<8x512xf32>,
    %c0_23 = arith.constant 0 : index
    %c0_24 = arith.constant 0 : index
    %38 = vector.load %arg8[%c0_23, %c0_24] : memref<1x512xf32, #tpu.memory_space<vmem>>, vector<1x512xf32>
    %39 = vector.broadcast %38 : vector<1x512xf32> to vector<8x512xf32>
    %40 = arith.mulf %36, %39 : vector<8x512xf32>
    %cst_25 = arith.constant dense<0.000000e+00> : vector<8xf32>
    %41 = vector.multi_reduction <add>, %40, %cst_25 [1] : vector<8x512xf32> to vector<8xf32>
    %42 = vector.shape_cast %41 : vector<8xf32> to vector<8x1xf32>
    %c0_26 = arith.constant 0 : index
    %43 = memref.load %arg9[%c0_26] : memref<1xf32, #tpu.memory_space<smem>>
    %44 = vector.broadcast %43 : f32 to vector<8x1xf32>
    %45 = arith.addf %42, %44 : vector<8x1xf32>
    %46 = arith.negf %45 : vector<8x1xf32>
    %47 = math.exp %46 : vector<8x1xf32>
    %cst_27 = arith.constant 1.000000e+00 : f32
    %48 = vector.broadcast %cst_27 : f32 to vector<8x1xf32>
    %49 = arith.addf %48, %47 : vector<8x1xf32>
    %50 = arith.divf %48, %49 : vector<8x1xf32>
    %c0_28 = arith.constant 0 : index
    %c0_29 = arith.constant 0 : index
    %51 = vector.load %arg20[%c0_28, %c0_29] : memref<8x1xf32, #tpu.memory_space<vmem>>, vector<8x1xf32>
    tpu.vector_store %arg20[%c0_28, %c0_29], %50 {strides = array<i32>} : memref<8x1xf32, #tpu.memory_space<vmem>>, vector<8x1xf32>,
    %cst_30 = arith.constant dense<0xFF800000> : vector<512xf32>
    %52 = vector.multi_reduction <maximumf>, %14, %cst_30 [0] : vector<8x512xf32> to vector<512xf32>
    %53 = vector.shape_cast %52 : vector<512xf32> to vector<1x512xf32>
    %54 = arith.truncf %53 : vector<1x512xf32> to vector<1x512xbf16>
    %c0_31 = arith.constant 0 : index
    %c0_32 = arith.constant 0 : index
    %55 = vector.load %arg10[%c0_31, %c0_32] : memref<512x512xbf16, #tpu.memory_space<vmem>>, vector<512x512xbf16>
    %cst_33 = arith.constant dense<0.000000e+00> : vector<1x512xf32>
    %56 = tpu.matmul %54, %55, %cst_33 {dimension_numbers = #tpu.dot_dimension_numbers<[1], [0], [0], [1], [0, 0, 1, 1], [], []>} : vector<1x512xbf16>, vector<512x512xbf16>, vector<1x512xf32> -> vector<1x512xf32>
    %c0_34 = arith.constant 0 : index
    %c0_35 = arith.constant 0 : index
    %57 = vector.load %arg11[%c0_34, %c0_35] : memref<1x512xf32, #tpu.memory_space<vmem>>, vector<1x512xf32>
    %58 = arith.addf %56, %57 : vector<1x512xf32>
    %cst_36 = arith.constant dense<0.000000e+00> : vector<1xf32>
    %59 = vector.multi_reduction <add>, %58, %cst_36 [1] : vector<1x512xf32> to vector<1xf32>
    %60 = vector.shape_cast %59 : vector<1xf32> to vector<1x1xf32>
    %cst_37 = arith.constant 5.120000e+02 : f32
    %61 = vector.broadcast %cst_37 : f32 to vector<1x1xf32>
    %62 = arith.divf %60, %61 : vector<1x1xf32>
    %63 = vector.broadcast %62 : vector<1x1xf32> to vector<1x512xf32>
    %64 = arith.subf %58, %63 : vector<1x512xf32>
    %65 = arith.mulf %64, %64 : vector<1x512xf32>
    %cst_38 = arith.constant dense<0.000000e+00> : vector<1xf32>
    %66 = vector.multi_reduction <add>, %65, %cst_38 [1] : vector<1x512xf32> to vector<1xf32>
    %67 = vector.shape_cast %66 : vector<1xf32> to vector<1x1xf32>
    %cst_39 = arith.constant 5.120000e+02 : f32
    %68 = vector.broadcast %cst_39 : f32 to vector<1x1xf32>
    %69 = arith.divf %67, %68 : vector<1x1xf32>
    %70 = vector.broadcast %62 : vector<1x1xf32> to vector<1x512xf32>
    %71 = arith.subf %58, %70 : vector<1x512xf32>
    %cst_40 = arith.constant 9.99999974E-6 : f32
    %72 = vector.broadcast %cst_40 : f32 to vector<1x1xf32>
    %73 = arith.addf %69, %72 : vector<1x1xf32>
    %74 = math.rsqrt %73 : vector<1x1xf32>
    %75 = vector.broadcast %74 : vector<1x1xf32> to vector<1x512xf32>
    %76 = arith.mulf %71, %75 : vector<1x512xf32>
    %77 = arith.mulf %76, %0 : vector<1x512xf32>
    %78 = arith.addf %77, %1 : vector<1x512xf32>
    %c0_41 = arith.constant 0 : index
    %c0_42 = arith.constant 0 : index
    %c0_43 = arith.constant 0 : index
    %79 = vector.load %arg21[%c0_41, %c0_42, %c0_43] : memref<1x1x512xf32, #tpu.memory_space<vmem>>, vector<1x1x512xf32>
    %80 = vector.shape_cast %79 : vector<1x1x512xf32> to vector<1x512xf32>
    %81 = vector.shape_cast %78 : vector<1x512xf32> to vector<1x1x512xf32>
    tpu.vector_store %arg21[%c0_41, %c0_42, %c0_43], %81 {strides = array<i32>} : memref<1x1x512xf32, #tpu.memory_space<vmem>>, vector<1x1x512xf32>,
    %82 = arith.truncf %78 : vector<1x512xf32> to vector<1x512xbf16>
    %c0_44 = arith.constant 0 : index
    %c0_45 = arith.constant 0 : index
    %83 = vector.load %arg12[%c0_44, %c0_45] : memref<512x512xbf16, #tpu.memory_space<vmem>>, vector<512x512xbf16>
    %cst_46 = arith.constant dense<0.000000e+00> : vector<1x512xf32>
    %84 = tpu.matmul %82, %83, %cst_46 {dimension_numbers = #tpu.dot_dimension_numbers<[1], [0], [0], [1], [0, 0, 1, 1], [], []>} : vector<1x512xbf16>, vector<512x512xbf16>, vector<1x512xf32> -> vector<1x512xf32>
    %c0_47 = arith.constant 0 : index
    %c0_48 = arith.constant 0 : index
    %85 = vector.load %arg13[%c0_47, %c0_48] : memref<1x512xf32, #tpu.memory_space<vmem>>, vector<1x512xf32>
    %86 = arith.addf %84, %85 : vector<1x512xf32>
    %c0_49 = arith.constant 0 : index
    %c0_50 = arith.constant 0 : index
    %c0_51 = arith.constant 0 : index
    %87 = vector.load %arg22[%c0_49, %c0_50, %c0_51] : memref<1x1x512xf32, #tpu.memory_space<vmem>>, vector<1x1x512xf32>
    %88 = vector.shape_cast %87 : vector<1x1x512xf32> to vector<1x512xf32>
    %89 = vector.shape_cast %86 : vector<1x512xf32> to vector<1x1x512xf32>
    tpu.vector_store %arg22[%c0_49, %c0_50, %c0_51], %89 {strides = array<i32>} : memref<1x1x512xf32, #tpu.memory_space<vmem>>, vector<1x1x512xf32>,
    %cst_52 = arith.constant 0.000000e+00 : f32
    %90 = vector.broadcast %cst_52 : f32 to vector<1x512xf32>
    %91 = arith.maximumf %86, %90 : vector<1x512xf32>
    %92 = arith.truncf %91 : vector<1x512xf32> to vector<1x512xbf16>
    %c0_53 = arith.constant 0 : index
    %c0_54 = arith.constant 0 : index
    %93 = vector.load %arg14[%c0_53, %c0_54] : memref<512x256xbf16, #tpu.memory_space<vmem>>, vector<512x256xbf16>
    %cst_55 = arith.constant dense<0.000000e+00> : vector<1x256xf32>
    %94 = tpu.matmul %92, %93, %cst_55 {dimension_numbers = #tpu.dot_dimension_numbers<[1], [0], [0], [1], [0, 0, 1, 1], [], []>} : vector<1x512xbf16>, vector<512x256xbf16>, vector<1x256xf32> -> vector<1x256xf32>
    %c0_56 = arith.constant 0 : index
    %c0_57 = arith.constant 0 : index
    %95 = vector.load %arg15[%c0_56, %c0_57] : memref<1x256xf32, #tpu.memory_space<vmem>>, vector<1x256xf32>
    %96 = arith.addf %94, %95 : vector<1x256xf32>
    %cst_58 = arith.constant 0.000000e+00 : f32
    %97 = vector.broadcast %cst_58 : f32 to vector<1x256xf32>
    %98 = arith.maximumf %96, %97 : vector<1x256xf32>
    %99 = arith.truncf %98 : vector<1x256xf32> to vector<1x256xbf16>
    %c0_59 = arith.constant 0 : index
    %c0_60 = arith.constant 0 : index
    %100 = vector.load %arg16[%c0_59, %c0_60] : memref<256x128xbf16, #tpu.memory_space<vmem>>, vector<256x128xbf16>
    %cst_61 = arith.constant dense<0.000000e+00> : vector<1x128xf32>
    %101 = tpu.matmul %99, %100, %cst_61 {dimension_numbers = #tpu.dot_dimension_numbers<[1], [0], [0], [1], [0, 0, 1, 1], [], []>} : vector<1x256xbf16>, vector<256x128xbf16>, vector<1x128xf32> -> vector<1x128xf32>
    %c0_62 = arith.constant 0 : index
    %c0_63 = arith.constant 0 : index
    %102 = vector.load %arg17[%c0_62, %c0_63] : memref<1x128xf32, #tpu.memory_space<vmem>>, vector<1x128xf32>
    %103 = arith.addf %101, %102 : vector<1x128xf32>
    %c0_64 = arith.constant 0 : index
    %c0_65 = arith.constant 0 : index
    %c0_66 = arith.constant 0 : index
    %104 = vector.load %arg23[%c0_64, %c0_65, %c0_66] : memref<1x1x128xf32, #tpu.memory_space<vmem>>, vector<1x1x128xf32>
    %105 = vector.shape_cast %104 : vector<1x1x128xf32> to vector<1x128xf32>
    %106 = vector.shape_cast %103 : vector<1x128xf32> to vector<1x1x128xf32>
    tpu.vector_store %arg23[%c0_64, %c0_65, %c0_66], %106 {strides = array<i32>} : memref<1x1x128xf32, #tpu.memory_space<vmem>>, vector<1x1x128xf32>,
    return
  }
  func.func @transform_0(%arg0: i32) -> (i32, i32) {
    %c0_i32 = arith.constant 0 : i32
    %c0_i32_0 = arith.constant 0 : i32
    return %arg0, %c0_i32 : i32, i32
  }
  func.func @transform_1(%arg0: i32) -> (i32, i32) {
    %c0_i32 = arith.constant 0 : i32
    %c0_i32_0 = arith.constant 0 : i32
    %c0_i32_1 = arith.constant 0 : i32
    return %c0_i32, %c0_i32_0 : i32, i32
  }
  func.func @transform_2(%arg0: i32) -> (i32, i32) {
    %c0_i32 = arith.constant 0 : i32
    %c0_i32_0 = arith.constant 0 : i32
    %c0_i32_1 = arith.constant 0 : i32
    return %c0_i32, %c0_i32_0 : i32, i32
  }
  func.func @transform_3(%arg0: i32) -> (i32, i32) {
    %c0_i32 = arith.constant 0 : i32
    %c0_i32_0 = arith.constant 0 : i32
    %c0_i32_1 = arith.constant 0 : i32
    return %c0_i32, %c0_i32_0 : i32, i32
  }
  func.func @transform_4(%arg0: i32) -> (i32, i32) {
    %c0_i32 = arith.constant 0 : i32
    %c0_i32_0 = arith.constant 0 : i32
    %c0_i32_1 = arith.constant 0 : i32
    return %c0_i32, %c0_i32_0 : i32, i32
  }
  func.func @transform_5(%arg0: i32) -> (i32, i32) {
    %c0_i32 = arith.constant 0 : i32
    %c0_i32_0 = arith.constant 0 : i32
    %c0_i32_1 = arith.constant 0 : i32
    return %c0_i32, %c0_i32_0 : i32, i32
  }
  func.func @transform_6(%arg0: i32) -> (i32, i32) {
    %c0_i32 = arith.constant 0 : i32
    %c0_i32_0 = arith.constant 0 : i32
    %c0_i32_1 = arith.constant 0 : i32
    return %c0_i32, %c0_i32_0 : i32, i32
  }
  func.func @transform_7(%arg0: i32) -> (i32, i32) {
    %c0_i32 = arith.constant 0 : i32
    %c0_i32_0 = arith.constant 0 : i32
    %c0_i32_1 = arith.constant 0 : i32
    return %c0_i32, %c0_i32_0 : i32, i32
  }
  func.func @transform_8(%arg0: i32) -> i32 {
    %c0_i32 = arith.constant 0 : i32
    %c0_i32_0 = arith.constant 0 : i32
    return %c0_i32 : i32
  }
  func.func @transform_9(%arg0: i32) -> (i32, i32) {
    %c0_i32 = arith.constant 0 : i32
    %c0_i32_0 = arith.constant 0 : i32
    %c0_i32_1 = arith.constant 0 : i32
    return %c0_i32, %c0_i32_0 : i32, i32
  }
  func.func @transform_10(%arg0: i32) -> (i32, i32) {
    %c0_i32 = arith.constant 0 : i32
    %c0_i32_0 = arith.constant 0 : i32
    %c0_i32_1 = arith.constant 0 : i32
    return %c0_i32, %c0_i32_0 : i32, i32
  }
  func.func @transform_11(%arg0: i32) -> (i32, i32) {
    %c0_i32 = arith.constant 0 : i32
    %c0_i32_0 = arith.constant 0 : i32
    %c0_i32_1 = arith.constant 0 : i32
    return %c0_i32, %c0_i32_0 : i32, i32
  }
  func.func @transform_12(%arg0: i32) -> (i32, i32) {
    %c0_i32 = arith.constant 0 : i32
    %c0_i32_0 = arith.constant 0 : i32
    %c0_i32_1 = arith.constant 0 : i32
    return %c0_i32, %c0_i32_0 : i32, i32
  }
  func.func @transform_13(%arg0: i32) -> (i32, i32) {
    %c0_i32 = arith.constant 0 : i32
    %c0_i32_0 = arith.constant 0 : i32
    %c0_i32_1 = arith.constant 0 : i32
    return %c0_i32, %c0_i32_0 : i32, i32
  }
  func.func @transform_14(%arg0: i32) -> (i32, i32) {
    %c0_i32 = arith.constant 0 : i32
    %c0_i32_0 = arith.constant 0 : i32
    %c0_i32_1 = arith.constant 0 : i32
    return %c0_i32, %c0_i32_0 : i32, i32
  }
  func.func @transform_15(%arg0: i32) -> (i32, i32) {
    %c0_i32 = arith.constant 0 : i32
    %c0_i32_0 = arith.constant 0 : i32
    %c0_i32_1 = arith.constant 0 : i32
    return %c0_i32, %c0_i32_0 : i32, i32
  }
  func.func @transform_16(%arg0: i32) -> (i32, i32) {
    %c0_i32 = arith.constant 0 : i32
    %c0_i32_0 = arith.constant 0 : i32
    %c0_i32_1 = arith.constant 0 : i32
    return %c0_i32, %c0_i32_0 : i32, i32
  }
  func.func @transform_17(%arg0: i32) -> (i32, i32) {
    %c0_i32 = arith.constant 0 : i32
    %c0_i32_0 = arith.constant 0 : i32
    return %arg0, %c0_i32 : i32, i32
  }
  func.func @transform_18(%arg0: i32) -> (i32, i32) {
    %c0_i32 = arith.constant 0 : i32
    %c0_i32_0 = arith.constant 0 : i32
    return %arg0, %c0_i32 : i32, i32
  }
  func.func @transform_19(%arg0: i32) -> (i32, i32) {
    %c0_i32 = arith.constant 0 : i32
    %c0_i32_0 = arith.constant 0 : i32
    return %arg0, %c0_i32 : i32, i32
  }
  func.func @transform_20(%arg0: i32) -> (i32, i32, i32) {
    %c0_i32 = arith.constant 0 : i32
    %c0_i32_0 = arith.constant 0 : i32
    %c0_i32_1 = arith.constant 0 : i32
    return %arg0, %c0_i32, %c0_i32_0 : i32, i32, i32
  }
  func.func @transform_21(%arg0: i32) -> (i32, i32, i32) {
    %c0_i32 = arith.constant 0 : i32
    %c0_i32_0 = arith.constant 0 : i32
    %c0_i32_1 = arith.constant 0 : i32
    return %arg0, %c0_i32, %c0_i32_0 : i32, i32, i32
  }
  func.func @transform_22(%arg0: i32) -> (i32, i32, i32) {
    %c0_i32 = arith.constant 0 : i32
    %c0_i32_0 = arith.constant 0 : i32
    %c0_i32_1 = arith.constant 0 : i32
    return %arg0, %c0_i32, %c0_i32_0 : i32, i32, i32
  }
}

</mosaic_0001>

<llo_original>
// kernel: gmvit_mini_forward.1
$region0: #{gmvit_mini_forward.1}
  #allocation0 [shape = 'u32[]', space=smem, size = 0x4, offset = 0x4, fixed_abs, tag = 'smem constant byte address 0x4 - core index']
  #allocation1 [shape = 'u32[144,128]{1,0:T(1,128)}', space=vmem, size = 0x12000, scoped, tag = 'internal scratch']
  #allocation2 [shape = 'f32[1]{0:T(128)S(6)}', space=smem, size = 0x200, scoped, tag = 'scoped memory for gmvit_mini_forward.1']
  %s0 = inlined_call_operand.vmem [shape: bf16[16,1024], index: 0, kind: input, shape index: {}]
  %s1 = inlined_call_operand.vmem [shape: bf16[1024,512], index: 1, kind: input, shape index: {}]
  %s2 = inlined_call_operand.vmem [shape: f32[1,512], index: 2, kind: input, shape index: {}]
  %s3 = inlined_call_operand.hbm [shape: bf16[512,512], index: 3, kind: input, shape index: {}]
  %s4 = inlined_call_operand.vmem [shape: f32[1,512], index: 4, kind: input, shape index: {}]
  %s5 = inlined_call_operand.vmem [shape: f32[1,512], index: 5, kind: input, shape index: {}]
  %s6 = inlined_call_operand.vmem [shape: f32[1,512], index: 6, kind: input, shape index: {}]
  %s7 = inlined_call_operand.vmem [shape: f32[1,512], index: 7, kind: input, shape index: {}]
  %s8 = inlined_call_operand.<no memory space> [shape: f32[1], index: 8, kind: input, shape index: {}]
  %s9 = inlined_call_operand.hbm [shape: bf16[512,512], index: 9, kind: input, shape index: {}]
  %s10 = inlined_call_operand.vmem [shape: f32[1,512], index: 10, kind: input, shape index: {}]
  %s11 = inlined_call_operand.hbm [shape: bf16[512,512], index: 11, kind: input, shape index: {}]
  %s12 = inlined_call_operand.vmem [shape: f32[1,512], index: 12, kind: input, shape index: {}]
  %s13 = inlined_call_operand.hbm [shape: bf16[512,256], index: 13, kind: input, shape index: {}]
  %s14 = inlined_call_operand.vmem [shape: f32[1,256], index: 14, kind: input, shape index: {}]
  %s15 = inlined_call_operand.hbm [shape: bf16[256,128], index: 15, kind: input, shape index: {}]
  %s16 = inlined_call_operand.vmem [shape: f32[1,128], index: 16, kind: input, shape index: {}]
  %s17 = inlined_call_operand.hbm [shape: f32[16,512], index: 17, kind: output, shape index: {0}]
  %s18 = inlined_call_operand.hbm [shape: f32[16,512], index: 18, kind: output, shape index: {1}]
  %s19 = inlined_call_operand.vmem [shape: f32[16,1], index: 19, kind: output, shape index: {2}]
  %s20 = inlined_call_operand.vmem [shape: f32[2,1,512], index: 20, kind: output, shape index: {3}]
  %s21 = inlined_call_operand.vmem [shape: f32[2,1,512], index: 21, kind: output, shape index: {4}]
  %s22 = inlined_call_operand.hbm [shape: f32[2,1,128], index: 22, kind: output, shape index: {5}]
  %23 = xla_tuple %s17, %s18, %s19, %s20, %s21, %s22
  %s24 = sld [smem:[#allocation0]]
  $region161: #{gmvit_mini_forward.1} parent=0
    _
  %s26 = ssub.s32 1, %s24
  %s27 = scalar_select 0, %s26, %s24
  %28 = sst [smem:[#allocation2]] %s8
  $region1: #{gmvit_mini_forward.1} parent=0
    #allocation3 [shape = 'u8[524288]{0}', space=vmem, size = 0x80000, scoped, tag = 'input window, operand 3, single buffered']
    #allocation4 [shape = 's32[2]{0}', space=sflag, size = 0x8, scoped, tag = 'scoped memory for gmvit_mini_forward.1']
    #allocation5 [shape = 's32[2]{0}', space=sflag, size = 0x8, scoped, tag = 'scoped memory for gmvit_mini_forward.1']
    #allocation6 [shape = 'u8[524288]{0}', space=vmem, size = 0x80000, scoped, tag = 'input window, operand 9, single buffered']
    #allocation7 [shape = 's32[1]{0}', space=sflag, size = 0x4, scoped, tag = 'scoped memory for gmvit_mini_forward.1']
    #allocation8 [shape = 'u8[524288]{0}', space=vmem, size = 0x80000, scoped, tag = 'input window, operand 11, single buffered']
    #allocation9 [shape = 'u8[262144]{0}', space=vmem, size = 0x40000, scoped, tag = 'input window, operand 13, single buffered']
    #allocation10 [shape = 's32[1]{0}', space=sflag, size = 0x4, scoped, tag = 'scoped memory for gmvit_mini_forward.1']
    #allocation11 [shape = 'u8[65536]{0}', space=vmem, size = 0x10000, scoped, tag = 'input window, operand 15, single buffered']
    #allocation12 [shape = 'u8[32768]{0}', space=vmem, size = 0x8000, scoped, tag = 'output window, operand 0']
    #allocation13 [shape = 'u8[32768]{0}', space=vmem, size = 0x8000, scoped, tag = 'output window, operand 1']
    #allocation14 [shape = 's32[2]{0}', space=sflag, size = 0x8, scoped, tag = 'scoped memory for gmvit_mini_forward.1']
    #allocation15 [shape = 'u8[1024]{0}', space=vmem, size = 0x400, scoped, tag = 'output window, operand 5']
    %29 = vsyncpa [#allocation4], 0
    %30 = vsyncpa [#allocation7], 0
    %31 = vsyncpa [#allocation10], 0
    %32 = vsyncpa [#allocation5], 0
    %s33 = scalar_lea.sflag [#allocation5], 1
    %34 = vsyncpa %s33, 0
    %35 = vsyncpa [#allocation14], 0
    %s36 = scalar_lea.sflag [#allocation14], 1
    %37 = vsyncpa %s36, 0
    loop: start=0, step=1, limit=4
    $region2: #{gmvit_mini_forward.1} parent=1 // loop_pre_header
      _
    $region3: #{gmvit_mini_forward.1} parent=1 // loop_header
      %s39 = sphi 0, %s43
      %p40 = scmp.ge.s32.totalorder %s39, 4
      %s49 = sphi 0, %s51
      %s52 = sphi 0, %s49
      %s53 = sphi 0, %s52
      %s69 = sphi 0, %s53
      %s73 = sphi 0, %s73
      %s75 = sphi 0, %s73
      %s76 = sphi 0, %s75
      %s90 = sphi 0, %s76
      %s94 = sphi 0, %s94
      %s96 = sphi 0, %s94
      %s97 = sphi 0, %s96
      %s111 = sphi 0, %s97
      %s115 = sphi 0, %s115
      %s117 = sphi 0, %s115
      %s118 = sphi 0, %s117
      %s132 = sphi 0, %s118
      %s136 = sphi 0, %s136
      %s138 = sphi 0, %s136
      %s139 = sphi 0, %s138
      %s153 = sphi 0, %s139
      %s157 = sphi 0, %s157
      %s159 = sphi 0, %s157
      %s160 = sphi 0, %s159
      %s174 = sphi 0, %s160
      %s178 = sphi 0, %s178
      %s180 = sphi 0, %s178
      %s181 = sphi 0, %s180
      %s195 = sphi 0, %s181
      %s199 = sphi 0, %s199
      %s201 = sphi 0, %s199
      %s202 = sphi 0, %s201
      %s216 = sphi 0, %s202
      %s220 = sphi 0, %s220
      %s222 = sphi 0, %s220
      %s223 = sphi 0, %s222
      %s237 = sphi 0, %s223
      %s241 = sphi 0, %s241
      %s243 = sphi 0, %s241
      %s244 = sphi 0, %s243
      %s258 = sphi 0, %s244
      %s262 = sphi 0, %s262
      %s264 = sphi 0, %s262
      %s265 = sphi 0, %s264
      %s279 = sphi 0, %s265
      %s283 = sphi 0, %s283
      %s285 = sphi 0, %s283
      %s286 = sphi 0, %s285
      %s300 = sphi 0, %s286
      %s304 = sphi 0, %s304
      %s306 = sphi 0, %s304
      %s307 = sphi 0, %s306
      %s321 = sphi 0, %s307
      %s325 = sphi 0, %s325
      %s327 = sphi 0, %s325
      %s328 = sphi 0, %s327
      %s342 = sphi 0, %s328
      %s346 = sphi 0, %s346
      %s348 = sphi 0, %s346
      %s349 = sphi 0, %s348
      %s363 = sphi 0, %s349
      %s367 = sphi 0, %s367
      %s369 = sphi 0, %s367
      %s370 = sphi 0, %s369
      %s384 = sphi 0, %s370
      %s388 = sphi 0, %s388
      %s390 = sphi 0, %s388
      %s391 = sphi 0, %s390
      %s405 = sphi 0, %s391
      %s411 = sphi 0, %s413
      %s414 = sphi 0, %s411
      %s415 = sphi 0, %s414
      %s431 = sphi 0, %s415
      %s437 = sphi 0, %s439
      %s440 = sphi 0, %s437
      %s441 = sphi 0, %s440
      %s457 = sphi 0, %s441
      %s463 = sphi 0, %s465
      %s466 = sphi 0, %s463
      %s467 = sphi 0, %s466
      %s483 = sphi 0, %s467
      %s489 = sphi 0, %s491
      %s492 = sphi 0, %s489
      %s493 = sphi 0, %s492
      %s509 = sphi 0, %s493
      %s515 = sphi 0, %s517
      %s518 = sphi 0, %s515
      %s519 = sphi 0, %s518
      %s535 = sphi 0, %s519
      %s541 = sphi 0, %s543
      %s544 = sphi 0, %s541
      %s545 = sphi 0, %s544
      %s561 = sphi 0, %s545
    $region4: #{gmvit_mini_forward.1} parent=1 // loop_header_branch
      %42 = sbr.rel (%p40) target = $region8
    $region5: #{gmvit_mini_forward.1} parent=1 // loop_body
      %s44 = ssub.s32 %s39, 1
      %s45 = ssub.s32 %s39, 2
      %s46 = sadd.s32 %s39, 1
      %s47 = ssub.s32 %s39, %s46
      %p48 = scmp.eq.s32.totalorder %s47, 0
      %s50 = sadd.s32 %s49, 1
      %s51 = scalar_select %p48, %s49, %s50
      %p54 = pneg %p48
      %p55 = scmp.eq.s32.totalorder %s39, 1
      %p56 = por %p54, %p55
      %p57 = scmp.ne.s32.totalorder %s49, %s52
      %p58 = scmp.eq.s32.totalorder %s39, 0
      %p59 = por %p57, %p58
      %p60 = scmp.ne.s32.totalorder %s49, %s52
      %p61 = scmp.eq.s32.totalorder %s44, 1
      %p62 = por %p60, %p61
      %p63 = scmp.ne.s32.totalorder %s52, %s53
      %p64 = scmp.eq.s32.totalorder %s44, 0
      %p65 = por %p63, %p64
      %p66 = scmp.ne.s32.totalorder %s52, %s53
      %p67 = scmp.eq.s32.totalorder %s45, 1
      %p68 = por %p66, %p67
      %p70 = scmp.ne.s32.totalorder %s53, %s69
      %p71 = scmp.eq.s32.totalorder %s45, 0
      %p72 = por %p70, %p71
      %s74 = sadd.s32 %s73, 1
      %p77 = scmp.eq.s32.totalorder %s39, 1
      %p78 = scmp.ne.s32.totalorder %s73, %s75
      %p79 = scmp.eq.s32.totalorder %s39, 0
      %p80 = por %p78, %p79
      %p81 = scmp.ne.s32.totalorder %s73, %s75
      %p82 = scmp.eq.s32.totalorder %s44, 1
      %p83 = por %p81, %p82
      %p84 = scmp.ne.s32.totalorder %s75, %s76
      %p85 = scmp.eq.s32.totalorder %s44, 0
      %p86 = por %p84, %p85
      %p87 = scmp.ne.s32.totalorder %s75, %s76
      %p88 = scmp.eq.s32.totalorder %s45, 1
      %p89 = por %p87, %p88
      %p91 = scmp.ne.s32.totalorder %s76, %s90
      %p92 = scmp.eq.s32.totalorder %s45, 0
      %p93 = por %p91, %p92
      %s95 = sadd.s32 %s94, 1
      %p98 = scmp.eq.s32.totalorder %s39, 1
      %p99 = scmp.ne.s32.totalorder %s94, %s96
      %p100 = scmp.eq.s32.totalorder %s39, 0
      %p101 = por %p99, %p100
      %p102 = scmp.ne.s32.totalorder %s94, %s96
      %p103 = scmp.eq.s32.totalorder %s44, 1
      %p104 = por %p102, %p103
      %p105 = scmp.ne.s32.totalorder %s96, %s97
      %p106 = scmp.eq.s32.totalorder %s44, 0
      %p107 = por %p105, %p106
      %p108 = scmp.ne.s32.totalorder %s96, %s97
      %p109 = scmp.eq.s32.totalorder %s45, 1
      %p110 = por %p108, %p109
      %p112 = scmp.ne.s32.totalorder %s97, %s111
      %p113 = scmp.eq.s32.totalorder %s45, 0
      %p114 = por %p112, %p113
      %s116 = sadd.s32 %s115, 1
      %p119 = scmp.eq.s32.totalorder %s39, 1
      %p120 = scmp.ne.s32.totalorder %s115, %s117
      %p121 = scmp.eq.s32.totalorder %s39, 0
      %p122 = por %p120, %p121
      %p123 = scmp.ne.s32.totalorder %s115, %s117
      %p124 = scmp.eq.s32.totalorder %s44, 1
      %p125 = por %p123, %p124
      %p126 = scmp.ne.s32.totalorder %s117, %s118
      %p127 = scmp.eq.s32.totalorder %s44, 0
      %p128 = por %p126, %p127
      %p129 = scmp.ne.s32.totalorder %s117, %s118
      %p130 = scmp.eq.s32.totalorder %s45, 1
      %p131 = por %p129, %p130
      %p133 = scmp.ne.s32.totalorder %s118, %s132
      %p134 = scmp.eq.s32.totalorder %s45, 0
      %p135 = por %p133, %p134
      %s137 = sadd.s32 %s136, 1
      %p140 = scmp.eq.s32.totalorder %s39, 1
      %p141 = scmp.ne.s32.totalorder %s136, %s138
      %p142 = scmp.eq.s32.totalorder %s39, 0
      %p143 = por %p141, %p142
      %p144 = scmp.ne.s32.totalorder %s136, %s138
      %p145 = scmp.eq.s32.totalorder %s44, 1
      %p146 = por %p144, %p145
      %p147 = scmp.ne.s32.totalorder %s138, %s139
      %p148 = scmp.eq.s32.totalorder %s44, 0
      %p149 = por %p147, %p148
      %p150 = scmp.ne.s32.totalorder %s138, %s139
      %p151 = scmp.eq.s32.totalorder %s45, 1
      %p152 = por %p150, %p151
      %p154 = scmp.ne.s32.totalorder %s139, %s153
      %p155 = scmp.eq.s32.totalorder %s45, 0
      %p156 = por %p154, %p155
      %s158 = sadd.s32 %s157, 1
      %p161 = scmp.eq.s32.totalorder %s39, 1
      %p162 = scmp.ne.s32.totalorder %s157, %s159
      %p163 = scmp.eq.s32.totalorder %s39, 0
      %p164 = por %p162, %p163
      %p165 = scmp.ne.s32.totalorder %s157, %s159
      %p166 = scmp.eq.s32.totalorder %s44, 1
      %p167 = por %p165, %p166
      %p168 = scmp.ne.s32.totalorder %s159, %s160
      %p169 = scmp.eq.s32.totalorder %s44, 0
      %p170 = por %p168, %p169
      %p171 = scmp.ne.s32.totalorder %s159, %s160
      %p172 = scmp.eq.s32.totalorder %s45, 1
      %p173 = por %p171, %p172
      %p175 = scmp.ne.s32.totalorder %s160, %s174
      %p176 = scmp.eq.s32.totalorder %s45, 0
      %p177 = por %p175, %p176
      %s179 = sadd.s32 %s178, 1
      %p182 = scmp.eq.s32.totalorder %s39, 1
      %p183 = scmp.ne.s32.totalorder %s178, %s180
      %p184 = scmp.eq.s32.totalorder %s39, 0
      %p185 = por %p183, %p184
      %p186 = scmp.ne.s32.totalorder %s178, %s180
      %p187 = scmp.eq.s32.totalorder %s44, 1
      %p188 = por %p186, %p187
      %p189 = scmp.ne.s32.totalorder %s180, %s181
      %p190 = scmp.eq.s32.totalorder %s44, 0
      %p191 = por %p189, %p190
      %p192 = scmp.ne.s32.totalorder %s180, %s181
      %p193 = scmp.eq.s32.totalorder %s45, 1
      %p194 = por %p192, %p193
      %p196 = scmp.ne.s32.totalorder %s181, %s195
      %p197 = scmp.eq.s32.totalorder %s45, 0
      %p198 = por %p196, %p197
      %s200 = sadd.s32 %s199, 1
      %p203 = scmp.eq.s32.totalorder %s39, 1
      %p204 = scmp.ne.s32.totalorder %s199, %s201
      %p205 = scmp.eq.s32.totalorder %s39, 0
      %p206 = por %p204, %p205
      %p207 = scmp.ne.s32.totalorder %s199, %s201
      %p208 = scmp.eq.s32.totalorder %s44, 1
      %p209 = por %p207, %p208
      %p210 = scmp.ne.s32.totalorder %s201, %s202
      %p211 = scmp.eq.s32.totalorder %s44, 0
      %p212 = por %p210, %p211
      %p213 = scmp.ne.s32.totalorder %s201, %s202
      %p214 = scmp.eq.s32.totalorder %s45, 1
      %p215 = por %p213, %p214
      %p217 = scmp.ne.s32.totalorder %s202, %s216
      %p218 = scmp.eq.s32.totalorder %s45, 0
      %p219 = por %p217, %p218
      %s221 = sadd.s32 %s220, 1
      %p224 = scmp.eq.s32.totalorder %s39, 1
      %p225 = scmp.ne.s32.totalorder %s220, %s222
      %p226 = scmp.eq.s32.totalorder %s39, 0
      %p227 = por %p225, %p226
      %p228 = scmp.ne.s32.totalorder %s220, %s222
      %p229 = scmp.eq.s32.totalorder %s44, 1
      %p230 = por %p228, %p229
      %p231 = scmp.ne.s32.totalorder %s222, %s223
      %p232 = scmp.eq.s32.totalorder %s44, 0
      %p233 = por %p231, %p232
      %p234 = scmp.ne.s32.totalorder %s222, %s223
      %p235 = scmp.eq.s32.totalorder %s45, 1
      %p236 = por %p234, %p235
      %p238 = scmp.ne.s32.totalorder %s223, %s237
      %p239 = scmp.eq.s32.totalorder %s45, 0
      %p240 = por %p238, %p239
      %s242 = sadd.s32 %s241, 1
      %p245 = scmp.eq.s32.totalorder %s39, 1
      %p246 = scmp.ne.s32.totalorder %s241, %s243
      %p247 = scmp.eq.s32.totalorder %s39, 0
      %p248 = por %p246, %p247
      %p249 = scmp.ne.s32.totalorder %s241, %s243
      %p250 = scmp.eq.s32.totalorder %s44, 1
      %p251 = por %p249, %p250
      %p252 = scmp.ne.s32.totalorder %s243, %s244
      %p253 = scmp.eq.s32.totalorder %s44, 0
      %p254 = por %p252, %p253
      %p255 = scmp.ne.s32.totalorder %s243, %s244
      %p256 = scmp.eq.s32.totalorder %s45, 1
      %p257 = por %p255, %p256
      %p259 = scmp.ne.s32.totalorder %s244, %s258
      %p260 = scmp.eq.s32.totalorder %s45, 0
      %p261 = por %p259, %p260
      %s263 = sadd.s32 %s262, 1
      %p266 = scmp.eq.s32.totalorder %s39, 1
      %p267 = scmp.ne.s32.totalorder %s262, %s264
      %p268 = scmp.eq.s32.totalorder %s39, 0
      %p269 = por %p267, %p268
      %p270 = scmp.ne.s32.totalorder %s262, %s264
      %p271 = scmp.eq.s32.totalorder %s44, 1
      %p272 = por %p270, %p271
      %p273 = scmp.ne.s32.totalorder %s264, %s265
      %p274 = scmp.eq.s32.totalorder %s44, 0
      %p275 = por %p273, %p274
      %p276 = scmp.ne.s32.totalorder %s264, %s265
      %p277 = scmp.eq.s32.totalorder %s45, 1
      %p278 = por %p276, %p277
      %p280 = scmp.ne.s32.totalorder %s265, %s279
      %p281 = scmp.eq.s32.totalorder %s45, 0
      %p282 = por %p280, %p281
      %s284 = sadd.s32 %s283, 1
      %p287 = scmp.eq.s32.totalorder %s39, 1
      %p288 = scmp.ne.s32.totalorder %s283, %s285
      %p289 = scmp.eq.s32.totalorder %s39, 0
      %p290 = por %p288, %p289
      %p291 = scmp.ne.s32.totalorder %s283, %s285
      %p292 = scmp.eq.s32.totalorder %s44, 1
      %p293 = por %p291, %p292
      %p294 = scmp.ne.s32.totalorder %s285, %s286
      %p295 = scmp.eq.s32.totalorder %s44, 0
      %p296 = por %p294, %p295
      %p297 = scmp.ne.s32.totalorder %s285, %s286
      %p298 = scmp.eq.s32.totalorder %s45, 1
      %p299 = por %p297, %p298
      %p301 = scmp.ne.s32.totalorder %s286, %s300
      %p302 = scmp.eq.s32.totalorder %s45, 0
      %p303 = por %p301, %p302
      %s305 = sadd.s32 %s304, 1
      %p308 = scmp.eq.s32.totalorder %s39, 1
      %p309 = scmp.ne.s32.totalorder %s304, %s306
      %p310 = scmp.eq.s32.totalorder %s39, 0
      %p311 = por %p309, %p310
      %p312 = scmp.ne.s32.totalorder %s304, %s306
      %p313 = scmp.eq.s32.totalorder %s44, 1
      %p314 = por %p312, %p313
      %p315 = scmp.ne.s32.totalorder %s306, %s307
      %p316 = scmp.eq.s32.totalorder %s44, 0
      %p317 = por %p315, %p316
      %p318 = scmp.ne.s32.totalorder %s306, %s307
      %p319 = scmp.eq.s32.totalorder %s45, 1
      %p320 = por %p318, %p319
      %p322 = scmp.ne.s32.totalorder %s307, %s321
      %p323 = scmp.eq.s32.totalorder %s45, 0
      %p324 = por %p322, %p323
      %s326 = sadd.s32 %s325, 1
      %p329 = scmp.eq.s32.totalorder %s39, 1
      %p330 = scmp.ne.s32.totalorder %s325, %s327
      %p331 = scmp.eq.s32.totalorder %s39, 0
      %p332 = por %p330, %p331
      %p333 = scmp.ne.s32.totalorder %s325, %s327
      %p334 = scmp.eq.s32.totalorder %s44, 1
      %p335 = por %p333, %p334
      %p336 = scmp.ne.s32.totalorder %s327, %s328
      %p337 = scmp.eq.s32.totalorder %s44, 0
      %p338 = por %p336, %p337
      %p339 = scmp.ne.s32.totalorder %s327, %s328
      %p340 = scmp.eq.s32.totalorder %s45, 1
      %p341 = por %p339, %p340
      %p343 = scmp.ne.s32.totalorder %s328, %s342
      %p344 = scmp.eq.s32.totalorder %s45, 0
      %p345 = por %p343, %p344
      %s347 = sadd.s32 %s346, 1
      %p350 = scmp.eq.s32.totalorder %s39, 1
      %p351 = scmp.ne.s32.totalorder %s346, %s348
      %p352 = scmp.eq.s32.totalorder %s39, 0
      %p353 = por %p351, %p352
      %p354 = scmp.ne.s32.totalorder %s346, %s348
      %p355 = scmp.eq.s32.totalorder %s44, 1
      %p356 = por %p354, %p355
      %p357 = scmp.ne.s32.totalorder %s348, %s349
      %p358 = scmp.eq.s32.totalorder %s44, 0
      %p359 = por %p357, %p358
      %p360 = scmp.ne.s32.totalorder %s348, %s349
      %p361 = scmp.eq.s32.totalorder %s45, 1
      %p362 = por %p360, %p361
      %p364 = scmp.ne.s32.totalorder %s349, %s363
      %p365 = scmp.eq.s32.totalorder %s45, 0
      %p366 = por %p364, %p365
      %s368 = sadd.s32 %s367, 1
      %p371 = scmp.eq.s32.totalorder %s39, 1
      %p372 = scmp.ne.s32.totalorder %s367, %s369
      %p373 = scmp.eq.s32.totalorder %s39, 0
      %p374 = por %p372, %p373
      %p375 = scmp.ne.s32.totalorder %s367, %s369
      %p376 = scmp.eq.s32.totalorder %s44, 1
      %p377 = por %p375, %p376
      %p378 = scmp.ne.s32.totalorder %s369, %s370
      %p379 = scmp.eq.s32.totalorder %s44, 0
      %p380 = por %p378, %p379
      %p381 = scmp.ne.s32.totalorder %s369, %s370
      %p382 = scmp.eq.s32.totalorder %s45, 1
      %p383 = por %p381, %p382
      %p385 = scmp.ne.s32.totalorder %s370, %s384
      %p386 = scmp.eq.s32.totalorder %s45, 0
      %p387 = por %p385, %p386
      %s389 = sadd.s32 %s388, 1
      %p392 = scmp.eq.s32.totalorder %s39, 1
      %p393 = scmp.ne.s32.totalorder %s388, %s390
      %p394 = scmp.eq.s32.totalorder %s39, 0
      %p395 = por %p393, %p394
      %p396 = scmp.ne.s32.totalorder %s388, %s390
      %p397 = scmp.eq.s32.totalorder %s44, 1
      %p398 = por %p396, %p397
      %p399 = scmp.ne.s32.totalorder %s390, %s391
      %p400 = scmp.eq.s32.totalorder %s44, 0
      %p401 = por %p399, %p400
      %p402 = scmp.ne.s32.totalorder %s390, %s391
      %p403 = scmp.eq.s32.totalorder %s45, 1
      %p404 = por %p402, %p403
      %p406 = scmp.ne.s32.totalorder %s391, %s405
      %p407 = scmp.eq.s32.totalorder %s45, 0
      %p408 = por %p406, %p407
      %s409 = ssub.s32 %s39, %s46
      %p410 = scmp.eq.s32.totalorder %s409, 0
      %s412 = sadd.s32 %s411, 1
      %s413 = scalar_select %p410, %s411, %s412
      %p416 = pneg %p410
      %p417 = scmp.eq.s32.totalorder %s39, 1
      %p418 = por %p416, %p417
      %p419 = scmp.ne.s32.totalorder %s411, %s414
      %p420 = scmp.eq.s32.totalorder %s39, 0
      %p421 = por %p419, %p420
      %p422 = scmp.ne.s32.totalorder %s411, %s414
      %p423 = scmp.eq.s32.totalorder %s44, 1
      %p424 = por %p422, %p423
      %p425 = scmp.ne.s32.totalorder %s414, %s415
      %p426 = scmp.eq.s32.totalorder %s44, 0
      %p427 = por %p425, %p426
      %p428 = scmp.ne.s32.totalorder %s414, %s415
      %p429 = scmp.eq.s32.totalorder %s45, 1
      %p430 = por %p428, %p429
      %p432 = scmp.ne.s32.totalorder %s415, %s431
      %p433 = scmp.eq.s32.totalorder %s45, 0
      %p434 = por %p432, %p433
      %s435 = ssub.s32 %s39, %s46
      %p436 = scmp.eq.s32.totalorder %s435, 0
      %s438 = sadd.s32 %s437, 1
      %s439 = scalar_select %p436, %s437, %s438
      %p442 = pneg %p436
      %p443 = scmp.eq.s32.totalorder %s39, 1
      %p444 = por %p442, %p443
      %p445 = scmp.ne.s32.totalorder %s437, %s440
      %p446 = scmp.eq.s32.totalorder %s39, 0
      %p447 = por %p445, %p446
      %p448 = scmp.ne.s32.totalorder %s437, %s440
      %p449 = scmp.eq.s32.totalorder %s44, 1
      %p450 = por %p448, %p449
      %p451 = scmp.ne.s32.totalorder %s440, %s441
      %p452 = scmp.eq.s32.totalorder %s44, 0
      %p453 = por %p451, %p452
      %p454 = scmp.ne.s32.totalorder %s440, %s441
      %p455 = scmp.eq.s32.totalorder %s45, 1
      %p456 = por %p454, %p455
      %p458 = scmp.ne.s32.totalorder %s441, %s457
      %p459 = scmp.eq.s32.totalorder %s45, 0
      %p460 = por %p458, %p459
      %s461 = ssub.s32 %s39, %s46
      %p462 = scmp.eq.s32.totalorder %s461, 0
      %s464 = sadd.s32 %s463, 1
      %s465 = scalar_select %p462, %s463, %s464
      %p468 = pneg %p462
      %p469 = scmp.eq.s32.totalorder %s39, 1
      %p470 = por %p468, %p469
      %p471 = scmp.ne.s32.totalorder %s463, %s466
      %p472 = scmp.eq.s32.totalorder %s39, 0
      %p473 = por %p471, %p472
      %p474 = scmp.ne.s32.totalorder %s463, %s466
      %p475 = scmp.eq.s32.totalorder %s44, 1
      %p476 = por %p474, %p475
      %p477 = scmp.ne.s32.totalorder %s466, %s467
      %p478 = scmp.eq.s32.totalorder %s44, 0
      %p479 = por %p477, %p478
      %p480 = scmp.ne.s32.totalorder %s466, %s467
      %p481 = scmp.eq.s32.totalorder %s45, 1
      %p482 = por %p480, %p481
      %p484 = scmp.ne.s32.totalorder %s467, %s483
      %p485 = scmp.eq.s32.totalorder %s45, 0
      %p486 = por %p484, %p485
      %s487 = ssub.s32 %s39, %s46
      %p488 = scmp.eq.s32.totalorder %s487, 0
      %s490 = sadd.s32 %s489, 1
      %s491 = scalar_select %p488, %s489, %s490
      %p494 = pneg %p488
      %p495 = scmp.eq.s32.totalorder %s39, 1
      %p496 = por %p494, %p495
      %p497 = scmp.ne.s32.totalorder %s489, %s492
      %p498 = scmp.eq.s32.totalorder %s39, 0
      %p499 = por %p497, %p498
      %p500 = scmp.ne.s32.totalorder %s489, %s492
      %p501 = scmp.eq.s32.totalorder %s44, 1
      %p502 = por %p500, %p501
      %p503 = scmp.ne.s32.totalorder %s492, %s493
      %p504 = scmp.eq.s32.totalorder %s44, 0
      %p505 = por %p503, %p504
      %p506 = scmp.ne.s32.totalorder %s492, %s493
      %p507 = scmp.eq.s32.totalorder %s45, 1
      %p508 = por %p506, %p507
      %p510 = scmp.ne.s32.totalorder %s493, %s509
      %p511 = scmp.eq.s32.totalorder %s45, 0
      %p512 = por %p510, %p511
      %s513 = ssub.s32 %s39, %s46
      %p514 = scmp.eq.s32.totalorder %s513, 0
      %s516 = sadd.s32 %s515, 1
      %s517 = scalar_select %p514, %s515, %s516
      %p520 = pneg %p514
      %p521 = scmp.eq.s32.totalorder %s39, 1
      %p522 = por %p520, %p521
      %p523 = scmp.ne.s32.totalorder %s515, %s518
      %p524 = scmp.eq.s32.totalorder %s39, 0
      %p525 = por %p523, %p524
      %p526 = scmp.ne.s32.totalorder %s515, %s518
      %p527 = scmp.eq.s32.totalorder %s44, 1
      %p528 = por %p526, %p527
      %p529 = scmp.ne.s32.totalorder %s518, %s519
      %p530 = scmp.eq.s32.totalorder %s44, 0
      %p531 = por %p529, %p530
      %p532 = scmp.ne.s32.totalorder %s518, %s519
      %p533 = scmp.eq.s32.totalorder %s45, 1
      %p534 = por %p532, %p533
      %p536 = scmp.ne.s32.totalorder %s519, %s535
      %p537 = scmp.eq.s32.totalorder %s45, 0
      %p538 = por %p536, %p537
      %s539 = ssub.s32 %s39, %s46
      %p540 = scmp.eq.s32.totalorder %s539, 0
      %s542 = sadd.s32 %s541, 1
      %s543 = scalar_select %p540, %s541, %s542
      %p546 = pneg %p540
      %p547 = scmp.eq.s32.totalorder %s39, 1
      %p548 = por %p546, %p547
      %p549 = scmp.ne.s32.totalorder %s541, %s544
      %p550 = scmp.eq.s32.totalorder %s39, 0
      %p551 = por %p549, %p550
      %p552 = scmp.ne.s32.totalorder %s541, %s544
      %p553 = scmp.eq.s32.totalorder %s44, 1
      %p554 = por %p552, %p553
      %p555 = scmp.ne.s32.totalorder %s544, %s545
      %p556 = scmp.eq.s32.totalorder %s44, 0
      %p557 = por %p555, %p556
      %p558 = scmp.ne.s32.totalorder %s544, %s545
      %p559 = scmp.eq.s32.totalorder %s45, 1
      %p560 = por %p558, %p559
      %p562 = scmp.ne.s32.totalorder %s545, %s561
      %p563 = scmp.eq.s32.totalorder %s45, 0
      %p564 = por %p562, %p563
      %p565 = scmp.le.s32.totalorder 1, %s39
      %p566 = scmp.lt.s32.totalorder %s39, 3
      %p567 = pnand %p565, %p566
      %p568 = pneg %p567
      // Predicated region
      $region9: #{gmvit_mini_forward.1} parent=5 // pred_check
        _
      $region10: #{gmvit_mini_forward.1} parent=5 // pred_check_branch
        %570 = sbr.rel (%p567) target = $region12
      $region11: #{gmvit_mini_forward.1} parent=5 // pred_region
        %s571 = ssub.s32 %s39, 1
        // Predicated region
        $region13: #{gmvit_mini_forward.1} parent=11 // pred_check
          %p572 = pneg %p86
        $region14: #{gmvit_mini_forward.1} parent=11 // pred_check_branch
          %574 = sbr.rel (%p572) target = $region16
        $region15: #{gmvit_mini_forward.1} parent=11 // pred_region
          _
        $region16: #{gmvit_mini_forward.1} parent=11 // pred_fallthru
          _
        // Predicated region
        $region17: #{gmvit_mini_forward.1} parent=11 // pred_check
          %p575 = pneg %p107
        $region18: #{gmvit_mini_forward.1} parent=11 // pred_check_branch
          %577 = sbr.rel (%p575) target = $region20
        $region19: #{gmvit_mini_forward.1} parent=11 // pred_region
          _
        $region20: #{gmvit_mini_forward.1} parent=11 // pred_fallthru
          _
        // Predicated region
        $region21: #{gmvit_mini_forward.1} parent=11 // pred_check
          %p578 = pneg %p128
        $region22: #{gmvit_mini_forward.1} parent=11 // pred_check_branch
          %580 = sbr.rel (%p578) target = $region24
        $region23: #{gmvit_mini_forward.1} parent=11 // pred_region
          %s582 = ssub.s32 16384, 16384
          %583 = vsyncadd [#allocation4], %s582
          %s584 = sshll.u32 [#allocation3], 4
          %s585 = int_to_ptr.vmem [resolvable:$true] %s584
          %590 = dma.hbm_to_vmem [thread:$0]  %s3, 16384, %s585, [#allocation4], 256, 256, 16
        $region24: #{gmvit_mini_forward.1} parent=11 // pred_fallthru
          _
        // Predicated region
        $region25: #{gmvit_mini_forward.1} parent=11 // pred_check
          %p591 = pneg %p149
        $region26: #{gmvit_mini_forward.1} parent=11 // pred_check_branch
          %593 = sbr.rel (%p591) target = $region28
        $region27: #{gmvit_mini_forward.1} parent=11 // pred_region
          _
        $region28: #{gmvit_mini_forward.1} parent=11 // pred_fallthru
          _
        // Predicated region
        $region29: #{gmvit_mini_forward.1} parent=11 // pred_check
          %p594 = pneg %p170
        $region30: #{gmvit_mini_forward.1} parent=11 // pred_check_branch
          %596 = sbr.rel (%p594) target = $region32
        $region31: #{gmvit_mini_forward.1} parent=11 // pred_region
          _
        $region32: #{gmvit_mini_forward.1} parent=11 // pred_fallthru
          _
        // Predicated region
        $region33: #{gmvit_mini_forward.1} parent=11 // pred_check
          %p597 = pneg %p191
        $region34: #{gmvit_mini_forward.1} parent=11 // pred_check_branch
          %599 = sbr.rel (%p597) target = $region36
        $region35: #{gmvit_mini_forward.1} parent=11 // pred_region
          _
        $region36: #{gmvit_mini_forward.1} parent=11 // pred_fallthru
          _
        // Predicated region
        $region37: #{gmvit_mini_forward.1} parent=11 // pred_check
          %p600 = pneg %p212
        $region38: #{gmvit_mini_forward.1} parent=11 // pred_check_branch
          %602 = sbr.rel (%p600) target = $region40
        $region39: #{gmvit_mini_forward.1} parent=11 // pred_region
          _
        $region40: #{gmvit_mini_forward.1} parent=11 // pred_fallthru
          _
        // Predicated region
        $region41: #{gmvit_mini_forward.1} parent=11 // pred_check
          %p603 = pneg %p233
        $region42: #{gmvit_mini_forward.1} parent=11 // pred_check_branch
          %605 = sbr.rel (%p603) target = $region44
        $region43: #{gmvit_mini_forward.1} parent=11 // pred_region
          _
        $region44: #{gmvit_mini_forward.1} parent=11 // pred_fallthru
          _
        // Predicated region
        $region45: #{gmvit_mini_forward.1} parent=11 // pred_check
          %p606 = pneg %p254
        $region46: #{gmvit_mini_forward.1} parent=11 // pred_check_branch
          %608 = sbr.rel (%p606) target = $region48
        $region47: #{gmvit_mini_forward.1} parent=11 // pred_region
          %s610 = ssub.s32 16384, 16384
          %611 = vsyncadd [#allocation7], %s610
          %s612 = sshll.u32 [#allocation6], 4
          %s613 = int_to_ptr.vmem [resolvable:$true] %s612
          %618 = dma.hbm_to_vmem [thread:$0]  %s9, 16384, %s613, [#allocation7], 256, 256, 16
        $region48: #{gmvit_mini_forward.1} parent=11 // pred_fallthru
          _
        // Predicated region
        $region49: #{gmvit_mini_forward.1} parent=11 // pred_check
          %p619 = pneg %p275
        $region50: #{gmvit_mini_forward.1} parent=11 // pred_check_branch
          %621 = sbr.rel (%p619) target = $region52
        $region51: #{gmvit_mini_forward.1} parent=11 // pred_region
          _
        $region52: #{gmvit_mini_forward.1} parent=11 // pred_fallthru
          _
        // Predicated region
        $region53: #{gmvit_mini_forward.1} parent=11 // pred_check
          %p622 = pneg %p296
        $region54: #{gmvit_mini_forward.1} parent=11 // pred_check_branch
          %624 = sbr.rel (%p622) target = $region56
        $region55: #{gmvit_mini_forward.1} parent=11 // pred_region
          %s626 = ssub.s32 16384, 16384
          %627 = vsyncadd [#allocation7], %s626
          %s628 = sshll.u32 [#allocation8], 4
          %s629 = int_to_ptr.vmem [resolvable:$true] %s628
          %634 = dma.hbm_to_vmem [thread:$0]  %s11, 16384, %s629, [#allocation7], 256, 256, 16
        $region56: #{gmvit_mini_forward.1} parent=11 // pred_fallthru
          _
        // Predicated region
        $region57: #{gmvit_mini_forward.1} parent=11 // pred_check
          %p635 = pneg %p317
        $region58: #{gmvit_mini_forward.1} parent=11 // pred_check_branch
          %637 = sbr.rel (%p635) target = $region60
        $region59: #{gmvit_mini_forward.1} parent=11 // pred_region
          _
        $region60: #{gmvit_mini_forward.1} parent=11 // pred_fallthru
          _
        // Predicated region
        $region61: #{gmvit_mini_forward.1} parent=11 // pred_check
          %p638 = pneg %p338
        $region62: #{gmvit_mini_forward.1} parent=11 // pred_check_branch
          %640 = sbr.rel (%p638) target = $region64
        $region63: #{gmvit_mini_forward.1} parent=11 // pred_region
          %s642 = ssub.s32 8192, 8192
          %643 = vsyncadd [#allocation10], %s642
          %s644 = sshll.u32 [#allocation9], 4
          %s645 = int_to_ptr.vmem [resolvable:$true] %s644
          %650 = dma.hbm_to_vmem [thread:$0]  %s13, 8192, %s645, [#allocation10], 128, 128, 8
        $region64: #{gmvit_mini_forward.1} parent=11 // pred_fallthru
          _
        // Predicated region
        $region65: #{gmvit_mini_forward.1} parent=11 // pred_check
          %p651 = pneg %p359
        $region66: #{gmvit_mini_forward.1} parent=11 // pred_check_branch
          %653 = sbr.rel (%p651) target = $region68
        $region67: #{gmvit_mini_forward.1} parent=11 // pred_region
          _
        $region68: #{gmvit_mini_forward.1} parent=11 // pred_fallthru
          _
        // Predicated region
        $region69: #{gmvit_mini_forward.1} parent=11 // pred_check
          %p654 = pneg %p380
        $region70: #{gmvit_mini_forward.1} parent=11 // pred_check_branch
          %656 = sbr.rel (%p654) target = $region72
        $region71: #{gmvit_mini_forward.1} parent=11 // pred_region
          %s658 = ssub.s32 2048, 2048
          %659 = vsyncadd [#allocation10], %s658
          %s660 = sshll.u32 [#allocation11], 4
          %s661 = int_to_ptr.vmem [resolvable:$true] %s660
          %666 = dma.hbm_to_vmem [thread:$0]  %s15, 2048, %s661, [#allocation10], 64, 64, 4
        $region72: #{gmvit_mini_forward.1} parent=11 // pred_fallthru
          _
        // Predicated region
        $region73: #{gmvit_mini_forward.1} parent=11 // pred_check
          %p667 = pneg %p401
        $region74: #{gmvit_mini_forward.1} parent=11 // pred_check_branch
          %669 = sbr.rel (%p667) target = $region76
        $region75: #{gmvit_mini_forward.1} parent=11 // pred_region
          _
        $region76: #{gmvit_mini_forward.1} parent=11 // pred_fallthru
          _
      $region12: #{gmvit_mini_forward.1} parent=5 // pred_fallthru
        _
      %p670 = scmp.lt.s32.totalorder %s39, 2
      // Predicated region
      $region77: #{gmvit_mini_forward.1} parent=5 // pred_check
        %p671 = pneg %p670
      $region78: #{gmvit_mini_forward.1} parent=5 // pred_check_branch
        %673 = sbr.rel (%p671) target = $region80
      $region79: #{gmvit_mini_forward.1} parent=5 // pred_region
        // Predicated region
        $region81: #{gmvit_mini_forward.1} parent=79 // pred_check
          %p674 = pneg %p59
        $region82: #{gmvit_mini_forward.1} parent=79 // pred_check_branch
          %676 = sbr.rel (%p674) target = $region84
        $region83: #{gmvit_mini_forward.1} parent=79 // pred_region
          %p677 = scmp.lt.s32.totalorder %s39, 1
          %s678 = scalar_select %p677, %s39, 1
          %s679 = smul.addr %s678, 8
          %s680 = smul.addr %s679, 4
          %s681 = scalar_lea.vmem %s0, %s680
        $region84: #{gmvit_mini_forward.1} parent=79 // pred_fallthru
          _
      $region80: #{gmvit_mini_forward.1} parent=5 // pred_fallthru
        _
      %p682 = scmp.le.s32.totalorder 1, %s39
      %p683 = scmp.lt.s32.totalorder %s39, 3
      %p684 = pnand %p682, %p683
      %p685 = pneg %p684
      // Predicated region
      $region85: #{gmvit_mini_forward.1} parent=5 // pred_check
        _
      $region86: #{gmvit_mini_forward.1} parent=5 // pred_check_branch
        %687 = sbr.rel (%p684) target = $region88
      $region87: #{gmvit_mini_forward.1} parent=5 // pred_region
        %s688 = ssub.s32 %s39, 1
        // Predicated region
        $region89: #{gmvit_mini_forward.1} parent=87 // pred_check
          %p689 = pneg %p128
        $region90: #{gmvit_mini_forward.1} parent=87 // pred_check_branch
          %691 = sbr.rel (%p689) target = $region92
        $region91: #{gmvit_mini_forward.1} parent=87 // pred_region
          %692 = dma.done [#allocation4], 16384
        $region92: #{gmvit_mini_forward.1} parent=87 // pred_fallthru
          _
        // Predicated region
        $region93: #{gmvit_mini_forward.1} parent=87 // pred_check
          %p693 = pneg %p254
        $region94: #{gmvit_mini_forward.1} parent=87 // pred_check_branch
          %695 = sbr.rel (%p693) target = $region96
        $region95: #{gmvit_mini_forward.1} parent=87 // pred_region
          %696 = dma.done [#allocation7], 16384
        $region96: #{gmvit_mini_forward.1} parent=87 // pred_fallthru
          _
        // Predicated region
        $region97: #{gmvit_mini_forward.1} parent=87 // pred_check
          %p697 = pneg %p296
        $region98: #{gmvit_mini_forward.1} parent=87 // pred_check_branch
          %699 = sbr.rel (%p697) target = $region100
        $region99: #{gmvit_mini_forward.1} parent=87 // pred_region
          %700 = dma.done [#allocation7], 16384
        $region100: #{gmvit_mini_forward.1} parent=87 // pred_fallthru
          _
        // Predicated region
        $region101: #{gmvit_mini_forward.1} parent=87 // pred_check
          %p701 = pneg %p338
        $region102: #{gmvit_mini_forward.1} parent=87 // pred_check_branch
          %703 = sbr.rel (%p701) target = $region104
        $region103: #{gmvit_mini_forward.1} parent=87 // pred_region
          %704 = dma.done [#allocation10], 8192
        $region104: #{gmvit_mini_forward.1} parent=87 // pred_fallthru
          _
        // Predicated region
        $region105: #{gmvit_mini_forward.1} parent=87 // pred_check
          %p705 = pneg %p380
        $region106: #{gmvit_mini_forward.1} parent=87 // pred_check_branch
          %707 = sbr.rel (%p705) target = $region108
        $region107: #{gmvit_mini_forward.1} parent=87 // pred_region
          %708 = dma.done [#allocation10], 2048
        $region108: #{gmvit_mini_forward.1} parent=87 // pred_fallthru
          _
        %p709 = scmp.lt.s32.totalorder %s44, 1
        %s710 = scalar_select %p709, %s44, 1
        %s711 = smul.addr %s710, 8
        %s712 = smul.addr %s711, 4
        %s713 = scalar_lea.vmem %s0, %s712
        %p714 = pneg %p65
        %p715 = pneg %p62
        %p716 = pneg %p86
        %p717 = pneg %p83
        %p718 = pneg %p107
        %p719 = pneg %p104
        %p720 = pneg %p128
        %p721 = pneg %p125
        %p722 = pneg %p149
        %p723 = pneg %p146
        %p724 = pneg %p170
        %p725 = pneg %p167
        %p726 = pneg %p191
        %p727 = pneg %p188
        %p728 = pneg %p212
        %p729 = pneg %p209
        %p730 = pneg %p233
        %p731 = pneg %p230
        %p732 = pneg %p254
        %p733 = pneg %p251
        %p734 = pneg %p275
        %p735 = pneg %p272
        %p736 = pneg %p296
        %p737 = pneg %p293
        %p738 = pneg %p317
        %p739 = pneg %p314
        %p740 = pneg %p338
        %p741 = pneg %p335
        %p742 = pneg %p359
        %p743 = pneg %p356
        %p744 = pneg %p380
        %p745 = pneg %p377
        %p746 = pneg %p401
        %p747 = pneg %p398
        %p748 = pneg %p427
        %p749 = pneg %p424
        %s750 = sand.u32 %s414, 1
        %s751 = scalar_lea.sflag [#allocation5], %s750
        %s752 = sand.u32 %s414, 1
        %s753 = smul.addr %s752, 32
        %s754 = scalar_lea.vmem [#allocation12], %s753
        %p755 = pneg %p453
        %p756 = pneg %p450
        %s757 = sand.u32 %s44, 1
        %s758 = scalar_lea.sflag [#allocation14], %s757
        %s759 = sand.u32 %s440, 1
        %s760 = smul.addr %s759, 32
        %s761 = scalar_lea.vmem [#allocation13], %s760
        %p762 = pneg %p479
        %p763 = pneg %p476
        %p764 = scmp.lt.s32.totalorder %s44, 1
        %s765 = scalar_select %p764, %s44, 1
        %s766 = smul.addr %s765, 8
        %s767 = scalar_lea.vmem %s19, %s766
        %p768 = pneg %p505
        %p769 = pneg %p502
        %p770 = scmp.lt.s32.totalorder %s44, 1
        %s771 = scalar_select %p770, %s44, 1
        %s772 = smul.addr %s771, 4
        %s773 = scalar_lea.vmem %s20, %s772
        %p774 = pneg %p531
        %p775 = pneg %p528
        %p776 = scmp.lt.s32.totalorder %s44, 1
        %s777 = scalar_select %p776, %s44, 1
        %s778 = smul.addr %s777, 4
        %s779 = scalar_lea.vmem %s21, %s778
        %p780 = pneg %p557
        %p781 = pneg %p554
        %s782 = sand.u32 %s44, 1
        %s783 = scalar_lea.sflag [#allocation14], %s782
        %s784 = sand.u32 %s544, 1
        %s785 = scalar_lea.vmem [#allocation15], %s784
        %p786 = scmp.lt.s32.totalorder %s44, 1
        %s787 = scalar_select %p786, %s44, 1
        %s788 = smul.addr %s787, 8
        %s789 = smul.addr %s788, 4
        %s790 = scalar_lea.vmem %s0, %s789
        %p791 = scmp.lt.s32.totalorder %s44, 1
        %s792 = scalar_select %p791, %s44, 1
        %s793 = smul.addr %s792, 8
        %s794 = scalar_lea.vmem %s19, %s793
        %p795 = scmp.lt.s32.totalorder %s44, 1
        %s796 = scalar_select %p795, %s44, 1
        %s797 = smul.addr %s796, 4
        %s798 = scalar_lea.vmem %s20, %s797
        %p799 = scmp.lt.s32.totalorder %s44, 1
        %s800 = scalar_select %p799, %s44, 1
        %s801 = smul.addr %s800, 4
        %s802 = scalar_lea.vmem %s21, %s801
        %v804 = vld [vmem:[%s5] sm:$0xf]
        %v805 = vld [vmem:[%s6] sm:$0xf]
        %v806 = vld [vmem:[%s790] sm:$0xff]
        %v807 = vld [vmem:[%s790 + $0x8] sm:$0xff]
        %v808 = vld [vmem:[%s790 + $0x10] sm:$0xff]
        %v809 = vld [vmem:[%s790 + $0x18] sm:$0xff]
        %v810 = vld [vmem:[%s1] sm:$0xff]
        %v811 = vld [vmem:[%s1 + $0x8] sm:$0xff]
        %v812 = vld [vmem:[%s1 + $0x10] sm:$0xff]
        %v813 = vld [vmem:[%s1 + $0x18] sm:$0xff]
        %v814 = vld [vmem:[%s1 + $0x20] sm:$0xff]
        %v815 = vld [vmem:[%s1 + $0x28] sm:$0xff]
        %v816 = vld [vmem:[%s1 + $0x30] sm:$0xff]
        %v817 = vld [vmem:[%s1 + $0x38] sm:$0xff]
        %v818 = vld [vmem:[%s1 + $0x40] sm:$0xff]
        %v819 = vld [vmem:[%s1 + $0x48] sm:$0xff]
        %v820 = vld [vmem:[%s1 + $0x50] sm:$0xff]
        %v821 = vld [vmem:[%s1 + $0x58] sm:$0xff]
        %v822 = vld [vmem:[%s1 + $0x60] sm:$0xff]
        %v823 = vld [vmem:[%s1 + $0x68] sm:$0xff]
        %v824 = vld [vmem:[%s1 + $0x70] sm:$0xff]
        %v825 = vld [vmem:[%s1 + $0x78] sm:$0xff]
        %v826 = vld [vmem:[%s1 + $0x80] sm:$0xff]
        %v827 = vld [vmem:[%s1 + $0x88] sm:$0xff]
        %v828 = vld [vmem:[%s1 + $0x90] sm:$0xff]
        %v829 = vld [vmem:[%s1 + $0x98] sm:$0xff]
        %v830 = vld [vmem:[%s1 + $0xa0] sm:$0xff]
        %v831 = vld [vmem:[%s1 + $0xa8] sm:$0xff]
        %v832 = vld [vmem:[%s1 + $0xb0] sm:$0xff]
        %v833 = vld [vmem:[%s1 + $0xb8] sm:$0xff]
        %v834 = vld [vmem:[%s1 + $0xc0] sm:$0xff]
        %v835 = vld [vmem:[%s1 + $0xc8] sm:$0xff]
        %v836 = vld [vmem:[%s1 + $0xd0] sm:$0xff]
        %v837 = vld [vmem:[%s1 + $0xd8] sm:$0xff]
        %v838 = vld [vmem:[%s1 + $0xe0] sm:$0xff]
        %v839 = vld [vmem:[%s1 + $0xe8] sm:$0xff]
        %v840 = vld [vmem:[%s1 + $0xf0] sm:$0xff]
        %v841 = vld [vmem:[%s1 + $0xf8] sm:$0xff]
        %v842 = vld [vmem:[%s1 + $0x100] sm:$0xff]
        %v843 = vld [vmem:[%s1 + $0x108] sm:$0xff]
        %v844 = vld [vmem:[%s1 + $0x110] sm:$0xff]
        %v845 = vld [vmem:[%s1 + $0x118] sm:$0xff]
        %v846 = vld [vmem:[%s1 + $0x120] sm:$0xff]
        %v847 = vld [vmem:[%s1 + $0x128] sm:$0xff]
        %v848 = vld [vmem:[%s1 + $0x130] sm:$0xff]
        %v849 = vld [vmem:[%s1 + $0x138] sm:$0xff]
        %v850 = vld [vmem:[%s1 + $0x140] sm:$0xff]
        %v851 = vld [vmem:[%s1 + $0x148] sm:$0xff]
        %v852 = vld [vmem:[%s1 + $0x150] sm:$0xff]
        %v853 = vld [vmem:[%s1 + $0x158] sm:$0xff]
        %v854 = vld [vmem:[%s1 + $0x160] sm:$0xff]
        %v855 = vld [vmem:[%s1 + $0x168] sm:$0xff]
        %v856 = vld [vmem:[%s1 + $0x170] sm:$0xff]
        %v857 = vld [vmem:[%s1 + $0x178] sm:$0xff]
        %v858 = vld [vmem:[%s1 + $0x180] sm:$0xff]
        %v859 = vld [vmem:[%s1 + $0x188] sm:$0xff]
        %v860 = vld [vmem:[%s1 + $0x190] sm:$0xff]
        %v861 = vld [vmem:[%s1 + $0x198] sm:$0xff]
        %v862 = vld [vmem:[%s1 + $0x1a0] sm:$0xff]
        %v863 = vld [vmem:[%s1 + $0x1a8] sm:$0xff]
        %v864 = vld [vmem:[%s1 + $0x1b0] sm:$0xff]
        %v865 = vld [vmem:[%s1 + $0x1b8] sm:$0xff]
        %v866 = vld [vmem:[%s1 + $0x1c0] sm:$0xff]
        %v867 = vld [vmem:[%s1 + $0x1c8] sm:$0xff]
        %v868 = vld [vmem:[%s1 + $0x1d0] sm:$0xff]
        %v869 = vld [vmem:[%s1 + $0x1d8] sm:$0xff]
        %v870 = vld [vmem:[%s1 + $0x1e0] sm:$0xff]
        %v871 = vld [vmem:[%s1 + $0x1e8] sm:$0xff]
        %v872 = vld [vmem:[%s1 + $0x1f0] sm:$0xff]
        %v873 = vld [vmem:[%s1 + $0x1f8] sm:$0xff]
        %v874 = vld [vmem:[%s1 + $0x200] sm:$0xff]
        %v875 = vld [vmem:[%s1 + $0x208] sm:$0xff]
        %v876 = vld [vmem:[%s1 + $0x210] sm:$0xff]
        %v877 = vld [vmem:[%s1 + $0x218] sm:$0xff]
        %v878 = vld [vmem:[%s1 + $0x220] sm:$0xff]
        %v879 = vld [vmem:[%s1 + $0x228] sm:$0xff]
        %v880 = vld [vmem:[%s1 + $0x230] sm:$0xff]
        %v881 = vld [vmem:[%s1 + $0x238] sm:$0xff]
        %v882 = vld [vmem:[%s1 + $0x240] sm:$0xff]
        %v883 = vld [vmem:[%s1 + $0x248] sm:$0xff]
        %v884 = vld [vmem:[%s1 + $0x250] sm:$0xff]
        %v885 = vld [vmem:[%s1 + $0x258] sm:$0xff]
        %v886 = vld [vmem:[%s1 + $0x260] sm:$0xff]
        %v887 = vld [vmem:[%s1 + $0x268] sm:$0xff]
        %v888 = vld [vmem:[%s1 + $0x270] sm:$0xff]
        %v889 = vld [vmem:[%s1 + $0x278] sm:$0xff]
        %v890 = vld [vmem:[%s1 + $0x280] sm:$0xff]
        %v891 = vld [vmem:[%s1 + $0x288] sm:$0xff]
        %v892 = vld [vmem:[%s1 + $0x290] sm:$0xff]
        %v893 = vld [vmem:[%s1 + $0x298] sm:$0xff]
        %v894 = vld [vmem:[%s1 + $0x2a0] sm:$0xff]
        %v895 = vld [vmem:[%s1 + $0x2a8] sm:$0xff]
        %v896 = vld [vmem:[%s1 + $0x2b0] sm:$0xff]
        %v897 = vld [vmem:[%s1 + $0x2b8] sm:$0xff]
        %v898 = vld [vmem:[%s1 + $0x2c0] sm:$0xff]
        %v899 = vld [vmem:[%s1 + $0x2c8] sm:$0xff]
        %v900 = vld [vmem:[%s1 + $0x2d0] sm:$0xff]
        %v901 = vld [vmem:[%s1 + $0x2d8] sm:$0xff]
        %v902 = vld [vmem:[%s1 + $0x2e0] sm:$0xff]
        %v903 = vld [vmem:[%s1 + $0x2e8] sm:$0xff]
        %v904 = vld [vmem:[%s1 + $0x2f0] sm:$0xff]
        %v905 = vld [vmem:[%s1 + $0x2f8] sm:$0xff]
        %v906 = vld [vmem:[%s1 + $0x300] sm:$0xff]
        %v907 = vld [vmem:[%s1 + $0x308] sm:$0xff]
        %v908 = vld [vmem:[%s1 + $0x310] sm:$0xff]
        %v909 = vld [vmem:[%s1 + $0x318] sm:$0xff]
        %v910 = vld [vmem:[%s1 + $0x320] sm:$0xff]
        %v911 = vld [vmem:[%s1 + $0x328] sm:$0xff]
        %v912 = vld [vmem:[%s1 + $0x330] sm:$0xff]
        %v913 = vld [vmem:[%s1 + $0x338] sm:$0xff]
        %v914 = vld [vmem:[%s1 + $0x340] sm:$0xff]
        %v915 = vld [vmem:[%s1 + $0x348] sm:$0xff]
        %v916 = vld [vmem:[%s1 + $0x350] sm:$0xff]
        %v917 = vld [vmem:[%s1 + $0x358] sm:$0xff]
        %v918 = vld [vmem:[%s1 + $0x360] sm:$0xff]
        %v919 = vld [vmem:[%s1 + $0x368] sm:$0xff]
        %v920 = vld [vmem:[%s1 + $0x370] sm:$0xff]
        %v921 = vld [vmem:[%s1 + $0x378] sm:$0xff]
        %v922 = vld [vmem:[%s1 + $0x380] sm:$0xff]
        %v923 = vld [vmem:[%s1 + $0x388] sm:$0xff]
        %v924 = vld [vmem:[%s1 + $0x390] sm:$0xff]
        %v925 = vld [vmem:[%s1 + $0x398] sm:$0xff]
        %v926 = vld [vmem:[%s1 + $0x3a0] sm:$0xff]
        %v927 = vld [vmem:[%s1 + $0x3a8] sm:$0xff]
        %v928 = vld [vmem:[%s1 + $0x3b0] sm:$0xff]
        %v929 = vld [vmem:[%s1 + $0x3b8] sm:$0xff]
        %v930 = vld [vmem:[%s1 + $0x3c0] sm:$0xff]
        %v931 = vld [vmem:[%s1 + $0x3c8] sm:$0xff]
        %v932 = vld [vmem:[%s1 + $0x3d0] sm:$0xff]
        %v933 = vld [vmem:[%s1 + $0x3d8] sm:$0xff]
        %v934 = vld [vmem:[%s1 + $0x3e0] sm:$0xff]
        %v935 = vld [vmem:[%s1 + $0x3e8] sm:$0xff]
        %v936 = vld [vmem:[%s1 + $0x3f0] sm:$0xff]
        %v937 = vld [vmem:[%s1 + $0x3f8] sm:$0xff]
        %v938 = vld [vmem:[%s1 + $0x400] sm:$0xff]
        %v939 = vld [vmem:[%s1 + $0x408] sm:$0xff]
        %v940 = vld [vmem:[%s1 + $0x410] sm:$0xff]
        %v941 = vld [vmem:[%s1 + $0x418] sm:$0xff]
        %v942 = vld [vmem:[%s1 + $0x420] sm:$0xff]
        %v943 = vld [vmem:[%s1 + $0x428] sm:$0xff]
        %v944 = vld [vmem:[%s1 + $0x430] sm:$0xff]
        %v945 = vld [vmem:[%s1 + $0x438] sm:$0xff]
        %v946 = vld [vmem:[%s1 + $0x440] sm:$0xff]
        %v947 = vld [vmem:[%s1 + $0x448] sm:$0xff]
        %v948 = vld [vmem:[%s1 + $0x450] sm:$0xff]
        %v949 = vld [vmem:[%s1 + $0x458] sm:$0xff]
        %v950 = vld [vmem:[%s1 + $0x460] sm:$0xff]
        %v951 = vld [vmem:[%s1 + $0x468] sm:$0xff]
        %v952 = vld [vmem:[%s1 + $0x470] sm:$0xff]
        %v953 = vld [vmem:[%s1 + $0x478] sm:$0xff]
        %v954 = vld [vmem:[%s1 + $0x480] sm:$0xff]
        %v955 = vld [vmem:[%s1 + $0x488] sm:$0xff]
        %v956 = vld [vmem:[%s1 + $0x490] sm:$0xff]
        %v957 = vld [vmem:[%s1 + $0x498] sm:$0xff]
        %v958 = vld [vmem:[%s1 + $0x4a0] sm:$0xff]
        %v959 = vld [vmem:[%s1 + $0x4a8] sm:$0xff]
        %v960 = vld [vmem:[%s1 + $0x4b0] sm:$0xff]
        %v961 = vld [vmem:[%s1 + $0x4b8] sm:$0xff]
        %v962 = vld [vmem:[%s1 + $0x4c0] sm:$0xff]
        %v963 = vld [vmem:[%s1 + $0x4c8] sm:$0xff]
        %v964 = vld [vmem:[%s1 + $0x4d0] sm:$0xff]
        %v965 = vld [vmem:[%s1 + $0x4d8] sm:$0xff]
        %v966 = vld [vmem:[%s1 + $0x4e0] sm:$0xff]
        %v967 = vld [vmem:[%s1 + $0x4e8] sm:$0xff]
        %v968 = vld [vmem:[%s1 + $0x4f0] sm:$0xff]
        %v969 = vld [vmem:[%s1 + $0x4f8] sm:$0xff]
        %v970 = vld [vmem:[%s1 + $0x500] sm:$0xff]
        %v971 = vld [vmem:[%s1 + $0x508] sm:$0xff]
        %v972 = vld [vmem:[%s1 + $0x510] sm:$0xff]
        %v973 = vld [vmem:[%s1 + $0x518] sm:$0xff]
        %v974 = vld [vmem:[%s1 + $0x520] sm:$0xff]
        %v975 = vld [vmem:[%s1 + $0x528] sm:$0xff]
        %v976 = vld [vmem:[%s1 + $0x530] sm:$0xff]
        %v977 = vld [vmem:[%s1 + $0x538] sm:$0xff]
        %v978 = vld [vmem:[%s1 + $0x540] sm:$0xff]
        %v979 = vld [vmem:[%s1 + $0x548] sm:$0xff]
        %v980 = vld [vmem:[%s1 + $0x550] sm:$0xff]
        %v981 = vld [vmem:[%s1 + $0x558] sm:$0xff]
        %v982 = vld [vmem:[%s1 + $0x560] sm:$0xff]
        %v983 = vld [vmem:[%s1 + $0x568] sm:$0xff]
        %v984 = vld [vmem:[%s1 + $0x570] sm:$0xff]
        %v985 = vld [vmem:[%s1 + $0x578] sm:$0xff]
        %v986 = vld [vmem:[%s1 + $0x580] sm:$0xff]
        %v987 = vld [vmem:[%s1 + $0x588] sm:$0xff]
        %v988 = vld [vmem:[%s1 + $0x590] sm:$0xff]
        %v989 = vld [vmem:[%s1 + $0x598] sm:$0xff]
        %v990 = vld [vmem:[%s1 + $0x5a0] sm:$0xff]
        %v991 = vld [vmem:[%s1 + $0x5a8] sm:$0xff]
        %v992 = vld [vmem:[%s1 + $0x5b0] sm:$0xff]
        %v993 = vld [vmem:[%s1 + $0x5b8] sm:$0xff]
        %v994 = vld [vmem:[%s1 + $0x5c0] sm:$0xff]
        %v995 = vld [vmem:[%s1 + $0x5c8] sm:$0xff]
        %v996 = vld [vmem:[%s1 + $0x5d0] sm:$0xff]
        %v997 = vld [vmem:[%s1 + $0x5d8] sm:$0xff]
        %v998 = vld [vmem:[%s1 + $0x5e0] sm:$0xff]
        %v999 = vld [vmem:[%s1 + $0x5e8] sm:$0xff]
        %v1000 = vld [vmem:[%s1 + $0x5f0] sm:$0xff]
        %v1001 = vld [vmem:[%s1 + $0x5f8] sm:$0xff]
        %v1002 = vld [vmem:[%s1 + $0x600] sm:$0xff]
        %v1003 = vld [vmem:[%s1 + $0x608] sm:$0xff]
        %v1004 = vld [vmem:[%s1 + $0x610] sm:$0xff]
        %v1005 = vld [vmem:[%s1 + $0x618] sm:$0xff]
        %v1006 = vld [vmem:[%s1 + $0x620] sm:$0xff]
        %v1007 = vld [vmem:[%s1 + $0x628] sm:$0xff]
        %v1008 = vld [vmem:[%s1 + $0x630] sm:$0xff]
        %v1009 = vld [vmem:[%s1 + $0x638] sm:$0xff]
        %v1010 = vld [vmem:[%s1 + $0x640] sm:$0xff]
        %v1011 = vld [vmem:[%s1 + $0x648] sm:$0xff]
        %v1012 = vld [vmem:[%s1 + $0x650] sm:$0xff]
        %v1013 = vld [vmem:[%s1 + $0x658] sm:$0xff]
        %v1014 = vld [vmem:[%s1 + $0x660] sm:$0xff]
        %v1015 = vld [vmem:[%s1 + $0x668] sm:$0xff]
        %v1016 = vld [vmem:[%s1 + $0x670] sm:$0xff]
        %v1017 = vld [vmem:[%s1 + $0x678] sm:$0xff]
        %v1018 = vld [vmem:[%s1 + $0x680] sm:$0xff]
        %v1019 = vld [vmem:[%s1 + $0x688] sm:$0xff]
        %v1020 = vld [vmem:[%s1 + $0x690] sm:$0xff]
        %v1021 = vld [vmem:[%s1 + $0x698] sm:$0xff]
        %v1022 = vld [vmem:[%s1 + $0x6a0] sm:$0xff]
        %v1023 = vld [vmem:[%s1 + $0x6a8] sm:$0xff]
        %v1024 = vld [vmem:[%s1 + $0x6b0] sm:$0xff]
        %v1025 = vld [vmem:[%s1 + $0x6b8] sm:$0xff]
        %v1026 = vld [vmem:[%s1 + $0x6c0] sm:$0xff]
        %v1027 = vld [vmem:[%s1 + $0x6c8] sm:$0xff]
        %v1028 = vld [vmem:[%s1 + $0x6d0] sm:$0xff]
        %v1029 = vld [vmem:[%s1 + $0x6d8] sm:$0xff]
        %v1030 = vld [vmem:[%s1 + $0x6e0] sm:$0xff]
        %v1031 = vld [vmem:[%s1 + $0x6e8] sm:$0xff]
        %v1032 = vld [vmem:[%s1 + $0x6f0] sm:$0xff]
        %v1033 = vld [vmem:[%s1 + $0x6f8] sm:$0xff]
        %v1034 = vld [vmem:[%s1 + $0x700] sm:$0xff]
        %v1035 = vld [vmem:[%s1 + $0x708] sm:$0xff]
        %v1036 = vld [vmem:[%s1 + $0x710] sm:$0xff]
        %v1037 = vld [vmem:[%s1 + $0x718] sm:$0xff]
        %v1038 = vld [vmem:[%s1 + $0x720] sm:$0xff]
        %v1039 = vld [vmem:[%s1 + $0x728] sm:$0xff]
        %v1040 = vld [vmem:[%s1 + $0x730] sm:$0xff]
        %v1041 = vld [vmem:[%s1 + $0x738] sm:$0xff]
        %v1042 = vld [vmem:[%s1 + $0x740] sm:$0xff]
        %v1043 = vld [vmem:[%s1 + $0x748] sm:$0xff]
        %v1044 = vld [vmem:[%s1 + $0x750] sm:$0xff]
        %v1045 = vld [vmem:[%s1 + $0x758] sm:$0xff]
        %v1046 = vld [vmem:[%s1 + $0x760] sm:$0xff]
        %v1047 = vld [vmem:[%s1 + $0x768] sm:$0xff]
        %v1048 = vld [vmem:[%s1 + $0x770] sm:$0xff]
        %v1049 = vld [vmem:[%s1 + $0x778] sm:$0xff]
        %v1050 = vld [vmem:[%s1 + $0x780] sm:$0xff]
        %v1051 = vld [vmem:[%s1 + $0x788] sm:$0xff]
        %v1052 = vld [vmem:[%s1 + $0x790] sm:$0xff]
        %v1053 = vld [vmem:[%s1 + $0x798] sm:$0xff]
        %v1054 = vld [vmem:[%s1 + $0x7a0] sm:$0xff]
        %v1055 = vld [vmem:[%s1 + $0x7a8] sm:$0xff]
        %v1056 = vld [vmem:[%s1 + $0x7b0] sm:$0xff]
        %v1057 = vld [vmem:[%s1 + $0x7b8] sm:$0xff]
        %v1058 = vld [vmem:[%s1 + $0x7c0] sm:$0xff]
        %v1059 = vld [vmem:[%s1 + $0x7c8] sm:$0xff]
        %v1060 = vld [vmem:[%s1 + $0x7d0] sm:$0xff]
        %v1061 = vld [vmem:[%s1 + $0x7d8] sm:$0xff]
        %v1062 = vld [vmem:[%s1 + $0x7e0] sm:$0xff]
        %v1063 = vld [vmem:[%s1 + $0x7e8] sm:$0xff]
        %v1064 = vld [vmem:[%s1 + $0x7f0] sm:$0xff]
        %v1065 = vld [vmem:[%s1 + $0x7f8] sm:$0xff]
        %v1066 = vld [vmem:[%s2] sm:$0xf]
        %v1068 = vlaneseq
        %v1069 = vshrl.u32 %v1068, 7
        %v1070 = vsub.s32 0, %v1069
        %v1071 = vrot.slane %v1066, %v1070
        %v1072 = vlaneseq
        %v1073 = vshrl.u32 %v1072, 7
        %v1074 = vsub.s32 1, %v1073
        %v1075 = vrot.slane %v1066, %v1074
        %v1076 = vlaneseq
        %v1077 = vshrl.u32 %v1076, 7
        %v1078 = vsub.s32 2, %v1077
        %v1079 = vrot.slane %v1066, %v1078
        %v1080 = vlaneseq
        %v1081 = vshrl.u32 %v1080, 7
        %v1082 = vsub.s32 3, %v1081
        %v1083 = vrot.slane %v1066, %v1082
        %v1092 = vunpack.c.l.b16 %v806
        %v1093 = vunpack.c.h.b16 %v806
        %v1094 = vunpack.c.l.b16 %v807
        %v1095 = vunpack.c.h.b16 %v807
        %v1096 = vunpack.c.l.b16 %v808
        %v1097 = vunpack.c.h.b16 %v808
        %v1098 = vunpack.c.l.b16 %v809
        %v1099 = vunpack.c.h.b16 %v809
        %v1100 = vpack.c.b16 %v1092, %v1092
        %v1101 = vpack.c.b16 %v1093, %v1093
        %v1102 = vpack.c.b16 %v1094, %v1094
        %v1103 = vpack.c.b16 %v1095, %v1095
        %v1104 = vpack.c.b16 %v1096, %v1096
        %v1105 = vpack.c.b16 %v1097, %v1097
        %v1106 = vpack.c.b16 %v1098, %v1098
        %v1107 = vpack.c.b16 %v1099, %v1099
        %v1372 = vunpack.c.l.b16 %v810
        %v1373 = vunpack.c.h.b16 %v810
        %v1374 = vunpack.c.l.b16 %v811
        %v1375 = vunpack.c.h.b16 %v811
        %v1376 = vunpack.c.l.b16 %v812
        %v1377 = vunpack.c.h.b16 %v812
        %v1378 = vunpack.c.l.b16 %v813
        %v1379 = vunpack.c.h.b16 %v813
        %v1380 = vunpack.c.l.b16 %v814
        %v1381 = vunpack.c.h.b16 %v814
        %v1382 = vunpack.c.l.b16 %v815
        %v1383 = vunpack.c.h.b16 %v815
        %v1384 = vunpack.c.l.b16 %v816
        %v1385 = vunpack.c.h.b16 %v816
        %v1386 = vunpack.c.l.b16 %v817
        %v1387 = vunpack.c.h.b16 %v817
        %v1388 = vunpack.c.l.b16 %v818
        %v1389 = vunpack.c.h.b16 %v818
        %v1390 = vunpack.c.l.b16 %v819
        %v1391 = vunpack.c.h.b16 %v819
        %v1392 = vunpack.c.l.b16 %v820
        %v1393 = vunpack.c.h.b16 %v820
        %v1394 = vunpack.c.l.b16 %v821
        %v1395 = vunpack.c.h.b16 %v821
        %v1396 = vunpack.c.l.b16 %v822
        %v1397 = vunpack.c.h.b16 %v822
        %v1398 = vunpack.c.l.b16 %v823
        %v1399 = vunpack.c.h.b16 %v823
        %v1400 = vunpack.c.l.b16 %v824
        %v1401 = vunpack.c.h.b16 %v824
        %v1402 = vunpack.c.l.b16 %v825
        %v1403 = vunpack.c.h.b16 %v825
        %v1404 = vunpack.c.l.b16 %v826
        %v1405 = vunpack.c.h.b16 %v826
        %v1406 = vunpack.c.l.b16 %v827
        %v1407 = vunpack.c.h.b16 %v827
        %v1408 = vunpack.c.l.b16 %v828
        %v1409 = vunpack.c.h.b16 %v828
        %v1410 = vunpack.c.l.b16 %v829
        %v1411 = vunpack.c.h.b16 %v829
        %v1412 = vunpack.c.l.b16 %v830
        %v1413 = vunpack.c.h.b16 %v830
        %v1414 = vunpack.c.l.b16 %v831
        %v1415 = vunpack.c.h.b16 %v831
        %v1416 = vunpack.c.l.b16 %v832
        %v1417 = vunpack.c.h.b16 %v832
        %v1418 = vunpack.c.l.b16 %v833
        %v1419 = vunpack.c.h.b16 %v833
        %v1420 = vunpack.c.l.b16 %v834
        %v1421 = vunpack.c.h.b16 %v834
        %v1422 = vunpack.c.l.b16 %v835
        %v1423 = vunpack.c.h.b16 %v835
        %v1424 = vunpack.c.l.b16 %v836
        %v1425 = vunpack.c.h.b16 %v836
        %v1426 = vunpack.c.l.b16 %v837
        %v1427 = vunpack.c.h.b16 %v837
        %v1428 = vunpack.c.l.b16 %v838
        %v1429 = vunpack.c.h.b16 %v838
        %v1430 = vunpack.c.l.b16 %v839
        %v1431 = vunpack.c.h.b16 %v839
        %v1432 = vunpack.c.l.b16 %v840
        %v1433 = vunpack.c.h.b16 %v840
        %v1434 = vunpack.c.l.b16 %v841
        %v1435 = vunpack.c.h.b16 %v841
        %v1436 = vunpack.c.l.b16 %v842
        %v1437 = vunpack.c.h.b16 %v842
        %v1438 = vunpack.c.l.b16 %v843
        %v1439 = vunpack.c.h.b16 %v843
        %v1440 = vunpack.c.l.b16 %v844
        %v1441 = vunpack.c.h.b16 %v844
        %v1442 = vunpack.c.l.b16 %v845
        %v1443 = vunpack.c.h.b16 %v845
        %v1444 = vunpack.c.l.b16 %v846
        %v1445 = vunpack.c.h.b16 %v846
        %v1446 = vunpack.c.l.b16 %v847
        %v1447 = vunpack.c.h.b16 %v847
        %v1448 = vunpack.c.l.b16 %v848
        %v1449 = vunpack.c.h.b16 %v848
        %v1450 = vunpack.c.l.b16 %v849
        %v1451 = vunpack.c.h.b16 %v849
        %v1452 = vunpack.c.l.b16 %v850
        %v1453 = vunpack.c.h.b16 %v850
        %v1454 = vunpack.c.l.b16 %v851
        %v1455 = vunpack.c.h.b16 %v851
        %v1456 = vunpack.c.l.b16 %v852
        %v1457 = vunpack.c.h.b16 %v852
        %v1458 = vunpack.c.l.b16 %v853
        %v1459 = vunpack.c.h.b16 %v853
        %v1460 = vunpack.c.l.b16 %v854
        %v1461 = vunpack.c.h.b16 %v854
        %v1462 = vunpack.c.l.b16 %v855
        %v1463 = vunpack.c.h.b16 %v855
        %v1464 = vunpack.c.l.b16 %v856
        %v1465 = vunpack.c.h.b16 %v856
        %v1466 = vunpack.c.l.b16 %v857
        %v1467 = vunpack.c.h.b16 %v857
        %v1468 = vunpack.c.l.b16 %v858
        %v1469 = vunpack.c.h.b16 %v858
        %v1470 = vunpack.c.l.b16 %v859
        %v1471 = vunpack.c.h.b16 %v859
        %v1472 = vunpack.c.l.b16 %v860
        %v1473 = vunpack.c.h.b16 %v860
        %v1474 = vunpack.c.l.b16 %v861
        %v1475 = vunpack.c.h.b16 %v861
        %v1476 = vunpack.c.l.b16 %v862
        %v1477 = vunpack.c.h.b16 %v862
        %v1478 = vunpack.c.l.b16 %v863
        %v1479 = vunpack.c.h.b16 %v863
        %v1480 = vunpack.c.l.b16 %v864
        %v1481 = vunpack.c.h.b16 %v864
        %v1482 = vunpack.c.l.b16 %v865
        %v1483 = vunpack.c.h.b16 %v865
        %v1484 = vunpack.c.l.b16 %v866
        %v1485 = vunpack.c.h.b16 %v866
        %v1486 = vunpack.c.l.b16 %v867
        %v1487 = vunpack.c.h.b16 %v867
        %v1488 = vunpack.c.l.b16 %v868
        %v1489 = vunpack.c.h.b16 %v868
        %v1490 = vunpack.c.l.b16 %v869
        %v1491 = vunpack.c.h.b16 %v869
        %v1492 = vunpack.c.l.b16 %v870
        %v1493 = vunpack.c.h.b16 %v870
        %v1494 = vunpack.c.l.b16 %v871
        %v1495 = vunpack.c.h.b16 %v871
        %v1496 = vunpack.c.l.b16 %v872
        %v1497 = vunpack.c.h.b16 %v872
        %v1498 = vunpack.c.l.b16 %v873
        %v1499 = vunpack.c.h.b16 %v873
        %v1500 = vunpack.c.l.b16 %v874
        %v1501 = vunpack.c.h.b16 %v874
        %v1502 = vunpack.c.l.b16 %v875
        %v1503 = vunpack.c.h.b16 %v875
        %v1504 = vunpack.c.l.b16 %v876
        %v1505 = vunpack.c.h.b16 %v876
        %v1506 = vunpack.c.l.b16 %v877
        %v1507 = vunpack.c.h.b16 %v877
        %v1508 = vunpack.c.l.b16 %v878
        %v1509 = vunpack.c.h.b16 %v878
        %v1510 = vunpack.c.l.b16 %v879
        %v1511 = vunpack.c.h.b16 %v879
        %v1512 = vunpack.c.l.b16 %v880
        %v1513 = vunpack.c.h.b16 %v880
        %v1514 = vunpack.c.l.b16 %v881
        %v1515 = vunpack.c.h.b16 %v881
        %v1516 = vunpack.c.l.b16 %v882
        %v1517 = vunpack.c.h.b16 %v882
        %v1518 = vunpack.c.l.b16 %v883
        %v1519 = vunpack.c.h.b16 %v883
        %v1520 = vunpack.c.l.b16 %v884
        %v1521 = vunpack.c.h.b16 %v884
        %v1522 = vunpack.c.l.b16 %v885
        %v1523 = vunpack.c.h.b16 %v885
        %v1524 = vunpack.c.l.b16 %v886
        %v1525 = vunpack.c.h.b16 %v886
        %v1526 = vunpack.c.l.b16 %v887
        %v1527 = vunpack.c.h.b16 %v887
        %v1528 = vunpack.c.l.b16 %v888
        %v1529 = vunpack.c.h.b16 %v888
        %v1530 = vunpack.c.l.b16 %v889
        %v1531 = vunpack.c.h.b16 %v889
        %v1532 = vunpack.c.l.b16 %v890
        %v1533 = vunpack.c.h.b16 %v890
        %v1534 = vunpack.c.l.b16 %v891
        %v1535 = vunpack.c.h.b16 %v891
        %v1536 = vunpack.c.l.b16 %v892
        %v1537 = vunpack.c.h.b16 %v892
        %v1538 = vunpack.c.l.b16 %v893
        %v1539 = vunpack.c.h.b16 %v893
        %v1540 = vunpack.c.l.b16 %v894
        %v1541 = vunpack.c.h.b16 %v894
        %v1542 = vunpack.c.l.b16 %v895
        %v1543 = vunpack.c.h.b16 %v895
        %v1544 = vunpack.c.l.b16 %v896
        %v1545 = vunpack.c.h.b16 %v896
        %v1546 = vunpack.c.l.b16 %v897
        %v1547 = vunpack.c.h.b16 %v897
        %v1548 = vunpack.c.l.b16 %v898
        %v1549 = vunpack.c.h.b16 %v898
        %v1550 = vunpack.c.l.b16 %v899
        %v1551 = vunpack.c.h.b16 %v899
        %v1552 = vunpack.c.l.b16 %v900
        %v1553 = vunpack.c.h.b16 %v900
        %v1554 = vunpack.c.l.b16 %v901
        %v1555 = vunpack.c.h.b16 %v901
        %v1556 = vunpack.c.l.b16 %v902
        %v1557 = vunpack.c.h.b16 %v902
        %v1558 = vunpack.c.l.b16 %v903
        %v1559 = vunpack.c.h.b16 %v903
        %v1560 = vunpack.c.l.b16 %v904
        %v1561 = vunpack.c.h.b16 %v904
        %v1562 = vunpack.c.l.b16 %v905
        %v1563 = vunpack.c.h.b16 %v905
        %v1564 = vunpack.c.l.b16 %v906
        %v1565 = vunpack.c.h.b16 %v906
        %v1566 = vunpack.c.l.b16 %v907
        %v1567 = vunpack.c.h.b16 %v907
        %v1568 = vunpack.c.l.b16 %v908
        %v1569 = vunpack.c.h.b16 %v908
        %v1570 = vunpack.c.l.b16 %v909
        %v1571 = vunpack.c.h.b16 %v909
        %v1572 = vunpack.c.l.b16 %v910
        %v1573 = vunpack.c.h.b16 %v910
        %v1574 = vunpack.c.l.b16 %v911
        %v1575 = vunpack.c.h.b16 %v911
        %v1576 = vunpack.c.l.b16 %v912
        %v1577 = vunpack.c.h.b16 %v912
        %v1578 = vunpack.c.l.b16 %v913
        %v1579 = vunpack.c.h.b16 %v913
        %v1580 = vunpack.c.l.b16 %v914
        %v1581 = vunpack.c.h.b16 %v914
        %v1582 = vunpack.c.l.b16 %v915
        %v1583 = vunpack.c.h.b16 %v915
        %v1584 = vunpack.c.l.b16 %v916
        %v1585 = vunpack.c.h.b16 %v916
        %v1586 = vunpack.c.l.b16 %v917
        %v1587 = vunpack.c.h.b16 %v917
        %v1588 = vunpack.c.l.b16 %v918
        %v1589 = vunpack.c.h.b16 %v918
        %v1590 = vunpack.c.l.b16 %v919
        %v1591 = vunpack.c.h.b16 %v919
        %v1592 = vunpack.c.l.b16 %v920
        %v1593 = vunpack.c.h.b16 %v920
        %v1594 = vunpack.c.l.b16 %v921
        %v1595 = vunpack.c.h.b16 %v921
        %v1596 = vunpack.c.l.b16 %v922
        %v1597 = vunpack.c.h.b16 %v922
        %v1598 = vunpack.c.l.b16 %v923
        %v1599 = vunpack.c.h.b16 %v923
        %v1600 = vunpack.c.l.b16 %v924
        %v1601 = vunpack.c.h.b16 %v924
        %v1602 = vunpack.c.l.b16 %v925
        %v1603 = vunpack.c.h.b16 %v925
        %v1604 = vunpack.c.l.b16 %v926
        %v1605 = vunpack.c.h.b16 %v926
        %v1606 = vunpack.c.l.b16 %v927
        %v1607 = vunpack.c.h.b16 %v927
        %v1608 = vunpack.c.l.b16 %v928
        %v1609 = vunpack.c.h.b16 %v928
        %v1610 = vunpack.c.l.b16 %v929
        %v1611 = vunpack.c.h.b16 %v929
        %v1612 = vunpack.c.l.b16 %v930
        %v1613 = vunpack.c.h.b16 %v930
        %v1614 = vunpack.c.l.b16 %v931
        %v1615 = vunpack.c.h.b16 %v931
        %v1616 = vunpack.c.l.b16 %v932
        %v1617 = vunpack.c.h.b16 %v932
        %v1618 = vunpack.c.l.b16 %v933
        %v1619 = vunpack.c.h.b16 %v933
        %v1620 = vunpack.c.l.b16 %v934
        %v1621 = vunpack.c.h.b16 %v934
        %v1622 = vunpack.c.l.b16 %v935
        %v1623 = vunpack.c.h.b16 %v935
        %v1624 = vunpack.c.l.b16 %v936
        %v1625 = vunpack.c.h.b16 %v936
        %v1626 = vunpack.c.l.b16 %v937
        %v1627 = vunpack.c.h.b16 %v937
        %v1628 = vunpack.c.l.b16 %v938
        %v1629 = vunpack.c.h.b16 %v938
        %v1630 = vunpack.c.l.b16 %v939
        %v1631 = vunpack.c.h.b16 %v939
        %v1632 = vunpack.c.l.b16 %v940
        %v1633 = vunpack.c.h.b16 %v940
        %v1634 = vunpack.c.l.b16 %v941
        %v1635 = vunpack.c.h.b16 %v941
        %v1636 = vunpack.c.l.b16 %v942
        %v1637 = vunpack.c.h.b16 %v942
        %v1638 = vunpack.c.l.b16 %v943
        %v1639 = vunpack.c.h.b16 %v943
        %v1640 = vunpack.c.l.b16 %v944
        %v1641 = vunpack.c.h.b16 %v944
        %v1642 = vunpack.c.l.b16 %v945
        %v1643 = vunpack.c.h.b16 %v945
        %v1644 = vunpack.c.l.b16 %v946
        %v1645 = vunpack.c.h.b16 %v946
        %v1646 = vunpack.c.l.b16 %v947
        %v1647 = vunpack.c.h.b16 %v947
        %v1648 = vunpack.c.l.b16 %v948
        %v1649 = vunpack.c.h.b16 %v948
        %v1650 = vunpack.c.l.b16 %v949
        %v1651 = vunpack.c.h.b16 %v949
        %v1652 = vunpack.c.l.b16 %v950
        %v1653 = vunpack.c.h.b16 %v950
        %v1654 = vunpack.c.l.b16 %v951
        %v1655 = vunpack.c.h.b16 %v951
        %v1656 = vunpack.c.l.b16 %v952
        %v1657 = vunpack.c.h.b16 %v952
        %v1658 = vunpack.c.l.b16 %v953
        %v1659 = vunpack.c.h.b16 %v953
        %v1660 = vunpack.c.l.b16 %v954
        %v1661 = vunpack.c.h.b16 %v954
        %v1662 = vunpack.c.l.b16 %v955
        %v1663 = vunpack.c.h.b16 %v955
        %v1664 = vunpack.c.l.b16 %v956
        %v1665 = vunpack.c.h.b16 %v956
        %v1666 = vunpack.c.l.b16 %v957
        %v1667 = vunpack.c.h.b16 %v957
        %v1668 = vunpack.c.l.b16 %v958
        %v1669 = vunpack.c.h.b16 %v958
        %v1670 = vunpack.c.l.b16 %v959
        %v1671 = vunpack.c.h.b16 %v959
        %v1672 = vunpack.c.l.b16 %v960
        %v1673 = vunpack.c.h.b16 %v960
        %v1674 = vunpack.c.l.b16 %v961
        %v1675 = vunpack.c.h.b16 %v961
        %v1676 = vunpack.c.l.b16 %v962
        %v1677 = vunpack.c.h.b16 %v962
        %v1678 = vunpack.c.l.b16 %v963
        %v1679 = vunpack.c.h.b16 %v963
        %v1680 = vunpack.c.l.b16 %v964
        %v1681 = vunpack.c.h.b16 %v964
        %v1682 = vunpack.c.l.b16 %v965
        %v1683 = vunpack.c.h.b16 %v965
        %v1684 = vunpack.c.l.b16 %v966
        %v1685 = vunpack.c.h.b16 %v966
        %v1686 = vunpack.c.l.b16 %v967
        %v1687 = vunpack.c.h.b16 %v967
        %v1688 = vunpack.c.l.b16 %v968
        %v1689 = vunpack.c.h.b16 %v968
        %v1690 = vunpack.c.l.b16 %v969
        %v1691 = vunpack.c.h.b16 %v969
        %v1692 = vunpack.c.l.b16 %v970
        %v1693 = vunpack.c.h.b16 %v970
        %v1694 = vunpack.c.l.b16 %v971
        %v1695 = vunpack.c.h.b16 %v971
        %v1696 = vunpack.c.l.b16 %v972
        %v1697 = vunpack.c.h.b16 %v972
        %v1698 = vunpack.c.l.b16 %v973
        %v1699 = vunpack.c.h.b16 %v973
        %v1700 = vunpack.c.l.b16 %v974
        %v1701 = vunpack.c.h.b16 %v974
        %v1702 = vunpack.c.l.b16 %v975
        %v1703 = vunpack.c.h.b16 %v975
        %v1704 = vunpack.c.l.b16 %v976
        %v1705 = vunpack.c.h.b16 %v976
        %v1706 = vunpack.c.l.b16 %v977
        %v1707 = vunpack.c.h.b16 %v977
        %v1708 = vunpack.c.l.b16 %v978
        %v1709 = vunpack.c.h.b16 %v978
        %v1710 = vunpack.c.l.b16 %v979
        %v1711 = vunpack.c.h.b16 %v979
        %v1712 = vunpack.c.l.b16 %v980
        %v1713 = vunpack.c.h.b16 %v980
        %v1714 = vunpack.c.l.b16 %v981
        %v1715 = vunpack.c.h.b16 %v981
        %v1716 = vunpack.c.l.b16 %v982
        %v1717 = vunpack.c.h.b16 %v982
        %v1718 = vunpack.c.l.b16 %v983
        %v1719 = vunpack.c.h.b16 %v983
        %v1720 = vunpack.c.l.b16 %v984
        %v1721 = vunpack.c.h.b16 %v984
        %v1722 = vunpack.c.l.b16 %v985
        %v1723 = vunpack.c.h.b16 %v985
        %v1724 = vunpack.c.l.b16 %v986
        %v1725 = vunpack.c.h.b16 %v986
        %v1726 = vunpack.c.l.b16 %v987
        %v1727 = vunpack.c.h.b16 %v987
        %v1728 = vunpack.c.l.b16 %v988
        %v1729 = vunpack.c.h.b16 %v988
        %v1730 = vunpack.c.l.b16 %v989
        %v1731 = vunpack.c.h.b16 %v989
        %v1732 = vunpack.c.l.b16 %v990
        %v1733 = vunpack.c.h.b16 %v990
        %v1734 = vunpack.c.l.b16 %v991
        %v1735 = vunpack.c.h.b16 %v991
        %v1736 = vunpack.c.l.b16 %v992
        %v1737 = vunpack.c.h.b16 %v992
        %v1738 = vunpack.c.l.b16 %v993
        %v1739 = vunpack.c.h.b16 %v993
        %v1740 = vunpack.c.l.b16 %v994
        %v1741 = vunpack.c.h.b16 %v994
        %v1742 = vunpack.c.l.b16 %v995
        %v1743 = vunpack.c.h.b16 %v995
        %v1744 = vunpack.c.l.b16 %v996
        %v1745 = vunpack.c.h.b16 %v996
        %v1746 = vunpack.c.l.b16 %v997
        %v1747 = vunpack.c.h.b16 %v997
        %v1748 = vunpack.c.l.b16 %v998
        %v1749 = vunpack.c.h.b16 %v998
        %v1750 = vunpack.c.l.b16 %v999
        %v1751 = vunpack.c.h.b16 %v999
        %v1752 = vunpack.c.l.b16 %v1000
        %v1753 = vunpack.c.h.b16 %v1000
        %v1754 = vunpack.c.l.b16 %v1001
        %v1755 = vunpack.c.h.b16 %v1001
        %v1756 = vunpack.c.l.b16 %v1002
        %v1757 = vunpack.c.h.b16 %v1002
        %v1758 = vunpack.c.l.b16 %v1003
        %v1759 = vunpack.c.h.b16 %v1003
        %v1760 = vunpack.c.l.b16 %v1004
        %v1761 = vunpack.c.h.b16 %v1004
        %v1762 = vunpack.c.l.b16 %v1005
        %v1763 = vunpack.c.h.b16 %v1005
        %v1764 = vunpack.c.l.b16 %v1006
        %v1765 = vunpack.c.h.b16 %v1006
        %v1766 = vunpack.c.l.b16 %v1007
        %v1767 = vunpack.c.h.b16 %v1007
        %v1768 = vunpack.c.l.b16 %v1008
        %v1769 = vunpack.c.h.b16 %v1008
        %v1770 = vunpack.c.l.b16 %v1009
        %v1771 = vunpack.c.h.b16 %v1009
        %v1772 = vunpack.c.l.b16 %v1010
        %v1773 = vunpack.c.h.b16 %v1010
        %v1774 = vunpack.c.l.b16 %v1011
        %v1775 = vunpack.c.h.b16 %v1011
        %v1776 = vunpack.c.l.b16 %v1012
        %v1777 = vunpack.c.h.b16 %v1012
        %v1778 = vunpack.c.l.b16 %v1013
        %v1779 = vunpack.c.h.b16 %v1013
        %v1780 = vunpack.c.l.b16 %v1014
        %v1781 = vunpack.c.h.b16 %v1014
        %v1782 = vunpack.c.l.b16 %v1015
        %v1783 = vunpack.c.h.b16 %v1015
        %v1784 = vunpack.c.l.b16 %v1016
        %v1785 = vunpack.c.h.b16 %v1016
        %v1786 = vunpack.c.l.b16 %v1017
        %v1787 = vunpack.c.h.b16 %v1017
        %v1788 = vunpack.c.l.b16 %v1018
        %v1789 = vunpack.c.h.b16 %v1018
        %v1790 = vunpack.c.l.b16 %v1019
        %v1791 = vunpack.c.h.b16 %v1019
        %v1792 = vunpack.c.l.b16 %v1020
        %v1793 = vunpack.c.h.b16 %v1020
        %v1794 = vunpack.c.l.b16 %v1021
        %v1795 = vunpack.c.h.b16 %v1021
        %v1796 = vunpack.c.l.b16 %v1022
        %v1797 = vunpack.c.h.b16 %v1022
        %v1798 = vunpack.c.l.b16 %v1023
        %v1799 = vunpack.c.h.b16 %v1023
        %v1800 = vunpack.c.l.b16 %v1024
        %v1801 = vunpack.c.h.b16 %v1024
        %v1802 = vunpack.c.l.b16 %v1025
        %v1803 = vunpack.c.h.b16 %v1025
        %v1804 = vunpack.c.l.b16 %v1026
        %v1805 = vunpack.c.h.b16 %v1026
        %v1806 = vunpack.c.l.b16 %v1027
        %v1807 = vunpack.c.h.b16 %v1027
        %v1808 = vunpack.c.l.b16 %v1028
        %v1809 = vunpack.c.h.b16 %v1028
        %v1810 = vunpack.c.l.b16 %v1029
        %v1811 = vunpack.c.h.b16 %v1029
        %v1812 = vunpack.c.l.b16 %v1030
        %v1813 = vunpack.c.h.b16 %v1030
        %v1814 = vunpack.c.l.b16 %v1031
        %v1815 = vunpack.c.h.b16 %v1031
        %v1816 = vunpack.c.l.b16 %v1032
        %v1817 = vunpack.c.h.b16 %v1032
        %v1818 = vunpack.c.l.b16 %v1033
        %v1819 = vunpack.c.h.b16 %v1033
        %v1820 = vunpack.c.l.b16 %v1034
        %v1821 = vunpack.c.h.b16 %v1034
        %v1822 = vunpack.c.l.b16 %v1035
        %v1823 = vunpack.c.h.b16 %v1035
        %v1824 = vunpack.c.l.b16 %v1036
        %v1825 = vunpack.c.h.b16 %v1036
        %v1826 = vunpack.c.l.b16 %v1037
        %v1827 = vunpack.c.h.b16 %v1037
        %v1828 = vunpack.c.l.b16 %v1038
        %v1829 = vunpack.c.h.b16 %v1038
        %v1830 = vunpack.c.l.b16 %v1039
        %v1831 = vunpack.c.h.b16 %v1039
        %v1832 = vunpack.c.l.b16 %v1040
        %v1833 = vunpack.c.h.b16 %v1040
        %v1834 = vunpack.c.l.b16 %v1041
        %v1835 = vunpack.c.h.b16 %v1041
        %v1836 = vunpack.c.l.b16 %v1042
        %v1837 = vunpack.c.h.b16 %v1042
        %v1838 = vunpack.c.l.b16 %v1043
        %v1839 = vunpack.c.h.b16 %v1043
        %v1840 = vunpack.c.l.b16 %v1044
        %v1841 = vunpack.c.h.b16 %v1044
        %v1842 = vunpack.c.l.b16 %v1045
        %v1843 = vunpack.c.h.b16 %v1045
        %v1844 = vunpack.c.l.b16 %v1046
        %v1845 = vunpack.c.h.b16 %v1046
        %v1846 = vunpack.c.l.b16 %v1047
        %v1847 = vunpack.c.h.b16 %v1047
        %v1848 = vunpack.c.l.b16 %v1048
        %v1849 = vunpack.c.h.b16 %v1048
        %v1850 = vunpack.c.l.b16 %v1049
        %v1851 = vunpack.c.h.b16 %v1049
        %v1852 = vunpack.c.l.b16 %v1050
        %v1853 = vunpack.c.h.b16 %v1050
        %v1854 = vunpack.c.l.b16 %v1051
        %v1855 = vunpack.c.h.b16 %v1051
        %v1856 = vunpack.c.l.b16 %v1052
        %v1857 = vunpack.c.h.b16 %v1052
        %v1858 = vunpack.c.l.b16 %v1053
        %v1859 = vunpack.c.h.b16 %v1053
        %v1860 = vunpack.c.l.b16 %v1054
        %v1861 = vunpack.c.h.b16 %v1054
        %v1862 = vunpack.c.l.b16 %v1055
        %v1863 = vunpack.c.h.b16 %v1055
        %v1864 = vunpack.c.l.b16 %v1056
        %v1865 = vunpack.c.h.b16 %v1056
        %v1866 = vunpack.c.l.b16 %v1057
        %v1867 = vunpack.c.h.b16 %v1057
        %v1868 = vunpack.c.l.b16 %v1058
        %v1869 = vunpack.c.h.b16 %v1058
        %v1870 = vunpack.c.l.b16 %v1059
        %v1871 = vunpack.c.h.b16 %v1059
        %v1872 = vunpack.c.l.b16 %v1060
        %v1873 = vunpack.c.h.b16 %v1060
        %v1874 = vunpack.c.l.b16 %v1061
        %v1875 = vunpack.c.h.b16 %v1061
        %v1876 = vunpack.c.l.b16 %v1062
        %v1877 = vunpack.c.h.b16 %v1062
        %v1878 = vunpack.c.l.b16 %v1063
        %v1879 = vunpack.c.h.b16 %v1063
        %v1880 = vunpack.c.l.b16 %v1064
        %v1881 = vunpack.c.h.b16 %v1064
        %v1882 = vunpack.c.l.b16 %v1065
        %v1883 = vunpack.c.h.b16 %v1065
        %v1884 = vpack.c.b16 %v1376, %v1372
        %v1885 = vpack.c.b16 %v1377, %v1373
        %v1886 = vpack.c.b16 %v1378, %v1374
        %v1887 = vpack.c.b16 %v1379, %v1375
        %v1888 = vpack.c.b16 %v1384, %v1380
        %v1889 = vpack.c.b16 %v1385, %v1381
        %v1890 = vpack.c.b16 %v1386, %v1382
        %v1891 = vpack.c.b16 %v1387, %v1383
        %v1892 = vpack.c.b16 %v1392, %v1388
        %v1893 = vpack.c.b16 %v1393, %v1389
        %v1894 = vpack.c.b16 %v1394, %v1390
        %v1895 = vpack.c.b16 %v1395, %v1391
        %v1896 = vpack.c.b16 %v1400, %v1396
        %v1897 = vpack.c.b16 %v1401, %v1397
        %v1898 = vpack.c.b16 %v1402, %v1398
        %v1899 = vpack.c.b16 %v1403, %v1399
        %v1900 = vpack.c.b16 %v1408, %v1404
        %v1901 = vpack.c.b16 %v1409, %v1405
        %v1902 = vpack.c.b16 %v1410, %v1406
        %v1903 = vpack.c.b16 %v1411, %v1407
        %v1904 = vpack.c.b16 %v1416, %v1412
        %v1905 = vpack.c.b16 %v1417, %v1413
        %v1906 = vpack.c.b16 %v1418, %v1414
        %v1907 = vpack.c.b16 %v1419, %v1415
        %v1908 = vpack.c.b16 %v1424, %v1420
        %v1909 = vpack.c.b16 %v1425, %v1421
        %v1910 = vpack.c.b16 %v1426, %v1422
        %v1911 = vpack.c.b16 %v1427, %v1423
        %v1912 = vpack.c.b16 %v1432, %v1428
        %v1913 = vpack.c.b16 %v1433, %v1429
        %v1914 = vpack.c.b16 %v1434, %v1430
        %v1915 = vpack.c.b16 %v1435, %v1431
        %v1916 = vpack.c.b16 %v1440, %v1436
        %v1917 = vpack.c.b16 %v1441, %v1437
        %v1918 = vpack.c.b16 %v1442, %v1438
        %v1919 = vpack.c.b16 %v1443, %v1439
        %v1920 = vpack.c.b16 %v1448, %v1444
        %v1921 = vpack.c.b16 %v1449, %v1445
        %v1922 = vpack.c.b16 %v1450, %v1446
        %v1923 = vpack.c.b16 %v1451, %v1447
        %v1924 = vpack.c.b16 %v1456, %v1452
        %v1925 = vpack.c.b16 %v1457, %v1453
        %v1926 = vpack.c.b16 %v1458, %v1454
        %v1927 = vpack.c.b16 %v1459, %v1455
        %v1928 = vpack.c.b16 %v1464, %v1460
        %v1929 = vpack.c.b16 %v1465, %v1461
        %v1930 = vpack.c.b16 %v1466, %v1462
        %v1931 = vpack.c.b16 %v1467, %v1463
        %v1932 = vpack.c.b16 %v1472, %v1468
        %v1933 = vpack.c.b16 %v1473, %v1469
        %v1934 = vpack.c.b16 %v1474, %v1470
        %v1935 = vpack.c.b16 %v1475, %v1471
        %v1936 = vpack.c.b16 %v1480, %v1476
        %v1937 = vpack.c.b16 %v1481, %v1477
        %v1938 = vpack.c.b16 %v1482, %v1478
        %v1939 = vpack.c.b16 %v1483, %v1479
        %v1940 = vpack.c.b16 %v1488, %v1484
        %v1941 = vpack.c.b16 %v1489, %v1485
        %v1942 = vpack.c.b16 %v1490, %v1486
        %v1943 = vpack.c.b16 %v1491, %v1487
        %v1944 = vpack.c.b16 %v1496, %v1492
        %v1945 = vpack.c.b16 %v1497, %v1493
        %v1946 = vpack.c.b16 %v1498, %v1494
        %v1947 = vpack.c.b16 %v1499, %v1495
        %v1948 = vpack.c.b16 %v1504, %v1500
        %v1949 = vpack.c.b16 %v1505, %v1501
        %v1950 = vpack.c.b16 %v1506, %v1502
        %v1951 = vpack.c.b16 %v1507, %v1503
        %v1952 = vpack.c.b16 %v1512, %v1508
        %v1953 = vpack.c.b16 %v1513, %v1509
        %v1954 = vpack.c.b16 %v1514, %v1510
        %v1955 = vpack.c.b16 %v1515, %v1511
        %v1956 = vpack.c.b16 %v1520, %v1516
        %v1957 = vpack.c.b16 %v1521, %v1517
        %v1958 = vpack.c.b16 %v1522, %v1518
        %v1959 = vpack.c.b16 %v1523, %v1519
        %v1960 = vpack.c.b16 %v1528, %v1524
        %v1961 = vpack.c.b16 %v1529, %v1525
        %v1962 = vpack.c.b16 %v1530, %v1526
        %v1963 = vpack.c.b16 %v1531, %v1527
        %v1964 = vpack.c.b16 %v1536, %v1532
        %v1965 = vpack.c.b16 %v1537, %v1533
        %v1966 = vpack.c.b16 %v1538, %v1534
        %v1967 = vpack.c.b16 %v1539, %v1535
        %v1968 = vpack.c.b16 %v1544, %v1540
        %v1969 = vpack.c.b16 %v1545, %v1541
        %v1970 = vpack.c.b16 %v1546, %v1542
        %v1971 = vpack.c.b16 %v1547, %v1543
        %v1972 = vpack.c.b16 %v1552, %v1548
        %v1973 = vpack.c.b16 %v1553, %v1549
        %v1974 = vpack.c.b16 %v1554, %v1550
        %v1975 = vpack.c.b16 %v1555, %v1551
        %v1976 = vpack.c.b16 %v1560, %v1556
        %v1977 = vpack.c.b16 %v1561, %v1557
        %v1978 = vpack.c.b16 %v1562, %v1558
        %v1979 = vpack.c.b16 %v1563, %v1559
        %v1980 = vpack.c.b16 %v1568, %v1564
        %v1981 = vpack.c.b16 %v1569, %v1565
        %v1982 = vpack.c.b16 %v1570, %v1566
        %v1983 = vpack.c.b16 %v1571, %v1567
        %v1984 = vpack.c.b16 %v1576, %v1572
        %v1985 = vpack.c.b16 %v1577, %v1573
        %v1986 = vpack.c.b16 %v1578, %v1574
        %v1987 = vpack.c.b16 %v1579, %v1575
        %v1988 = vpack.c.b16 %v1584, %v1580
        %v1989 = vpack.c.b16 %v1585, %v1581
        %v1990 = vpack.c.b16 %v1586, %v1582
        %v1991 = vpack.c.b16 %v1587, %v1583
        %v1992 = vpack.c.b16 %v1592, %v1588
        %v1993 = vpack.c.b16 %v1593, %v1589
        %v1994 = vpack.c.b16 %v1594, %v1590
        %v1995 = vpack.c.b16 %v1595, %v1591
        %v1996 = vpack.c.b16 %v1600, %v1596
        %v1997 = vpack.c.b16 %v1601, %v1597
        %v1998 = vpack.c.b16 %v1602, %v1598
        %v1999 = vpack.c.b16 %v1603, %v1599
        %v2000 = vpack.c.b16 %v1608, %v1604
        %v2001 = vpack.c.b16 %v1609, %v1605
        %v2002 = vpack.c.b16 %v1610, %v1606
        %v2003 = vpack.c.b16 %v1611, %v1607
        %v2004 = vpack.c.b16 %v1616, %v1612
        %v2005 = vpack.c.b16 %v1617, %v1613
        %v2006 = vpack.c.b16 %v1618, %v1614
        %v2007 = vpack.c.b16 %v1619, %v1615
        %v2008 = vpack.c.b16 %v1624, %v1620
        %v2009 = vpack.c.b16 %v1625, %v1621
        %v2010 = vpack.c.b16 %v1626, %v1622
        %v2011 = vpack.c.b16 %v1627, %v1623
        %v2012 = vpack.c.b16 %v1632, %v1628
        %v2013 = vpack.c.b16 %v1633, %v1629
        %v2014 = vpack.c.b16 %v1634, %v1630
        %v2015 = vpack.c.b16 %v1635, %v1631
        %v2016 = vpack.c.b16 %v1640, %v1636
        %v2017 = vpack.c.b16 %v1641, %v1637
        %v2018 = vpack.c.b16 %v1642, %v1638
        %v2019 = vpack.c.b16 %v1643, %v1639
        %v2020 = vpack.c.b16 %v1648, %v1644
        %v2021 = vpack.c.b16 %v1649, %v1645
        %v2022 = vpack.c.b16 %v1650, %v1646
        %v2023 = vpack.c.b16 %v1651, %v1647
        %v2024 = vpack.c.b16 %v1656, %v1652
        %v2025 = vpack.c.b16 %v1657, %v1653
        %v2026 = vpack.c.b16 %v1658, %v1654
        %v2027 = vpack.c.b16 %v1659, %v1655
        %v2028 = vpack.c.b16 %v1664, %v1660
        %v2029 = vpack.c.b16 %v1665, %v1661
        %v2030 = vpack.c.b16 %v1666, %v1662
        %v2031 = vpack.c.b16 %v1667, %v1663
        %v2032 = vpack.c.b16 %v1672, %v1668
        %v2033 = vpack.c.b16 %v1673, %v1669
        %v2034 = vpack.c.b16 %v1674, %v1670
        %v2035 = vpack.c.b16 %v1675, %v1671
        %v2036 = vpack.c.b16 %v1680, %v1676
        %v2037 = vpack.c.b16 %v1681, %v1677
        %v2038 = vpack.c.b16 %v1682, %v1678
        %v2039 = vpack.c.b16 %v1683, %v1679
        %v2040 = vpack.c.b16 %v1688, %v1684
        %v2041 = vpack.c.b16 %v1689, %v1685
        %v2042 = vpack.c.b16 %v1690, %v1686
        %v2043 = vpack.c.b16 %v1691, %v1687
        %v2044 = vpack.c.b16 %v1696, %v1692
        %v2045 = vpack.c.b16 %v1697, %v1693
        %v2046 = vpack.c.b16 %v1698, %v1694
        %v2047 = vpack.c.b16 %v1699, %v1695
        %v2048 = vpack.c.b16 %v1704, %v1700
        %v2049 = vpack.c.b16 %v1705, %v1701
        %v2050 = vpack.c.b16 %v1706, %v1702
        %v2051 = vpack.c.b16 %v1707, %v1703
        %v2052 = vpack.c.b16 %v1712, %v1708
        %v2053 = vpack.c.b16 %v1713, %v1709
        %v2054 = vpack.c.b16 %v1714, %v1710
        %v2055 = vpack.c.b16 %v1715, %v1711
        %v2056 = vpack.c.b16 %v1720, %v1716
        %v2057 = vpack.c.b16 %v1721, %v1717
        %v2058 = vpack.c.b16 %v1722, %v1718
        %v2059 = vpack.c.b16 %v1723, %v1719
        %v2060 = vpack.c.b16 %v1728, %v1724
        %v2061 = vpack.c.b16 %v1729, %v1725
        %v2062 = vpack.c.b16 %v1730, %v1726
        %v2063 = vpack.c.b16 %v1731, %v1727
        %v2064 = vpack.c.b16 %v1736, %v1732
        %v2065 = vpack.c.b16 %v1737, %v1733
        %v2066 = vpack.c.b16 %v1738, %v1734
        %v2067 = vpack.c.b16 %v1739, %v1735
        %v2068 = vpack.c.b16 %v1744, %v1740
        %v2069 = vpack.c.b16 %v1745, %v1741
        %v2070 = vpack.c.b16 %v1746, %v1742
        %v2071 = vpack.c.b16 %v1747, %v1743
        %v2072 = vpack.c.b16 %v1752, %v1748
        %v2073 = vpack.c.b16 %v1753, %v1749
        %v2074 = vpack.c.b16 %v1754, %v1750
        %v2075 = vpack.c.b16 %v1755, %v1751
        %v2076 = vpack.c.b16 %v1760, %v1756
        %v2077 = vpack.c.b16 %v1761, %v1757
        %v2078 = vpack.c.b16 %v1762, %v1758
        %v2079 = vpack.c.b16 %v1763, %v1759
        %v2080 = vpack.c.b16 %v1768, %v1764
        %v2081 = vpack.c.b16 %v1769, %v1765
        %v2082 = vpack.c.b16 %v1770, %v1766
        %v2083 = vpack.c.b16 %v1771, %v1767
        %v2084 = vpack.c.b16 %v1776, %v1772
        %v2085 = vpack.c.b16 %v1777, %v1773
        %v2086 = vpack.c.b16 %v1778, %v1774
        %v2087 = vpack.c.b16 %v1779, %v1775
        %v2088 = vpack.c.b16 %v1784, %v1780
        %v2089 = vpack.c.b16 %v1785, %v1781
        %v2090 = vpack.c.b16 %v1786, %v1782
        %v2091 = vpack.c.b16 %v1787, %v1783
        %v2092 = vpack.c.b16 %v1792, %v1788
        %v2093 = vpack.c.b16 %v1793, %v1789
        %v2094 = vpack.c.b16 %v1794, %v1790
        %v2095 = vpack.c.b16 %v1795, %v1791
        %v2096 = vpack.c.b16 %v1800, %v1796
        %v2097 = vpack.c.b16 %v1801, %v1797
        %v2098 = vpack.c.b16 %v1802, %v1798
        %v2099 = vpack.c.b16 %v1803, %v1799
        %v2100 = vpack.c.b16 %v1808, %v1804
        %v2101 = vpack.c.b16 %v1809, %v1805
        %v2102 = vpack.c.b16 %v1810, %v1806
        %v2103 = vpack.c.b16 %v1811, %v1807
        %v2104 = vpack.c.b16 %v1816, %v1812
        %v2105 = vpack.c.b16 %v1817, %v1813
        %v2106 = vpack.c.b16 %v1818, %v1814
        %v2107 = vpack.c.b16 %v1819, %v1815
        %v2108 = vpack.c.b16 %v1824, %v1820
        %v2109 = vpack.c.b16 %v1825, %v1821
        %v2110 = vpack.c.b16 %v1826, %v1822
        %v2111 = vpack.c.b16 %v1827, %v1823
        %v2112 = vpack.c.b16 %v1832, %v1828
        %v2113 = vpack.c.b16 %v1833, %v1829
        %v2114 = vpack.c.b16 %v1834, %v1830
        %v2115 = vpack.c.b16 %v1835, %v1831
        %v2116 = vpack.c.b16 %v1840, %v1836
        %v2117 = vpack.c.b16 %v1841, %v1837
        %v2118 = vpack.c.b16 %v1842, %v1838
        %v2119 = vpack.c.b16 %v1843, %v1839
        %v2120 = vpack.c.b16 %v1848, %v1844
        %v2121 = vpack.c.b16 %v1849, %v1845
        %v2122 = vpack.c.b16 %v1850, %v1846
        %v2123 = vpack.c.b16 %v1851, %v1847
        %v2124 = vpack.c.b16 %v1856, %v1852
        %v2125 = vpack.c.b16 %v1857, %v1853
        %v2126 = vpack.c.b16 %v1858, %v1854
        %v2127 = vpack.c.b16 %v1859, %v1855
        %v2128 = vpack.c.b16 %v1864, %v1860
        %v2129 = vpack.c.b16 %v1865, %v1861
        %v2130 = vpack.c.b16 %v1866, %v1862
        %v2131 = vpack.c.b16 %v1867, %v1863
        %v2132 = vpack.c.b16 %v1872, %v1868
        %v2133 = vpack.c.b16 %v1873, %v1869
        %v2134 = vpack.c.b16 %v1874, %v1870
        %v2135 = vpack.c.b16 %v1875, %v1871
        %v2136 = vpack.c.b16 %v1880, %v1876
        %v2137 = vpack.c.b16 %v1881, %v1877
        %v2138 = vpack.c.b16 %v1882, %v1878
        %v2139 = vpack.c.b16 %v1883, %v1879
        %2396 = vmatprep.subr.bf16.mxu0 %v1885
        %2397 = vmatpush1.bf16.msra.mxu0 %v1884
        %2398 = vmatprep.subr.bf16.mxu0 %v1889
        %2399 = vmatpush1.bf16.msra.mxu0 %v1888
        %2400 = vmatprep.subr.bf16.mxu0 %v1893
        %2401 = vmatpush1.bf16.msra.mxu0 %v1892
        %2402 = vmatprep.subr.bf16.mxu0 %v1897
        %2403 = vmatpush1.bf16.msra.mxu0 %v1896
        %2404 = vmatprep.subr.bf16.mxu0 %v1901
        %2405 = vmatpush1.bf16.msra.mxu0 %v1900
        %2406 = vmatprep.subr.bf16.mxu0 %v1905
        %2407 = vmatpush1.bf16.msra.mxu0 %v1904
        %2408 = vmatprep.subr.bf16.mxu0 %v1909
        %2409 = vmatpush1.bf16.msra.mxu0 %v1908
        %2410 = vmatprep.subr.bf16.mxu0 %v1913
        %2411 = vmatpush1.bf16.msra.mxu0 %v1912
        %2412 = vmatprep.subr.bf16.mxu0 %v1917
        %2413 = vmatpush1.bf16.msra.mxu0 %v1916
        %2414 = vmatprep.subr.bf16.mxu0 %v1921
        %2415 = vmatpush1.bf16.msra.mxu0 %v1920
        %2416 = vmatprep.subr.bf16.mxu0 %v1925
        %2417 = vmatpush1.bf16.msra.mxu0 %v1924
        %2418 = vmatprep.subr.bf16.mxu0 %v1929
        %2419 = vmatpush1.bf16.msra.mxu0 %v1928
        %2420 = vmatprep.subr.bf16.mxu0 %v1933
        %2421 = vmatpush1.bf16.msra.mxu0 %v1932
        %2422 = vmatprep.subr.bf16.mxu0 %v1937
        %2423 = vmatpush1.bf16.msra.mxu0 %v1936
        %2424 = vmatprep.subr.bf16.mxu0 %v1941
        %2425 = vmatpush1.bf16.msra.mxu0 %v1940
        %2426 = vmatprep.subr.bf16.mxu0 %v1945
        %2427 = vmatpush1.bf16.msra.mxu0 %v1944
        %2428 = vmatprep.mubr.bf16.mxu0 %v1101
        %2429 = vmatmul.mubr.bf16.gmra.mrb[0].mxu0 %v1100
        %v2430 = vpop.f32.mrb[0].mxu0
        %v2431 = vadd.f32 %v1071, %v2430
        %v2432 = vpop.f32.mrb[0].mxu0
        %v2433 = vadd.f32 %v1075, %v2432
        %v2434 = vpop.f32.mrb[0].mxu0
        %v2435 = vpop.f32.mrb[0].mxu0
        %2436 = vdwg.mxu0
        %2437 = vmatprep.subr.bf16.mxu0 %v1949
        %2438 = vmatpush1.bf16.msra.mxu0 %v1948
        %2439 = vmatprep.subr.bf16.mxu0 %v1953
        %2440 = vmatpush1.bf16.msra.mxu0 %v1952
        %2441 = vmatprep.subr.bf16.mxu0 %v1957
        %2442 = vmatpush1.bf16.msra.mxu0 %v1956
        %2443 = vmatprep.subr.bf16.mxu0 %v1961
        %2444 = vmatpush1.bf16.msra.mxu0 %v1960
        %2445 = vmatprep.subr.bf16.mxu0 %v1965
        %2446 = vmatpush1.bf16.msra.mxu0 %v1964
        %2447 = vmatprep.subr.bf16.mxu0 %v1969
        %2448 = vmatpush1.bf16.msra.mxu0 %v1968
        %2449 = vmatprep.subr.bf16.mxu0 %v1973
        %2450 = vmatpush1.bf16.msra.mxu0 %v1972
        %2451 = vmatprep.subr.bf16.mxu0 %v1977
        %2452 = vmatpush1.bf16.msra.mxu0 %v1976
        %2453 = vmatprep.subr.bf16.mxu0 %v1981
        %2454 = vmatpush1.bf16.msra.mxu0 %v1980
        %2455 = vmatprep.subr.bf16.mxu0 %v1985
        %2456 = vmatpush1.bf16.msra.mxu0 %v1984
        %2457 = vmatprep.subr.bf16.mxu0 %v1989
        %2458 = vmatpush1.bf16.msra.mxu0 %v1988
        %2459 = vmatprep.subr.bf16.mxu0 %v1993
        %2460 = vmatpush1.bf16.msra.mxu0 %v1992
        %2461 = vmatprep.subr.bf16.mxu0 %v1997
        %2462 = vmatpush1.bf16.msra.mxu0 %v1996
        %2463 = vmatprep.subr.bf16.mxu0 %v2001
        %2464 = vmatpush1.bf16.msra.mxu0 %v2000
        %2465 = vmatprep.subr.bf16.mxu0 %v2005
        %2466 = vmatpush1.bf16.msra.mxu0 %v2004
        %2467 = vmatprep.subr.bf16.mxu0 %v2009
        %2468 = vmatpush1.bf16.msra.mxu0 %v2008
        %2469 = vmatprep.mubr.bf16.mxu0 %v1103
        %2470 = vmatmul.mubr.bf16.gmra.mrb[0].mxu0 %v1102
        %v2471 = vpop.f32.mrb[0].mxu0
        %v2472 = vadd.f32 %v2431, %v2471
        %v2473 = vpop.f32.mrb[0].mxu0
        %v2474 = vadd.f32 %v2433, %v2473
        %v2475 = vpop.f32.mrb[0].mxu0
        %v2476 = vpop.f32.mrb[0].mxu0
        %2477 = vdwg.mxu0
        %2478 = vmatprep.subr.bf16.mxu0 %v2013
        %2479 = vmatpush1.bf16.msra.mxu0 %v2012
        %2480 = vmatprep.subr.bf16.mxu0 %v2017
        %2481 = vmatpush1.bf16.msra.mxu0 %v2016
        %2482 = vmatprep.subr.bf16.mxu0 %v2021
        %2483 = vmatpush1.bf16.msra.mxu0 %v2020
        %2484 = vmatprep.subr.bf16.mxu0 %v2025
        %2485 = vmatpush1.bf16.msra.mxu0 %v2024
        %2486 = vmatprep.subr.bf16.mxu0 %v2029
        %2487 = vmatpush1.bf16.msra.mxu0 %v2028
        %2488 = vmatprep.subr.bf16.mxu0 %v2033
        %2489 = vmatpush1.bf16.msra.mxu0 %v2032
        %2490 = vmatprep.subr.bf16.mxu0 %v2037
        %2491 = vmatpush1.bf16.msra.mxu0 %v2036
        %2492 = vmatprep.subr.bf16.mxu0 %v2041
        %2493 = vmatpush1.bf16.msra.mxu0 %v2040
        %2494 = vmatprep.subr.bf16.mxu0 %v2045
        %2495 = vmatpush1.bf16.msra.mxu0 %v2044
        %2496 = vmatprep.subr.bf16.mxu0 %v2049
        %2497 = vmatpush1.bf16.msra.mxu0 %v2048
        %2498 = vmatprep.subr.bf16.mxu0 %v2053
        %2499 = vmatpush1.bf16.msra.mxu0 %v2052
        %2500 = vmatprep.subr.bf16.mxu0 %v2057
        %2501 = vmatpush1.bf16.msra.mxu0 %v2056
        %2502 = vmatprep.subr.bf16.mxu0 %v2061
        %2503 = vmatpush1.bf16.msra.mxu0 %v2060
        %2504 = vmatprep.subr.bf16.mxu0 %v2065
        %2505 = vmatpush1.bf16.msra.mxu0 %v2064
        %2506 = vmatprep.subr.bf16.mxu0 %v2069
        %2507 = vmatpush1.bf16.msra.mxu0 %v2068
        %2508 = vmatprep.subr.bf16.mxu0 %v2073
        %2509 = vmatpush1.bf16.msra.mxu0 %v2072
        %2510 = vmatprep.mubr.bf16.mxu0 %v1105
        %2511 = vmatmul.mubr.bf16.gmra.mrb[0].mxu0 %v1104
        %v2512 = vpop.f32.mrb[0].mxu0
        %v2513 = vadd.f32 %v2472, %v2512
        %v2514 = vpop.f32.mrb[0].mxu0
        %v2515 = vadd.f32 %v2474, %v2514
        %v2516 = vpop.f32.mrb[0].mxu0
        %v2517 = vpop.f32.mrb[0].mxu0
        %2518 = vdwg.mxu0
        %2519 = vmatprep.subr.bf16.mxu0 %v2077
        %2520 = vmatpush1.bf16.msra.mxu0 %v2076
        %2521 = vmatprep.subr.bf16.mxu0 %v2081
        %2522 = vmatpush1.bf16.msra.mxu0 %v2080
        %2523 = vmatprep.subr.bf16.mxu0 %v2085
        %2524 = vmatpush1.bf16.msra.mxu0 %v2084
        %2525 = vmatprep.subr.bf16.mxu0 %v2089
        %2526 = vmatpush1.bf16.msra.mxu0 %v2088
        %2527 = vmatprep.subr.bf16.mxu0 %v2093
        %2528 = vmatpush1.bf16.msra.mxu0 %v2092
        %2529 = vmatprep.subr.bf16.mxu0 %v2097
        %2530 = vmatpush1.bf16.msra.mxu0 %v2096
        %2531 = vmatprep.subr.bf16.mxu0 %v2101
        %2532 = vmatpush1.bf16.msra.mxu0 %v2100
        %2533 = vmatprep.subr.bf16.mxu0 %v2105
        %2534 = vmatpush1.bf16.msra.mxu0 %v2104
        %2535 = vmatprep.subr.bf16.mxu0 %v2109
        %2536 = vmatpush1.bf16.msra.mxu0 %v2108
        %2537 = vmatprep.subr.bf16.mxu0 %v2113
        %2538 = vmatpush1.bf16.msra.mxu0 %v2112
        %2539 = vmatprep.subr.bf16.mxu0 %v2117
        %2540 = vmatpush1.bf16.msra.mxu0 %v2116
        %2541 = vmatprep.subr.bf16.mxu0 %v2121
        %2542 = vmatpush1.bf16.msra.mxu0 %v2120
        %2543 = vmatprep.subr.bf16.mxu0 %v2125
        %2544 = vmatpush1.bf16.msra.mxu0 %v2124
        %2545 = vmatprep.subr.bf16.mxu0 %v2129
        %2546 = vmatpush1.bf16.msra.mxu0 %v2128
        %2547 = vmatprep.subr.bf16.mxu0 %v2133
        %2548 = vmatpush1.bf16.msra.mxu0 %v2132
        %2549 = vmatprep.subr.bf16.mxu0 %v2137
        %2550 = vmatpush1.bf16.msra.mxu0 %v2136
        %2551 = vmatprep.mubr.bf16.mxu0 %v1107
        %2552 = vmatmul.mubr.bf16.gmra.mrb[0].mxu0 %v1106
        %v2553 = vpop.f32.mrb[0].mxu0
        %v2554 = vadd.f32 %v2513, %v2553
        %v2555 = vpop.f32.mrb[0].mxu0
        %v2556 = vadd.f32 %v2515, %v2555
        %v2557 = vpop.f32.mrb[0].mxu0
        %v2558 = vpop.f32.mrb[0].mxu0
        %2559 = vdwg.mxu0
        %2560 = vmatprep.subr.bf16.mxu0 %v1887
        %2561 = vmatpush1.bf16.msra.mxu0 %v1886
        %2562 = vmatprep.subr.bf16.mxu0 %v1891
        %2563 = vmatpush1.bf16.msra.mxu0 %v1890
        %2564 = vmatprep.subr.bf16.mxu0 %v1895
        %2565 = vmatpush1.bf16.msra.mxu0 %v1894
        %2566 = vmatprep.subr.bf16.mxu0 %v1899
        %2567 = vmatpush1.bf16.msra.mxu0 %v1898
        %2568 = vmatprep.subr.bf16.mxu0 %v1903
        %2569 = vmatpush1.bf16.msra.mxu0 %v1902
        %2570 = vmatprep.subr.bf16.mxu0 %v1907
        %2571 = vmatpush1.bf16.msra.mxu0 %v1906
        %2572 = vmatprep.subr.bf16.mxu0 %v1911
        %2573 = vmatpush1.bf16.msra.mxu0 %v1910
        %2574 = vmatprep.subr.bf16.mxu0 %v1915
        %2575 = vmatpush1.bf16.msra.mxu0 %v1914
        %2576 = vmatprep.subr.bf16.mxu0 %v1919
        %2577 = vmatpush1.bf16.msra.mxu0 %v1918
        %2578 = vmatprep.subr.bf16.mxu0 %v1923
        %2579 = vmatpush1.bf16.msra.mxu0 %v1922
        %2580 = vmatprep.subr.bf16.mxu0 %v1927
        %2581 = vmatpush1.bf16.msra.mxu0 %v1926
        %2582 = vmatprep.subr.bf16.mxu0 %v1931
        %2583 = vmatpush1.bf16.msra.mxu0 %v1930
        %2584 = vmatprep.subr.bf16.mxu0 %v1935
        %2585 = vmatpush1.bf16.msra.mxu0 %v1934
        %2586 = vmatprep.subr.bf16.mxu0 %v1939
        %2587 = vmatpush1.bf16.msra.mxu0 %v1938
        %2588 = vmatprep.subr.bf16.mxu0 %v1943
        %2589 = vmatpush1.bf16.msra.mxu0 %v1942
        %2590 = vmatprep.subr.bf16.mxu0 %v1947
        %2591 = vmatpush1.bf16.msra.mxu0 %v1946
        %2592 = vmatprep.mubr.bf16.mxu0 %v1101
        %2593 = vmatmul.mubr.bf16.gmra.mrb[0].mxu0 %v1100
        %v2594 = vpop.f32.mrb[0].mxu0
        %v2595 = vadd.f32 %v1079, %v2594
        %v2596 = vpop.f32.mrb[0].mxu0
        %v2597 = vadd.f32 %v1083, %v2596
        %v2598 = vpop.f32.mrb[0].mxu0
        %v2599 = vpop.f32.mrb[0].mxu0
        %2600 = vdwg.mxu0
        %2601 = vmatprep.subr.bf16.mxu0 %v1951
        %2602 = vmatpush1.bf16.msra.mxu0 %v1950
        %2603 = vmatprep.subr.bf16.mxu0 %v1955
        %2604 = vmatpush1.bf16.msra.mxu0 %v1954
        %2605 = vmatprep.subr.bf16.mxu0 %v1959
        %2606 = vmatpush1.bf16.msra.mxu0 %v1958
        %2607 = vmatprep.subr.bf16.mxu0 %v1963
        %2608 = vmatpush1.bf16.msra.mxu0 %v1962
        %2609 = vmatprep.subr.bf16.mxu0 %v1967
        %2610 = vmatpush1.bf16.msra.mxu0 %v1966
        %2611 = vmatprep.subr.bf16.mxu0 %v1971
        %2612 = vmatpush1.bf16.msra.mxu0 %v1970
        %2613 = vmatprep.subr.bf16.mxu0 %v1975
        %2614 = vmatpush1.bf16.msra.mxu0 %v1974
        %2615 = vmatprep.subr.bf16.mxu0 %v1979
        %2616 = vmatpush1.bf16.msra.mxu0 %v1978
        %2617 = vmatprep.subr.bf16.mxu0 %v1983
        %2618 = vmatpush1.bf16.msra.mxu0 %v1982
        %2619 = vmatprep.subr.bf16.mxu0 %v1987
        %2620 = vmatpush1.bf16.msra.mxu0 %v1986
        %2621 = vmatprep.subr.bf16.mxu0 %v1991
        %2622 = vmatpush1.bf16.msra.mxu0 %v1990
        %2623 = vmatprep.subr.bf16.mxu0 %v1995
        %2624 = vmatpush1.bf16.msra.mxu0 %v1994
        %2625 = vmatprep.subr.bf16.mxu0 %v1999
        %2626 = vmatpush1.bf16.msra.mxu0 %v1998
        %2627 = vmatprep.subr.bf16.mxu0 %v2003
        %2628 = vmatpush1.bf16.msra.mxu0 %v2002
        %2629 = vmatprep.subr.bf16.mxu0 %v2007
        %2630 = vmatpush1.bf16.msra.mxu0 %v2006
        %2631 = vmatprep.subr.bf16.mxu0 %v2011
        %2632 = vmatpush1.bf16.msra.mxu0 %v2010
        %2633 = vmatprep.mubr.bf16.mxu0 %v1103
        %2634 = vmatmul.mubr.bf16.gmra.mrb[0].mxu0 %v1102
        %v2635 = vpop.f32.mrb[0].mxu0
        %v2636 = vadd.f32 %v2595, %v2635
        %v2637 = vpop.f32.mrb[0].mxu0
        %v2638 = vadd.f32 %v2597, %v2637
        %v2639 = vpop.f32.mrb[0].mxu0
        %v2640 = vpop.f32.mrb[0].mxu0
        %2641 = vdwg.mxu0
        %2642 = vmatprep.subr.bf16.mxu0 %v2015
        %2643 = vmatpush1.bf16.msra.mxu0 %v2014
        %2644 = vmatprep.subr.bf16.mxu0 %v2019
        %2645 = vmatpush1.bf16.msra.mxu0 %v2018
        %2646 = vmatprep.subr.bf16.mxu0 %v2023
        %2647 = vmatpush1.bf16.msra.mxu0 %v2022
        %2648 = vmatprep.subr.bf16.mxu0 %v2027
        %2649 = vmatpush1.bf16.msra.mxu0 %v2026
        %2650 = vmatprep.subr.bf16.mxu0 %v2031
        %2651 = vmatpush1.bf16.msra.mxu0 %v2030
        %2652 = vmatprep.subr.bf16.mxu0 %v2035
        %2653 = vmatpush1.bf16.msra.mxu0 %v2034
        %2654 = vmatprep.subr.bf16.mxu0 %v2039
        %2655 = vmatpush1.bf16.msra.mxu0 %v2038
        %2656 = vmatprep.subr.bf16.mxu0 %v2043
        %2657 = vmatpush1.bf16.msra.mxu0 %v2042
        %2658 = vmatprep.subr.bf16.mxu0 %v2047
        %2659 = vmatpush1.bf16.msra.mxu0 %v2046
        %2660 = vmatprep.subr.bf16.mxu0 %v2051
        %2661 = vmatpush1.bf16.msra.mxu0 %v2050
        %2662 = vmatprep.subr.bf16.mxu0 %v2055
        %2663 = vmatpush1.bf16.msra.mxu0 %v2054
        %2664 = vmatprep.subr.bf16.mxu0 %v2059
        %2665 = vmatpush1.bf16.msra.mxu0 %v2058
        %2666 = vmatprep.subr.bf16.mxu0 %v2063
        %2667 = vmatpush1.bf16.msra.mxu0 %v2062
        %2668 = vmatprep.subr.bf16.mxu0 %v2067
        %2669 = vmatpush1.bf16.msra.mxu0 %v2066
        %2670 = vmatprep.subr.bf16.mxu0 %v2071
        %2671 = vmatpush1.bf16.msra.mxu0 %v2070
        %2672 = vmatprep.subr.bf16.mxu0 %v2075
        %2673 = vmatpush1.bf16.msra.mxu0 %v2074
        %2674 = vmatprep.mubr.bf16.mxu0 %v1105
        %2675 = vmatmul.mubr.bf16.gmra.mrb[0].mxu0 %v1104
        %v2676 = vpop.f32.mrb[0].mxu0
        %v2677 = vadd.f32 %v2636, %v2676
        %v2678 = vpop.f32.mrb[0].mxu0
        %v2679 = vadd.f32 %v2638, %v2678
        %v2680 = vpop.f32.mrb[0].mxu0
        %v2681 = vpop.f32.mrb[0].mxu0
        %2682 = vdwg.mxu0
        %2683 = vmatprep.subr.bf16.mxu0 %v2079
        %2684 = vmatpush1.bf16.msra.mxu0 %v2078
        %2685 = vmatprep.subr.bf16.mxu0 %v2083
        %2686 = vmatpush1.bf16.msra.mxu0 %v2082
        %2687 = vmatprep.subr.bf16.mxu0 %v2087
        %2688 = vmatpush1.bf16.msra.mxu0 %v2086
        %2689 = vmatprep.subr.bf16.mxu0 %v2091
        %2690 = vmatpush1.bf16.msra.mxu0 %v2090
        %2691 = vmatprep.subr.bf16.mxu0 %v2095
        %2692 = vmatpush1.bf16.msra.mxu0 %v2094
        %2693 = vmatprep.subr.bf16.mxu0 %v2099
        %2694 = vmatpush1.bf16.msra.mxu0 %v2098
        %2695 = vmatprep.subr.bf16.mxu0 %v2103
        %2696 = vmatpush1.bf16.msra.mxu0 %v2102
        %2697 = vmatprep.subr.bf16.mxu0 %v2107
        %2698 = vmatpush1.bf16.msra.mxu0 %v2106
        %2699 = vmatprep.subr.bf16.mxu0 %v2111
        %2700 = vmatpush1.bf16.msra.mxu0 %v2110
        %2701 = vmatprep.subr.bf16.mxu0 %v2115
        %2702 = vmatpush1.bf16.msra.mxu0 %v2114
        %2703 = vmatprep.subr.bf16.mxu0 %v2119
        %2704 = vmatpush1.bf16.msra.mxu0 %v2118
        %2705 = vmatprep.subr.bf16.mxu0 %v2123
        %2706 = vmatpush1.bf16.msra.mxu0 %v2122
        %2707 = vmatprep.subr.bf16.mxu0 %v2127
        %2708 = vmatpush1.bf16.msra.mxu0 %v2126
        %2709 = vmatprep.subr.bf16.mxu0 %v2131
        %2710 = vmatpush1.bf16.msra.mxu0 %v2130
        %2711 = vmatprep.subr.bf16.mxu0 %v2135
        %2712 = vmatpush1.bf16.msra.mxu0 %v2134
        %2713 = vmatprep.subr.bf16.mxu0 %v2139
        %2714 = vmatpush1.bf16.msra.mxu0 %v2138
        %2715 = vmatprep.mubr.bf16.mxu0 %v1107
        %2716 = vmatmul.mubr.bf16.gmra.mrb[0].mxu0 %v1106
        %v2717 = vpop.f32.mrb[0].mxu0
        %v2718 = vadd.f32 %v2677, %v2717
        %v2719 = vpop.f32.mrb[0].mxu0
        %v2720 = vadd.f32 %v2679, %v2719
        %v2721 = vpop.f32.mrb[0].mxu0
        %v2722 = vpop.f32.mrb[0].mxu0
        %2723 = vdwg.mxu0
        %2724 = vst [vmem:[%s754] sm:$0xff] %v2554
        %2725 = vst [vmem:[%s754 + $0x8] sm:$0xff] %v2556
        %2726 = vst [vmem:[%s754 + $0x10] sm:$0xff] %v2718
        %2727 = vst [vmem:[%s754 + $0x18] sm:$0xff] %v2720
        %v2728 = vpack.c.bf16 %v2554, %v2554
        %v2729 = vpack.c.bf16 %v2556, %v2556
        %v2730 = vpack.c.bf16 %v2718, %v2718
        %v2731 = vpack.c.bf16 %v2720, %v2720
        %v2732 = vld [vmem:[#allocation3] sm:$0xff]
        %v2733 = vld [vmem:[#allocation3 + $0x8] sm:$0xff]
        %v2734 = vld [vmem:[#allocation3 + $0x10] sm:$0xff]
        %v2735 = vld [vmem:[#allocation3 + $0x18] sm:$0xff]
        %v2736 = vld [vmem:[#allocation3 + $0x20] sm:$0xff]
        %v2737 = vld [vmem:[#allocation3 + $0x28] sm:$0xff]
        %v2738 = vld [vmem:[#allocation3 + $0x30] sm:$0xff]
        %v2739 = vld [vmem:[#allocation3 + $0x38] sm:$0xff]
        %v2740 = vld [vmem:[#allocation3 + $0x40] sm:$0xff]
        %v2741 = vld [vmem:[#allocation3 + $0x48] sm:$0xff]
        %v2742 = vld [vmem:[#allocation3 + $0x50] sm:$0xff]
        %v2743 = vld [vmem:[#allocation3 + $0x58] sm:$0xff]
        %v2744 = vld [vmem:[#allocation3 + $0x60] sm:$0xff]
        %v2745 = vld [vmem:[#allocation3 + $0x68] sm:$0xff]
        %v2746 = vld [vmem:[#allocation3 + $0x70] sm:$0xff]
        %v2747 = vld [vmem:[#allocation3 + $0x78] sm:$0xff]
        %v2748 = vld [vmem:[#allocation3 + $0x80] sm:$0xff]
        %v2749 = vld [vmem:[#allocation3 + $0x88] sm:$0xff]
        %v2750 = vld [vmem:[#allocation3 + $0x90] sm:$0xff]
        %v2751 = vld [vmem:[#allocation3 + $0x98] sm:$0xff]
        %v2752 = vld [vmem:[#allocation3 + $0xa0] sm:$0xff]
        %v2753 = vld [vmem:[#allocation3 + $0xa8] sm:$0xff]
        %v2754 = vld [vmem:[#allocation3 + $0xb0] sm:$0xff]
        %v2755 = vld [vmem:[#allocation3 + $0xb8] sm:$0xff]
        %v2756 = vld [vmem:[#allocation3 + $0xc0] sm:$0xff]
        %v2757 = vld [vmem:[#allocation3 + $0xc8] sm:$0xff]
        %v2758 = vld [vmem:[#allocation3 + $0xd0] sm:$0xff]
        %v2759 = vld [vmem:[#allocation3 + $0xd8] sm:$0xff]
        %v2760 = vld [vmem:[#allocation3 + $0xe0] sm:$0xff]
        %v2761 = vld [vmem:[#allocation3 + $0xe8] sm:$0xff]
        %v2762 = vld [vmem:[#allocation3 + $0xf0] sm:$0xff]
        %v2763 = vld [vmem:[#allocation3 + $0xf8] sm:$0xff]
        %v2764 = vld [vmem:[#allocation3 + $0x100] sm:$0xff]
        %v2765 = vld [vmem:[#allocation3 + $0x108] sm:$0xff]
        %v2766 = vld [vmem:[#allocation3 + $0x110] sm:$0xff]
        %v2767 = vld [vmem:[#allocation3 + $0x118] sm:$0xff]
        %v2768 = vld [vmem:[#allocation3 + $0x120] sm:$0xff]
        %v2769 = vld [vmem:[#allocation3 + $0x128] sm:$0xff]
        %v2770 = vld [vmem:[#allocation3 + $0x130] sm:$0xff]
        %v2771 = vld [vmem:[#allocation3 + $0x138] sm:$0xff]
        %v2772 = vld [vmem:[#allocation3 + $0x140] sm:$0xff]
        %v2773 = vld [vmem:[#allocation3 + $0x148] sm:$0xff]
        %v2774 = vld [vmem:[#allocation3 + $0x150] sm:$0xff]
        %v2775 = vld [vmem:[#allocation3 + $0x158] sm:$0xff]
        %v2776 = vld [vmem:[#allocation3 + $0x160] sm:$0xff]
        %v2777 = vld [vmem:[#allocation3 + $0x168] sm:$0xff]
        %v2778 = vld [vmem:[#allocation3 + $0x170] sm:$0xff]
        %v2779 = vld [vmem:[#allocation3 + $0x178] sm:$0xff]
        %v2780 = vld [vmem:[#allocation3 + $0x180] sm:$0xff]
        %v2781 = vld [vmem:[#allocation3 + $0x188] sm:$0xff]
        %v2782 = vld [vmem:[#allocation3 + $0x190] sm:$0xff]
        %v2783 = vld [vmem:[#allocation3 + $0x198] sm:$0xff]
        %v2784 = vld [vmem:[#allocation3 + $0x1a0] sm:$0xff]
        %v2785 = vld [vmem:[#allocation3 + $0x1a8] sm:$0xff]
        %v2786 = vld [vmem:[#allocation3 + $0x1b0] sm:$0xff]
        %v2787 = vld [vmem:[#allocation3 + $0x1b8] sm:$0xff]
        %v2788 = vld [vmem:[#allocation3 + $0x1c0] sm:$0xff]
        %v2789 = vld [vmem:[#allocation3 + $0x1c8] sm:$0xff]
        %v2790 = vld [vmem:[#allocation3 + $0x1d0] sm:$0xff]
        %v2791 = vld [vmem:[#allocation3 + $0x1d8] sm:$0xff]
        %v2792 = vld [vmem:[#allocation3 + $0x1e0] sm:$0xff]
        %v2793 = vld [vmem:[#allocation3 + $0x1e8] sm:$0xff]
        %v2794 = vld [vmem:[#allocation3 + $0x1f0] sm:$0xff]
        %v2795 = vld [vmem:[#allocation3 + $0x1f8] sm:$0xff]
        %v2796 = vld [vmem:[#allocation3 + $0x200] sm:$0xff]
        %v2797 = vld [vmem:[#allocation3 + $0x208] sm:$0xff]
        %v2798 = vld [vmem:[#allocation3 + $0x210] sm:$0xff]
        %v2799 = vld [vmem:[#allocation3 + $0x218] sm:$0xff]
        %v2800 = vld [vmem:[#allocation3 + $0x220] sm:$0xff]
        %v2801 = vld [vmem:[#allocation3 + $0x228] sm:$0xff]
        %v2802 = vld [vmem:[#allocation3 + $0x230] sm:$0xff]
        %v2803 = vld [vmem:[#allocation3 + $0x238] sm:$0xff]
        %v2804 = vld [vmem:[#allocation3 + $0x240] sm:$0xff]
        %v2805 = vld [vmem:[#allocation3 + $0x248] sm:$0xff]
        %v2806 = vld [vmem:[#allocation3 + $0x250] sm:$0xff]
        %v2807 = vld [vmem:[#allocation3 + $0x258] sm:$0xff]
        %v2808 = vld [vmem:[#allocation3 + $0x260] sm:$0xff]
        %v2809 = vld [vmem:[#allocation3 + $0x268] sm:$0xff]
        %v2810 = vld [vmem:[#allocation3 + $0x270] sm:$0xff]
        %v2811 = vld [vmem:[#allocation3 + $0x278] sm:$0xff]
        %v2812 = vld [vmem:[#allocation3 + $0x280] sm:$0xff]
        %v2813 = vld [vmem:[#allocation3 + $0x288] sm:$0xff]
        %v2814 = vld [vmem:[#allocation3 + $0x290] sm:$0xff]
        %v2815 = vld [vmem:[#allocation3 + $0x298] sm:$0xff]
        %v2816 = vld [vmem:[#allocation3 + $0x2a0] sm:$0xff]
        %v2817 = vld [vmem:[#allocation3 + $0x2a8] sm:$0xff]
        %v2818 = vld [vmem:[#allocation3 + $0x2b0] sm:$0xff]
        %v2819 = vld [vmem:[#allocation3 + $0x2b8] sm:$0xff]
        %v2820 = vld [vmem:[#allocation3 + $0x2c0] sm:$0xff]
        %v2821 = vld [vmem:[#allocation3 + $0x2c8] sm:$0xff]
        %v2822 = vld [vmem:[#allocation3 + $0x2d0] sm:$0xff]
        %v2823 = vld [vmem:[#allocation3 + $0x2d8] sm:$0xff]
        %v2824 = vld [vmem:[#allocation3 + $0x2e0] sm:$0xff]
        %v2825 = vld [vmem:[#allocation3 + $0x2e8] sm:$0xff]
        %v2826 = vld [vmem:[#allocation3 + $0x2f0] sm:$0xff]
        %v2827 = vld [vmem:[#allocation3 + $0x2f8] sm:$0xff]
        %v2828 = vld [vmem:[#allocation3 + $0x300] sm:$0xff]
        %v2829 = vld [vmem:[#allocation3 + $0x308] sm:$0xff]
        %v2830 = vld [vmem:[#allocation3 + $0x310] sm:$0xff]
        %v2831 = vld [vmem:[#allocation3 + $0x318] sm:$0xff]
        %v2832 = vld [vmem:[#allocation3 + $0x320] sm:$0xff]
        %v2833 = vld [vmem:[#allocation3 + $0x328] sm:$0xff]
        %v2834 = vld [vmem:[#allocation3 + $0x330] sm:$0xff]
        %v2835 = vld [vmem:[#allocation3 + $0x338] sm:$0xff]
        %v2836 = vld [vmem:[#allocation3 + $0x340] sm:$0xff]
        %v2837 = vld [vmem:[#allocation3 + $0x348] sm:$0xff]
        %v2838 = vld [vmem:[#allocation3 + $0x350] sm:$0xff]
        %v2839 = vld [vmem:[#allocation3 + $0x358] sm:$0xff]
        %v2840 = vld [vmem:[#allocation3 + $0x360] sm:$0xff]
        %v2841 = vld [vmem:[#allocation3 + $0x368] sm:$0xff]
        %v2842 = vld [vmem:[#allocation3 + $0x370] sm:$0xff]
        %v2843 = vld [vmem:[#allocation3 + $0x378] sm:$0xff]
        %v2844 = vld [vmem:[#allocation3 + $0x380] sm:$0xff]
        %v2845 = vld [vmem:[#allocation3 + $0x388] sm:$0xff]
        %v2846 = vld [vmem:[#allocation3 + $0x390] sm:$0xff]
        %v2847 = vld [vmem:[#allocation3 + $0x398] sm:$0xff]
        %v2848 = vld [vmem:[#allocation3 + $0x3a0] sm:$0xff]
        %v2849 = vld [vmem:[#allocation3 + $0x3a8] sm:$0xff]
        %v2850 = vld [vmem:[#allocation3 + $0x3b0] sm:$0xff]
        %v2851 = vld [vmem:[#allocation3 + $0x3b8] sm:$0xff]
        %v2852 = vld [vmem:[#allocation3 + $0x3c0] sm:$0xff]
        %v2853 = vld [vmem:[#allocation3 + $0x3c8] sm:$0xff]
        %v2854 = vld [vmem:[#allocation3 + $0x3d0] sm:$0xff]
        %v2855 = vld [vmem:[#allocation3 + $0x3d8] sm:$0xff]
        %v2856 = vld [vmem:[#allocation3 + $0x3e0] sm:$0xff]
        %v2857 = vld [vmem:[#allocation3 + $0x3e8] sm:$0xff]
        %v2858 = vld [vmem:[#allocation3 + $0x3f0] sm:$0xff]
        %v2859 = vld [vmem:[#allocation3 + $0x3f8] sm:$0xff]
        %v2860 = vld [vmem:[%s4] sm:$0xf]
        %v2862 = vlaneseq
        %v2863 = vshrl.u32 %v2862, 7
        %v2864 = vsub.s32 0, %v2863
        %v2865 = vrot.slane %v2860, %v2864
        %v2866 = vlaneseq
        %v2867 = vshrl.u32 %v2866, 7
        %v2868 = vsub.s32 1, %v2867
        %v2869 = vrot.slane %v2860, %v2868
        %v2870 = vlaneseq
        %v2871 = vshrl.u32 %v2870, 7
        %v2872 = vsub.s32 2, %v2871
        %v2873 = vrot.slane %v2860, %v2872
        %v2874 = vlaneseq
        %v2875 = vshrl.u32 %v2874, 7
        %v2876 = vsub.s32 3, %v2875
        %v2877 = vrot.slane %v2860, %v2876
        %v3010 = vunpack.c.l.b16 %v2732
        %v3011 = vunpack.c.h.b16 %v2732
        %v3012 = vunpack.c.l.b16 %v2733
        %v3013 = vunpack.c.h.b16 %v2733
        %v3014 = vunpack.c.l.b16 %v2734
        %v3015 = vunpack.c.h.b16 %v2734
        %v3016 = vunpack.c.l.b16 %v2735
        %v3017 = vunpack.c.h.b16 %v2735
        %v3018 = vunpack.c.l.b16 %v2736
        %v3019 = vunpack.c.h.b16 %v2736
        %v3020 = vunpack.c.l.b16 %v2737
        %v3021 = vunpack.c.h.b16 %v2737
        %v3022 = vunpack.c.l.b16 %v2738
        %v3023 = vunpack.c.h.b16 %v2738
        %v3024 = vunpack.c.l.b16 %v2739
        %v3025 = vunpack.c.h.b16 %v2739
        %v3026 = vunpack.c.l.b16 %v2740
        %v3027 = vunpack.c.h.b16 %v2740
        %v3028 = vunpack.c.l.b16 %v2741
        %v3029 = vunpack.c.h.b16 %v2741
        %v3030 = vunpack.c.l.b16 %v2742
        %v3031 = vunpack.c.h.b16 %v2742
        %v3032 = vunpack.c.l.b16 %v2743
        %v3033 = vunpack.c.h.b16 %v2743
        %v3034 = vunpack.c.l.b16 %v2744
        %v3035 = vunpack.c.h.b16 %v2744
        %v3036 = vunpack.c.l.b16 %v2745
        %v3037 = vunpack.c.h.b16 %v2745
        %v3038 = vunpack.c.l.b16 %v2746
        %v3039 = vunpack.c.h.b16 %v2746
        %v3040 = vunpack.c.l.b16 %v2747
        %v3041 = vunpack.c.h.b16 %v2747
        %v3042 = vunpack.c.l.b16 %v2748
        %v3043 = vunpack.c.h.b16 %v2748
        %v3044 = vunpack.c.l.b16 %v2749
        %v3045 = vunpack.c.h.b16 %v2749
        %v3046 = vunpack.c.l.b16 %v2750
        %v3047 = vunpack.c.h.b16 %v2750
        %v3048 = vunpack.c.l.b16 %v2751
        %v3049 = vunpack.c.h.b16 %v2751
        %v3050 = vunpack.c.l.b16 %v2752
        %v3051 = vunpack.c.h.b16 %v2752
        %v3052 = vunpack.c.l.b16 %v2753
        %v3053 = vunpack.c.h.b16 %v2753
        %v3054 = vunpack.c.l.b16 %v2754
        %v3055 = vunpack.c.h.b16 %v2754
        %v3056 = vunpack.c.l.b16 %v2755
        %v3057 = vunpack.c.h.b16 %v2755
        %v3058 = vunpack.c.l.b16 %v2756
        %v3059 = vunpack.c.h.b16 %v2756
        %v3060 = vunpack.c.l.b16 %v2757
        %v3061 = vunpack.c.h.b16 %v2757
        %v3062 = vunpack.c.l.b16 %v2758
        %v3063 = vunpack.c.h.b16 %v2758
        %v3064 = vunpack.c.l.b16 %v2759
        %v3065 = vunpack.c.h.b16 %v2759
        %v3066 = vunpack.c.l.b16 %v2760
        %v3067 = vunpack.c.h.b16 %v2760
        %v3068 = vunpack.c.l.b16 %v2761
        %v3069 = vunpack.c.h.b16 %v2761
        %v3070 = vunpack.c.l.b16 %v2762
        %v3071 = vunpack.c.h.b16 %v2762
        %v3072 = vunpack.c.l.b16 %v2763
        %v3073 = vunpack.c.h.b16 %v2763
        %v3074 = vunpack.c.l.b16 %v2764
        %v3075 = vunpack.c.h.b16 %v2764
        %v3076 = vunpack.c.l.b16 %v2765
        %v3077 = vunpack.c.h.b16 %v2765
        %v3078 = vunpack.c.l.b16 %v2766
        %v3079 = vunpack.c.h.b16 %v2766
        %v3080 = vunpack.c.l.b16 %v2767
        %v3081 = vunpack.c.h.b16 %v2767
        %v3082 = vunpack.c.l.b16 %v2768
        %v3083 = vunpack.c.h.b16 %v2768
        %v3084 = vunpack.c.l.b16 %v2769
        %v3085 = vunpack.c.h.b16 %v2769
        %v3086 = vunpack.c.l.b16 %v2770
        %v3087 = vunpack.c.h.b16 %v2770
        %v3088 = vunpack.c.l.b16 %v2771
        %v3089 = vunpack.c.h.b16 %v2771
        %v3090 = vunpack.c.l.b16 %v2772
        %v3091 = vunpack.c.h.b16 %v2772
        %v3092 = vunpack.c.l.b16 %v2773
        %v3093 = vunpack.c.h.b16 %v2773
        %v3094 = vunpack.c.l.b16 %v2774
        %v3095 = vunpack.c.h.b16 %v2774
        %v3096 = vunpack.c.l.b16 %v2775
        %v3097 = vunpack.c.h.b16 %v2775
        %v3098 = vunpack.c.l.b16 %v2776
        %v3099 = vunpack.c.h.b16 %v2776
        %v3100 = vunpack.c.l.b16 %v2777
        %v3101 = vunpack.c.h.b16 %v2777
        %v3102 = vunpack.c.l.b16 %v2778
        %v3103 = vunpack.c.h.b16 %v2778
        %v3104 = vunpack.c.l.b16 %v2779
        %v3105 = vunpack.c.h.b16 %v2779
        %v3106 = vunpack.c.l.b16 %v2780
        %v3107 = vunpack.c.h.b16 %v2780
        %v3108 = vunpack.c.l.b16 %v2781
        %v3109 = vunpack.c.h.b16 %v2781
        %v3110 = vunpack.c.l.b16 %v2782
        %v3111 = vunpack.c.h.b16 %v2782
        %v3112 = vunpack.c.l.b16 %v2783
        %v3113 = vunpack.c.h.b16 %v2783
        %v3114 = vunpack.c.l.b16 %v2784
        %v3115 = vunpack.c.h.b16 %v2784
        %v3116 = vunpack.c.l.b16 %v2785
        %v3117 = vunpack.c.h.b16 %v2785
        %v3118 = vunpack.c.l.b16 %v2786
        %v3119 = vunpack.c.h.b16 %v2786
        %v3120 = vunpack.c.l.b16 %v2787
        %v3121 = vunpack.c.h.b16 %v2787
        %v3122 = vunpack.c.l.b16 %v2788
        %v3123 = vunpack.c.h.b16 %v2788
        %v3124 = vunpack.c.l.b16 %v2789
        %v3125 = vunpack.c.h.b16 %v2789
        %v3126 = vunpack.c.l.b16 %v2790
        %v3127 = vunpack.c.h.b16 %v2790
        %v3128 = vunpack.c.l.b16 %v2791
        %v3129 = vunpack.c.h.b16 %v2791
        %v3130 = vunpack.c.l.b16 %v2792
        %v3131 = vunpack.c.h.b16 %v2792
        %v3132 = vunpack.c.l.b16 %v2793
        %v3133 = vunpack.c.h.b16 %v2793
        %v3134 = vunpack.c.l.b16 %v2794
        %v3135 = vunpack.c.h.b16 %v2794
        %v3136 = vunpack.c.l.b16 %v2795
        %v3137 = vunpack.c.h.b16 %v2795
        %v3138 = vunpack.c.l.b16 %v2796
        %v3139 = vunpack.c.h.b16 %v2796
        %v3140 = vunpack.c.l.b16 %v2797
        %v3141 = vunpack.c.h.b16 %v2797
        %v3142 = vunpack.c.l.b16 %v2798
        %v3143 = vunpack.c.h.b16 %v2798
        %v3144 = vunpack.c.l.b16 %v2799
        %v3145 = vunpack.c.h.b16 %v2799
        %v3146 = vunpack.c.l.b16 %v2800
        %v3147 = vunpack.c.h.b16 %v2800
        %v3148 = vunpack.c.l.b16 %v2801
        %v3149 = vunpack.c.h.b16 %v2801
        %v3150 = vunpack.c.l.b16 %v2802
        %v3151 = vunpack.c.h.b16 %v2802
        %v3152 = vunpack.c.l.b16 %v2803
        %v3153 = vunpack.c.h.b16 %v2803
        %v3154 = vunpack.c.l.b16 %v2804
        %v3155 = vunpack.c.h.b16 %v2804
        %v3156 = vunpack.c.l.b16 %v2805
        %v3157 = vunpack.c.h.b16 %v2805
        %v3158 = vunpack.c.l.b16 %v2806
        %v3159 = vunpack.c.h.b16 %v2806
        %v3160 = vunpack.c.l.b16 %v2807
        %v3161 = vunpack.c.h.b16 %v2807
        %v3162 = vunpack.c.l.b16 %v2808
        %v3163 = vunpack.c.h.b16 %v2808
        %v3164 = vunpack.c.l.b16 %v2809
        %v3165 = vunpack.c.h.b16 %v2809
        %v3166 = vunpack.c.l.b16 %v2810
        %v3167 = vunpack.c.h.b16 %v2810
        %v3168 = vunpack.c.l.b16 %v2811
        %v3169 = vunpack.c.h.b16 %v2811
        %v3170 = vunpack.c.l.b16 %v2812
        %v3171 = vunpack.c.h.b16 %v2812
        %v3172 = vunpack.c.l.b16 %v2813
        %v3173 = vunpack.c.h.b16 %v2813
        %v3174 = vunpack.c.l.b16 %v2814
        %v3175 = vunpack.c.h.b16 %v2814
        %v3176 = vunpack.c.l.b16 %v2815
        %v3177 = vunpack.c.h.b16 %v2815
        %v3178 = vunpack.c.l.b16 %v2816
        %v3179 = vunpack.c.h.b16 %v2816
        %v3180 = vunpack.c.l.b16 %v2817
        %v3181 = vunpack.c.h.b16 %v2817
        %v3182 = vunpack.c.l.b16 %v2818
        %v3183 = vunpack.c.h.b16 %v2818
        %v3184 = vunpack.c.l.b16 %v2819
        %v3185 = vunpack.c.h.b16 %v2819
        %v3186 = vunpack.c.l.b16 %v2820
        %v3187 = vunpack.c.h.b16 %v2820
        %v3188 = vunpack.c.l.b16 %v2821
        %v3189 = vunpack.c.h.b16 %v2821
        %v3190 = vunpack.c.l.b16 %v2822
        %v3191 = vunpack.c.h.b16 %v2822
        %v3192 = vunpack.c.l.b16 %v2823
        %v3193 = vunpack.c.h.b16 %v2823
        %v3194 = vunpack.c.l.b16 %v2824
        %v3195 = vunpack.c.h.b16 %v2824
        %v3196 = vunpack.c.l.b16 %v2825
        %v3197 = vunpack.c.h.b16 %v2825
        %v3198 = vunpack.c.l.b16 %v2826
        %v3199 = vunpack.c.h.b16 %v2826
        %v3200 = vunpack.c.l.b16 %v2827
        %v3201 = vunpack.c.h.b16 %v2827
        %v3202 = vunpack.c.l.b16 %v2828
        %v3203 = vunpack.c.h.b16 %v2828
        %v3204 = vunpack.c.l.b16 %v2829
        %v3205 = vunpack.c.h.b16 %v2829
        %v3206 = vunpack.c.l.b16 %v2830
        %v3207 = vunpack.c.h.b16 %v2830
        %v3208 = vunpack.c.l.b16 %v2831
        %v3209 = vunpack.c.h.b16 %v2831
        %v3210 = vunpack.c.l.b16 %v2832
        %v3211 = vunpack.c.h.b16 %v2832
        %v3212 = vunpack.c.l.b16 %v2833
        %v3213 = vunpack.c.h.b16 %v2833
        %v3214 = vunpack.c.l.b16 %v2834
        %v3215 = vunpack.c.h.b16 %v2834
        %v3216 = vunpack.c.l.b16 %v2835
        %v3217 = vunpack.c.h.b16 %v2835
        %v3218 = vunpack.c.l.b16 %v2836
        %v3219 = vunpack.c.h.b16 %v2836
        %v3220 = vunpack.c.l.b16 %v2837
        %v3221 = vunpack.c.h.b16 %v2837
        %v3222 = vunpack.c.l.b16 %v2838
        %v3223 = vunpack.c.h.b16 %v2838
        %v3224 = vunpack.c.l.b16 %v2839
        %v3225 = vunpack.c.h.b16 %v2839
        %v3226 = vunpack.c.l.b16 %v2840
        %v3227 = vunpack.c.h.b16 %v2840
        %v3228 = vunpack.c.l.b16 %v2841
        %v3229 = vunpack.c.h.b16 %v2841
        %v3230 = vunpack.c.l.b16 %v2842
        %v3231 = vunpack.c.h.b16 %v2842
        %v3232 = vunpack.c.l.b16 %v2843
        %v3233 = vunpack.c.h.b16 %v2843
        %v3234 = vunpack.c.l.b16 %v2844
        %v3235 = vunpack.c.h.b16 %v2844
        %v3236 = vunpack.c.l.b16 %v2845
        %v3237 = vunpack.c.h.b16 %v2845
        %v3238 = vunpack.c.l.b16 %v2846
        %v3239 = vunpack.c.h.b16 %v2846
        %v3240 = vunpack.c.l.b16 %v2847
        %v3241 = vunpack.c.h.b16 %v2847
        %v3242 = vunpack.c.l.b16 %v2848
        %v3243 = vunpack.c.h.b16 %v2848
        %v3244 = vunpack.c.l.b16 %v2849
        %v3245 = vunpack.c.h.b16 %v2849
        %v3246 = vunpack.c.l.b16 %v2850
        %v3247 = vunpack.c.h.b16 %v2850
        %v3248 = vunpack.c.l.b16 %v2851
        %v3249 = vunpack.c.h.b16 %v2851
        %v3250 = vunpack.c.l.b16 %v2852
        %v3251 = vunpack.c.h.b16 %v2852
        %v3252 = vunpack.c.l.b16 %v2853
        %v3253 = vunpack.c.h.b16 %v2853
        %v3254 = vunpack.c.l.b16 %v2854
        %v3255 = vunpack.c.h.b16 %v2854
        %v3256 = vunpack.c.l.b16 %v2855
        %v3257 = vunpack.c.h.b16 %v2855
        %v3258 = vunpack.c.l.b16 %v2856
        %v3259 = vunpack.c.h.b16 %v2856
        %v3260 = vunpack.c.l.b16 %v2857
        %v3261 = vunpack.c.h.b16 %v2857
        %v3262 = vunpack.c.l.b16 %v2858
        %v3263 = vunpack.c.h.b16 %v2858
        %v3264 = vunpack.c.l.b16 %v2859
        %v3265 = vunpack.c.h.b16 %v2859
        %v3266 = vpack.c.b16 %v3014, %v3010
        %v3267 = vpack.c.b16 %v3015, %v3011
        %v3268 = vpack.c.b16 %v3016, %v3012
        %v3269 = vpack.c.b16 %v3017, %v3013
        %v3270 = vpack.c.b16 %v3022, %v3018
        %v3271 = vpack.c.b16 %v3023, %v3019
        %v3272 = vpack.c.b16 %v3024, %v3020
        %v3273 = vpack.c.b16 %v3025, %v3021
        %v3274 = vpack.c.b16 %v3030, %v3026
        %v3275 = vpack.c.b16 %v3031, %v3027
        %v3276 = vpack.c.b16 %v3032, %v3028
        %v3277 = vpack.c.b16 %v3033, %v3029
        %v3278 = vpack.c.b16 %v3038, %v3034
        %v3279 = vpack.c.b16 %v3039, %v3035
        %v3280 = vpack.c.b16 %v3040, %v3036
        %v3281 = vpack.c.b16 %v3041, %v3037
        %v3282 = vpack.c.b16 %v3046, %v3042
        %v3283 = vpack.c.b16 %v3047, %v3043
        %v3284 = vpack.c.b16 %v3048, %v3044
        %v3285 = vpack.c.b16 %v3049, %v3045
        %v3286 = vpack.c.b16 %v3054, %v3050
        %v3287 = vpack.c.b16 %v3055, %v3051
        %v3288 = vpack.c.b16 %v3056, %v3052
        %v3289 = vpack.c.b16 %v3057, %v3053
        %v3290 = vpack.c.b16 %v3062, %v3058
        %v3291 = vpack.c.b16 %v3063, %v3059
        %v3292 = vpack.c.b16 %v3064, %v3060
        %v3293 = vpack.c.b16 %v3065, %v3061
        %v3294 = vpack.c.b16 %v3070, %v3066
        %v3295 = vpack.c.b16 %v3071, %v3067
        %v3296 = vpack.c.b16 %v3072, %v3068
        %v3297 = vpack.c.b16 %v3073, %v3069
        %v3298 = vpack.c.b16 %v3078, %v3074
        %v3299 = vpack.c.b16 %v3079, %v3075
        %v3300 = vpack.c.b16 %v3080, %v3076
        %v3301 = vpack.c.b16 %v3081, %v3077
        %v3302 = vpack.c.b16 %v3086, %v3082
        %v3303 = vpack.c.b16 %v3087, %v3083
        %v3304 = vpack.c.b16 %v3088, %v3084
        %v3305 = vpack.c.b16 %v3089, %v3085
        %v3306 = vpack.c.b16 %v3094, %v3090
        %v3307 = vpack.c.b16 %v3095, %v3091
        %v3308 = vpack.c.b16 %v3096, %v3092
        %v3309 = vpack.c.b16 %v3097, %v3093
        %v3310 = vpack.c.b16 %v3102, %v3098
        %v3311 = vpack.c.b16 %v3103, %v3099
        %v3312 = vpack.c.b16 %v3104, %v3100
        %v3313 = vpack.c.b16 %v3105, %v3101
        %v3314 = vpack.c.b16 %v3110, %v3106
        %v3315 = vpack.c.b16 %v3111, %v3107
        %v3316 = vpack.c.b16 %v3112, %v3108
        %v3317 = vpack.c.b16 %v3113, %v3109
        %v3318 = vpack.c.b16 %v3118, %v3114
        %v3319 = vpack.c.b16 %v3119, %v3115
        %v3320 = vpack.c.b16 %v3120, %v3116
        %v3321 = vpack.c.b16 %v3121, %v3117
        %v3322 = vpack.c.b16 %v3126, %v3122
        %v3323 = vpack.c.b16 %v3127, %v3123
        %v3324 = vpack.c.b16 %v3128, %v3124
        %v3325 = vpack.c.b16 %v3129, %v3125
        %v3326 = vpack.c.b16 %v3134, %v3130
        %v3327 = vpack.c.b16 %v3135, %v3131
        %v3328 = vpack.c.b16 %v3136, %v3132
        %v3329 = vpack.c.b16 %v3137, %v3133
        %v3330 = vpack.c.b16 %v3142, %v3138
        %v3331 = vpack.c.b16 %v3143, %v3139
        %v3332 = vpack.c.b16 %v3144, %v3140
        %v3333 = vpack.c.b16 %v3145, %v3141
        %v3334 = vpack.c.b16 %v3150, %v3146
        %v3335 = vpack.c.b16 %v3151, %v3147
        %v3336 = vpack.c.b16 %v3152, %v3148
        %v3337 = vpack.c.b16 %v3153, %v3149
        %v3338 = vpack.c.b16 %v3158, %v3154
        %v3339 = vpack.c.b16 %v3159, %v3155
        %v3340 = vpack.c.b16 %v3160, %v3156
        %v3341 = vpack.c.b16 %v3161, %v3157
        %v3342 = vpack.c.b16 %v3166, %v3162
        %v3343 = vpack.c.b16 %v3167, %v3163
        %v3344 = vpack.c.b16 %v3168, %v3164
        %v3345 = vpack.c.b16 %v3169, %v3165
        %v3346 = vpack.c.b16 %v3174, %v3170
        %v3347 = vpack.c.b16 %v3175, %v3171
        %v3348 = vpack.c.b16 %v3176, %v3172
        %v3349 = vpack.c.b16 %v3177, %v3173
        %v3350 = vpack.c.b16 %v3182, %v3178
        %v3351 = vpack.c.b16 %v3183, %v3179
        %v3352 = vpack.c.b16 %v3184, %v3180
        %v3353 = vpack.c.b16 %v3185, %v3181
        %v3354 = vpack.c.b16 %v3190, %v3186
        %v3355 = vpack.c.b16 %v3191, %v3187
        %v3356 = vpack.c.b16 %v3192, %v3188
        %v3357 = vpack.c.b16 %v3193, %v3189
        %v3358 = vpack.c.b16 %v3198, %v3194
        %v3359 = vpack.c.b16 %v3199, %v3195
        %v3360 = vpack.c.b16 %v3200, %v3196
        %v3361 = vpack.c.b16 %v3201, %v3197
        %v3362 = vpack.c.b16 %v3206, %v3202
        %v3363 = vpack.c.b16 %v3207, %v3203
        %v3364 = vpack.c.b16 %v3208, %v3204
        %v3365 = vpack.c.b16 %v3209, %v3205
        %v3366 = vpack.c.b16 %v3214, %v3210
        %v3367 = vpack.c.b16 %v3215, %v3211
        %v3368 = vpack.c.b16 %v3216, %v3212
        %v3369 = vpack.c.b16 %v3217, %v3213
        %v3370 = vpack.c.b16 %v3222, %v3218
        %v3371 = vpack.c.b16 %v3223, %v3219
        %v3372 = vpack.c.b16 %v3224, %v3220
        %v3373 = vpack.c.b16 %v3225, %v3221
        %v3374 = vpack.c.b16 %v3230, %v3226
        %v3375 = vpack.c.b16 %v3231, %v3227
        %v3376 = vpack.c.b16 %v3232, %v3228
        %v3377 = vpack.c.b16 %v3233, %v3229
        %v3378 = vpack.c.b16 %v3238, %v3234
        %v3379 = vpack.c.b16 %v3239, %v3235
        %v3380 = vpack.c.b16 %v3240, %v3236
        %v3381 = vpack.c.b16 %v3241, %v3237
        %v3382 = vpack.c.b16 %v3246, %v3242
        %v3383 = vpack.c.b16 %v3247, %v3243
        %v3384 = vpack.c.b16 %v3248, %v3244
        %v3385 = vpack.c.b16 %v3249, %v3245
        %v3386 = vpack.c.b16 %v3254, %v3250
        %v3387 = vpack.c.b16 %v3255, %v3251
        %v3388 = vpack.c.b16 %v3256, %v3252
        %v3389 = vpack.c.b16 %v3257, %v3253
        %v3390 = vpack.c.b16 %v3262, %v3258
        %v3391 = vpack.c.b16 %v3263, %v3259
        %v3392 = vpack.c.b16 %v3264, %v3260
        %v3393 = vpack.c.b16 %v3265, %v3261
        %3522 = vmatprep.subr.bf16.mxu0 %v3267
        %3523 = vmatpush1.bf16.msra.mxu0 %v3266
        %3524 = vmatprep.subr.bf16.mxu0 %v3271
        %3525 = vmatpush1.bf16.msra.mxu0 %v3270
        %3526 = vmatprep.subr.bf16.mxu0 %v3275
        %3527 = vmatpush1.bf16.msra.mxu0 %v3274
        %3528 = vmatprep.subr.bf16.mxu0 %v3279
        %3529 = vmatpush1.bf16.msra.mxu0 %v3278
        %3530 = vmatprep.subr.bf16.mxu0 %v3283
        %3531 = vmatpush1.bf16.msra.mxu0 %v3282
        %3532 = vmatprep.subr.bf16.mxu0 %v3287
        %3533 = vmatpush1.bf16.msra.mxu0 %v3286
        %3534 = vmatprep.subr.bf16.mxu0 %v3291
        %3535 = vmatpush1.bf16.msra.mxu0 %v3290
        %3536 = vmatprep.subr.bf16.mxu0 %v3295
        %3537 = vmatpush1.bf16.msra.mxu0 %v3294
        %3538 = vmatprep.subr.bf16.mxu0 %v3299
        %3539 = vmatpush1.bf16.msra.mxu0 %v3298
        %3540 = vmatprep.subr.bf16.mxu0 %v3303
        %3541 = vmatpush1.bf16.msra.mxu0 %v3302
        %3542 = vmatprep.subr.bf16.mxu0 %v3307
        %3543 = vmatpush1.bf16.msra.mxu0 %v3306
        %3544 = vmatprep.subr.bf16.mxu0 %v3311
        %3545 = vmatpush1.bf16.msra.mxu0 %v3310
        %3546 = vmatprep.subr.bf16.mxu0 %v3315
        %3547 = vmatpush1.bf16.msra.mxu0 %v3314
        %3548 = vmatprep.subr.bf16.mxu0 %v3319
        %3549 = vmatpush1.bf16.msra.mxu0 %v3318
        %3550 = vmatprep.subr.bf16.mxu0 %v3323
        %3551 = vmatpush1.bf16.msra.mxu0 %v3322
        %3552 = vmatprep.subr.bf16.mxu0 %v3327
        %3553 = vmatpush1.bf16.msra.mxu0 %v3326
        %3554 = vmatprep.mubr.bf16.mxu0 %v2729
        %3555 = vmatmul.mubr.bf16.gmra.mrb[0].mxu0 %v2728
        %v3556 = vpop.f32.mrb[0].mxu0
        %v3557 = vadd.f32 %v2865, %v3556
        %v3558 = vpop.f32.mrb[0].mxu0
        %v3559 = vadd.f32 %v2869, %v3558
        %v3560 = vpop.f32.mrb[0].mxu0
        %v3561 = vpop.f32.mrb[0].mxu0
        %3562 = vdwg.mxu0
        %3563 = vmatprep.subr.bf16.mxu0 %v3331
        %3564 = vmatpush1.bf16.msra.mxu0 %v3330
        %3565 = vmatprep.subr.bf16.mxu0 %v3335
        %3566 = vmatpush1.bf16.msra.mxu0 %v3334
        %3567 = vmatprep.subr.bf16.mxu0 %v3339
        %3568 = vmatpush1.bf16.msra.mxu0 %v3338
        %3569 = vmatprep.subr.bf16.mxu0 %v3343
        %3570 = vmatpush1.bf16.msra.mxu0 %v3342
        %3571 = vmatprep.subr.bf16.mxu0 %v3347
        %3572 = vmatpush1.bf16.msra.mxu0 %v3346
        %3573 = vmatprep.subr.bf16.mxu0 %v3351
        %3574 = vmatpush1.bf16.msra.mxu0 %v3350
        %3575 = vmatprep.subr.bf16.mxu0 %v3355
        %3576 = vmatpush1.bf16.msra.mxu0 %v3354
        %3577 = vmatprep.subr.bf16.mxu0 %v3359
        %3578 = vmatpush1.bf16.msra.mxu0 %v3358
        %3579 = vmatprep.subr.bf16.mxu0 %v3363
        %3580 = vmatpush1.bf16.msra.mxu0 %v3362
        %3581 = vmatprep.subr.bf16.mxu0 %v3367
        %3582 = vmatpush1.bf16.msra.mxu0 %v3366
        %3583 = vmatprep.subr.bf16.mxu0 %v3371
        %3584 = vmatpush1.bf16.msra.mxu0 %v3370
        %3585 = vmatprep.subr.bf16.mxu0 %v3375
        %3586 = vmatpush1.bf16.msra.mxu0 %v3374
        %3587 = vmatprep.subr.bf16.mxu0 %v3379
        %3588 = vmatpush1.bf16.msra.mxu0 %v3378
        %3589 = vmatprep.subr.bf16.mxu0 %v3383
        %3590 = vmatpush1.bf16.msra.mxu0 %v3382
        %3591 = vmatprep.subr.bf16.mxu0 %v3387
        %3592 = vmatpush1.bf16.msra.mxu0 %v3386
        %3593 = vmatprep.subr.bf16.mxu0 %v3391
        %3594 = vmatpush1.bf16.msra.mxu0 %v3390
        %3595 = vmatprep.mubr.bf16.mxu0 %v2731
        %3596 = vmatmul.mubr.bf16.gmra.mrb[0].mxu0 %v2730
        %v3597 = vpop.f32.mrb[0].mxu0
        %v3598 = vadd.f32 %v3557, %v3597
        %v3599 = vpop.f32.mrb[0].mxu0
        %v3600 = vadd.f32 %v3559, %v3599
        %v3601 = vpop.f32.mrb[0].mxu0
        %v3602 = vpop.f32.mrb[0].mxu0
        %3603 = vdwg.mxu0
        %3604 = vmatprep.subr.bf16.mxu0 %v3269
        %3605 = vmatpush1.bf16.msra.mxu0 %v3268
        %3606 = vmatprep.subr.bf16.mxu0 %v3273
        %3607 = vmatpush1.bf16.msra.mxu0 %v3272
        %3608 = vmatprep.subr.bf16.mxu0 %v3277
        %3609 = vmatpush1.bf16.msra.mxu0 %v3276
        %3610 = vmatprep.subr.bf16.mxu0 %v3281
        %3611 = vmatpush1.bf16.msra.mxu0 %v3280
        %3612 = vmatprep.subr.bf16.mxu0 %v3285
        %3613 = vmatpush1.bf16.msra.mxu0 %v3284
        %3614 = vmatprep.subr.bf16.mxu0 %v3289
        %3615 = vmatpush1.bf16.msra.mxu0 %v3288
        %3616 = vmatprep.subr.bf16.mxu0 %v3293
        %3617 = vmatpush1.bf16.msra.mxu0 %v3292
        %3618 = vmatprep.subr.bf16.mxu0 %v3297
        %3619 = vmatpush1.bf16.msra.mxu0 %v3296
        %3620 = vmatprep.subr.bf16.mxu0 %v3301
        %3621 = vmatpush1.bf16.msra.mxu0 %v3300
        %3622 = vmatprep.subr.bf16.mxu0 %v3305
        %3623 = vmatpush1.bf16.msra.mxu0 %v3304
        %3624 = vmatprep.subr.bf16.mxu0 %v3309
        %3625 = vmatpush1.bf16.msra.mxu0 %v3308
        %3626 = vmatprep.subr.bf16.mxu0 %v3313
        %3627 = vmatpush1.bf16.msra.mxu0 %v3312
        %3628 = vmatprep.subr.bf16.mxu0 %v3317
        %3629 = vmatpush1.bf16.msra.mxu0 %v3316
        %3630 = vmatprep.subr.bf16.mxu0 %v3321
        %3631 = vmatpush1.bf16.msra.mxu0 %v3320
        %3632 = vmatprep.subr.bf16.mxu0 %v3325
        %3633 = vmatpush1.bf16.msra.mxu0 %v3324
        %3634 = vmatprep.subr.bf16.mxu0 %v3329
        %3635 = vmatpush1.bf16.msra.mxu0 %v3328
        %3636 = vmatprep.mubr.bf16.mxu0 %v2729
        %3637 = vmatmul.mubr.bf16.gmra.mrb[0].mxu0 %v2728
        %v3638 = vpop.f32.mrb[0].mxu0
        %v3639 = vadd.f32 %v2873, %v3638
        %v3640 = vpop.f32.mrb[0].mxu0
        %v3641 = vadd.f32 %v2877, %v3640
        %v3642 = vpop.f32.mrb[0].mxu0
        %v3643 = vpop.f32.mrb[0].mxu0
        %3644 = vdwg.mxu0
        %3645 = vmatprep.subr.bf16.mxu0 %v3333
        %3646 = vmatpush1.bf16.msra.mxu0 %v3332
        %3647 = vmatprep.subr.bf16.mxu0 %v3337
        %3648 = vmatpush1.bf16.msra.mxu0 %v3336
        %3649 = vmatprep.subr.bf16.mxu0 %v3341
        %3650 = vmatpush1.bf16.msra.mxu0 %v3340
        %3651 = vmatprep.subr.bf16.mxu0 %v3345
        %3652 = vmatpush1.bf16.msra.mxu0 %v3344
        %3653 = vmatprep.subr.bf16.mxu0 %v3349
        %3654 = vmatpush1.bf16.msra.mxu0 %v3348
        %3655 = vmatprep.subr.bf16.mxu0 %v3353
        %3656 = vmatpush1.bf16.msra.mxu0 %v3352
        %3657 = vmatprep.subr.bf16.mxu0 %v3357
        %3658 = vmatpush1.bf16.msra.mxu0 %v3356
        %3659 = vmatprep.subr.bf16.mxu0 %v3361
        %3660 = vmatpush1.bf16.msra.mxu0 %v3360
        %3661 = vmatprep.subr.bf16.mxu0 %v3365
        %3662 = vmatpush1.bf16.msra.mxu0 %v3364
        %3663 = vmatprep.subr.bf16.mxu0 %v3369
        %3664 = vmatpush1.bf16.msra.mxu0 %v3368
        %3665 = vmatprep.subr.bf16.mxu0 %v3373
        %3666 = vmatpush1.bf16.msra.mxu0 %v3372
        %3667 = vmatprep.subr.bf16.mxu0 %v3377
        %3668 = vmatpush1.bf16.msra.mxu0 %v3376
        %3669 = vmatprep.subr.bf16.mxu0 %v3381
        %3670 = vmatpush1.bf16.msra.mxu0 %v3380
        %3671 = vmatprep.subr.bf16.mxu0 %v3385
        %3672 = vmatpush1.bf16.msra.mxu0 %v3384
        %3673 = vmatprep.subr.bf16.mxu0 %v3389
        %3674 = vmatpush1.bf16.msra.mxu0 %v3388
        %3675 = vmatprep.subr.bf16.mxu0 %v3393
        %3676 = vmatpush1.bf16.msra.mxu0 %v3392
        %3677 = vmatprep.mubr.bf16.mxu0 %v2731
        %3678 = vmatmul.mubr.bf16.gmra.mrb[0].mxu0 %v2730
        %v3679 = vpop.f32.mrb[0].mxu0
        %v3680 = vadd.f32 %v3639, %v3679
        %v3681 = vpop.f32.mrb[0].mxu0
        %v3682 = vadd.f32 %v3641, %v3681
        %v3683 = vpop.f32.mrb[0].mxu0
        %v3684 = vpop.f32.mrb[0].mxu0
        %3685 = vdwg.mxu0
        %v3686 = vadd.f32 %v3598, %v3600
        %v3687 = vadd.f32 %v3686, %v3680
        %v3688 = vadd.f32 %v3687, %v3682
        %3689 = vadd.xlane.f32.xlu0 %v3688
        %v3690 = vpop.xlane.xlu0 %3689
        %v3691 = vrcp.pop 512.0
        %v3692 = vmul.f32 %v3690, %v3691
        %v3693 = vsub.f32 %v3598, %v3692
        %v3694 = vsub.f32 %v3600, %v3692
        %v3695 = vsub.f32 %v3680, %v3692
        %v3696 = vsub.f32 %v3682, %v3692
        %v3697 = vmul.f32 %v3693, %v3693
        %v3698 = vmul.f32 %v3694, %v3694
        %v3699 = vmul.f32 %v3695, %v3695
        %v3700 = vmul.f32 %v3696, %v3696
        %v3701 = vadd.f32 %v3697, %v3698
        %v3702 = vadd.f32 %v3701, %v3699
        %v3703 = vadd.f32 %v3702, %v3700
        %3704 = vadd.xlane.f32.xlu0 %v3703
        %v3705 = vpop.xlane.xlu0 %3704
        %v3706 = vmul.f32 %v3705, %v3691
        %v3707 = vadd.f32 %v3706, 1e-05
        %v3708 = vrsqrt.pop %v3707
        %v3709 = vmul.f32 %v3693, %v3708
        %v3710 = vmul.f32 %v3694, %v3708
        %v3711 = vmul.f32 %v3695, %v3708
        %v3712 = vmul.f32 %v3696, %v3708
        %v3714 = vlaneseq
        %v3715 = vshrl.u32 %v3714, 7
        %v3716 = vsub.s32 0, %v3715
        %v3717 = vrot.slane %v804, %v3716
        %v3718 = vlaneseq
        %v3719 = vshrl.u32 %v3718, 7
        %v3720 = vsub.s32 1, %v3719
        %v3721 = vrot.slane %v804, %v3720
        %v3722 = vlaneseq
        %v3723 = vshrl.u32 %v3722, 7
        %v3724 = vsub.s32 2, %v3723
        %v3725 = vrot.slane %v804, %v3724
        %v3726 = vlaneseq
        %v3727 = vshrl.u32 %v3726, 7
        %v3728 = vsub.s32 3, %v3727
        %v3729 = vrot.slane %v804, %v3728
        %v3734 = vmul.f32 %v3709, %v3717
        %v3735 = vmul.f32 %v3710, %v3721
        %v3736 = vmul.f32 %v3711, %v3725
        %v3737 = vmul.f32 %v3712, %v3729
        %v3739 = vlaneseq
        %v3740 = vshrl.u32 %v3739, 7
        %v3741 = vsub.s32 0, %v3740
        %v3742 = vrot.slane %v805, %v3741
        %v3743 = vlaneseq
        %v3744 = vshrl.u32 %v3743, 7
        %v3745 = vsub.s32 1, %v3744
        %v3746 = vrot.slane %v805, %v3745
        %v3747 = vlaneseq
        %v3748 = vshrl.u32 %v3747, 7
        %v3749 = vsub.s32 2, %v3748
        %v3750 = vrot.slane %v805, %v3749
        %v3751 = vlaneseq
        %v3752 = vshrl.u32 %v3751, 7
        %v3753 = vsub.s32 3, %v3752
        %v3754 = vrot.slane %v805, %v3753
        %v3759 = vadd.f32 %v3734, %v3742
        %v3760 = vadd.f32 %v3735, %v3746
        %v3761 = vadd.f32 %v3736, %v3750
        %v3762 = vadd.f32 %v3737, %v3754
        %3763 = vst [vmem:[%s761] sm:$0xff] %v3759
        %3764 = vst [vmem:[%s761 + $0x8] sm:$0xff] %v3760
        %3765 = vst [vmem:[%s761 + $0x10] sm:$0xff] %v3761
        %3766 = vst [vmem:[%s761 + $0x18] sm:$0xff] %v3762
        %v3767 = vld [vmem:[%s7] sm:$0xf]
        %v3769 = vlaneseq
        %v3770 = vshrl.u32 %v3769, 7
        %v3771 = vsub.s32 0, %v3770
        %v3772 = vrot.slane %v3767, %v3771
        %v3773 = vlaneseq
        %v3774 = vshrl.u32 %v3773, 7
        %v3775 = vsub.s32 1, %v3774
        %v3776 = vrot.slane %v3767, %v3775
        %v3777 = vlaneseq
        %v3778 = vshrl.u32 %v3777, 7
        %v3779 = vsub.s32 2, %v3778
        %v3780 = vrot.slane %v3767, %v3779
        %v3781 = vlaneseq
        %v3782 = vshrl.u32 %v3781, 7
        %v3783 = vsub.s32 3, %v3782
        %v3784 = vrot.slane %v3767, %v3783
        %v3789 = vmul.f32 %v3759, %v3772
        %v3790 = vmul.f32 %v3760, %v3776
        %v3791 = vmul.f32 %v3761, %v3780
        %v3792 = vmul.f32 %v3762, %v3784
        %v3793 = vadd.f32 %v3789, %v3790
        %v3794 = vadd.f32 %v3793, %v3791
        %v3795 = vadd.f32 %v3794, %v3792
        %3796 = vadd.xlane.f32.xlu0 %v3795
        %v3797 = vpop.xlane.xlu0 %3796
        %s3798 = sld [smem:[#allocation2]]
        %v3799 = vstv %s3798
        %v3800 = vadd.f32 %v3797, %v3799
        %v3801 = vxor.u32 %v3800, 2147483648
        %v3802 = vmul.f32 %v3801, 1.442695
        %v3803 = vpow.pop %v3802
        %v3804 = vadd.f32 %v3803, 1.0
        %v3805 = vrcp.pop %v3804
        %v3806 = vmul.f32 1.0, %v3805
        %vm3807 = vcmask 7168
        %3808 = vst.msk [vmem:[%s794] sm:$0xff] %vm3807, %v3806
        %v3809 = vrot.slane %v3598, 4
        %v3810 = vmax.f32 %v3598, %v3809
        %v3811 = vrot.slane %v3810, 2
        %v3812 = vmax.f32 %v3810, %v3811
        %v3813 = vrot.slane %v3812, 1
        %v3814 = vmax.f32 %v3812, %v3813
        %v3815 = vrot.slane %v3600, 4
        %v3816 = vmax.f32 %v3600, %v3815
        %v3817 = vrot.slane %v3816, 2
        %v3818 = vmax.f32 %v3816, %v3817
        %v3819 = vrot.slane %v3818, 1
        %v3820 = vmax.f32 %v3818, %v3819
        %v3821 = vrot.slane %v3680, 4
        %v3822 = vmax.f32 %v3680, %v3821
        %v3823 = vrot.slane %v3822, 2
        %v3824 = vmax.f32 %v3822, %v3823
        %v3825 = vrot.slane %v3824, 1
        %v3826 = vmax.f32 %v3824, %v3825
        %v3827 = vrot.slane %v3682, 4
        %v3828 = vmax.f32 %v3682, %v3827
        %v3829 = vrot.slane %v3828, 2
        %v3830 = vmax.f32 %v3828, %v3829
        %v3831 = vrot.slane %v3830, 1
        %v3832 = vmax.f32 %v3830, %v3831
        %v3833 = vpack.c.bf16 %v3814, %v3814
        %v3834 = vpack.c.bf16 %v3820, %v3820
        %v3835 = vpack.c.bf16 %v3826, %v3826
        %v3836 = vpack.c.bf16 %v3832, %v3832
        %v3837 = vld [vmem:[#allocation6] sm:$0xff]
        %v3838 = vld [vmem:[#allocation6 + $0x8] sm:$0xff]
        %v3839 = vld [vmem:[#allocation6 + $0x10] sm:$0xff]
        %v3840 = vld [vmem:[#allocation6 + $0x18] sm:$0xff]
        %v3841 = vld [vmem:[#allocation6 + $0x20] sm:$0xff]
        %v3842 = vld [vmem:[#allocation6 + $0x28] sm:$0xff]
        %v3843 = vld [vmem:[#allocation6 + $0x30] sm:$0xff]
        %v3844 = vld [vmem:[#allocation6 + $0x38] sm:$0xff]
        %v3845 = vld [vmem:[#allocation6 + $0x40] sm:$0xff]
        %v3846 = vld [vmem:[#allocation6 + $0x48] sm:$0xff]
        %v3847 = vld [vmem:[#allocation6 + $0x50] sm:$0xff]
        %v3848 = vld [vmem:[#allocation6 + $0x58] sm:$0xff]
        %v3849 = vld [vmem:[#allocation6 + $0x60] sm:$0xff]
        %v3850 = vld [vmem:[#allocation6 + $0x68] sm:$0xff]
        %v3851 = vld [vmem:[#allocation6 + $0x70] sm:$0xff]
        %v3852 = vld [vmem:[#allocation6 + $0x78] sm:$0xff]
        %v3853 = vld [vmem:[#allocation6 + $0x80] sm:$0xff]
        %v3854 = vld [vmem:[#allocation6 + $0x88] sm:$0xff]
        %v3855 = vld [vmem:[#allocation6 + $0x90] sm:$0xff]
        %v3856 = vld [vmem:[#allocation6 + $0x98] sm:$0xff]
        %v3857 = vld [vmem:[#allocation6 + $0xa0] sm:$0xff]
        %v3858 = vld [vmem:[#allocation6 + $0xa8] sm:$0xff]
        %v3859 = vld [vmem:[#allocation6 + $0xb0] sm:$0xff]
        %v3860 = vld [vmem:[#allocation6 + $0xb8] sm:$0xff]
        %v3861 = vld [vmem:[#allocation6 + $0xc0] sm:$0xff]
        %v3862 = vld [vmem:[#allocation6 + $0xc8] sm:$0xff]
        %v3863 = vld [vmem:[#allocation6 + $0xd0] sm:$0xff]
        %v3864 = vld [vmem:[#allocation6 + $0xd8] sm:$0xff]
        %v3865 = vld [vmem:[#allocation6 + $0xe0] sm:$0xff]
        %v3866 = vld [vmem:[#allocation6 + $0xe8] sm:$0xff]
        %v3867 = vld [vmem:[#allocation6 + $0xf0] sm:$0xff]
        %v3868 = vld [vmem:[#allocation6 + $0xf8] sm:$0xff]
        %v3869 = vld [vmem:[#allocation6 + $0x100] sm:$0xff]
        %v3870 = vld [vmem:[#allocation6 + $0x108] sm:$0xff]
        %v3871 = vld [vmem:[#allocation6 + $0x110] sm:$0xff]
        %v3872 = vld [vmem:[#allocation6 + $0x118] sm:$0xff]
        %v3873 = vld [vmem:[#allocation6 + $0x120] sm:$0xff]
        %v3874 = vld [vmem:[#allocation6 + $0x128] sm:$0xff]
        %v3875 = vld [vmem:[#allocation6 + $0x130] sm:$0xff]
        %v3876 = vld [vmem:[#allocation6 + $0x138] sm:$0xff]
        %v3877 = vld [vmem:[#allocation6 + $0x140] sm:$0xff]
        %v3878 = vld [vmem:[#allocation6 + $0x148] sm:$0xff]
        %v3879 = vld [vmem:[#allocation6 + $0x150] sm:$0xff]
        %v3880 = vld [vmem:[#allocation6 + $0x158] sm:$0xff]
        %v3881 = vld [vmem:[#allocation6 + $0x160] sm:$0xff]
        %v3882 = vld [vmem:[#allocation6 + $0x168] sm:$0xff]
        %v3883 = vld [vmem:[#allocation6 + $0x170] sm:$0xff]
        %v3884 = vld [vmem:[#allocation6 + $0x178] sm:$0xff]
        %v3885 = vld [vmem:[#allocation6 + $0x180] sm:$0xff]
        %v3886 = vld [vmem:[#allocation6 + $0x188] sm:$0xff]
        %v3887 = vld [vmem:[#allocation6 + $0x190] sm:$0xff]
        %v3888 = vld [vmem:[#allocation6 + $0x198] sm:$0xff]
        %v3889 = vld [vmem:[#allocation6 + $0x1a0] sm:$0xff]
        %v3890 = vld [vmem:[#allocation6 + $0x1a8] sm:$0xff]
        %v3891 = vld [vmem:[#allocation6 + $0x1b0] sm:$0xff]
        %v3892 = vld [vmem:[#allocation6 + $0x1b8] sm:$0xff]
        %v3893 = vld [vmem:[#allocation6 + $0x1c0] sm:$0xff]
        %v3894 = vld [vmem:[#allocation6 + $0x1c8] sm:$0xff]
        %v3895 = vld [vmem:[#allocation6 + $0x1d0] sm:$0xff]
        %v3896 = vld [vmem:[#allocation6 + $0x1d8] sm:$0xff]
        %v3897 = vld [vmem:[#allocation6 + $0x1e0] sm:$0xff]
        %v3898 = vld [vmem:[#allocation6 + $0x1e8] sm:$0xff]
        %v3899 = vld [vmem:[#allocation6 + $0x1f0] sm:$0xff]
        %v3900 = vld [vmem:[#allocation6 + $0x1f8] sm:$0xff]
        %v3901 = vld [vmem:[#allocation6 + $0x200] sm:$0xff]
        %v3902 = vld [vmem:[#allocation6 + $0x208] sm:$0xff]
        %v3903 = vld [vmem:[#allocation6 + $0x210] sm:$0xff]
        %v3904 = vld [vmem:[#allocation6 + $0x218] sm:$0xff]
        %v3905 = vld [vmem:[#allocation6 + $0x220] sm:$0xff]
        %v3906 = vld [vmem:[#allocation6 + $0x228] sm:$0xff]
        %v3907 = vld [vmem:[#allocation6 + $0x230] sm:$0xff]
        %v3908 = vld [vmem:[#allocation6 + $0x238] sm:$0xff]
        %v3909 = vld [vmem:[#allocation6 + $0x240] sm:$0xff]
        %v3910 = vld [vmem:[#allocation6 + $0x248] sm:$0xff]
        %v3911 = vld [vmem:[#allocation6 + $0x250] sm:$0xff]
        %v3912 = vld [vmem:[#allocation6 + $0x258] sm:$0xff]
        %v3913 = vld [vmem:[#allocation6 + $0x260] sm:$0xff]
        %v3914 = vld [vmem:[#allocation6 + $0x268] sm:$0xff]
        %v3915 = vld [vmem:[#allocation6 + $0x270] sm:$0xff]
        %v3916 = vld [vmem:[#allocation6 + $0x278] sm:$0xff]
        %v3917 = vld [vmem:[#allocation6 + $0x280] sm:$0xff]
        %v3918 = vld [vmem:[#allocation6 + $0x288] sm:$0xff]
        %v3919 = vld [vmem:[#allocation6 + $0x290] sm:$0xff]
        %v3920 = vld [vmem:[#allocation6 + $0x298] sm:$0xff]
        %v3921 = vld [vmem:[#allocation6 + $0x2a0] sm:$0xff]
        %v3922 = vld [vmem:[#allocation6 + $0x2a8] sm:$0xff]
        %v3923 = vld [vmem:[#allocation6 + $0x2b0] sm:$0xff]
        %v3924 = vld [vmem:[#allocation6 + $0x2b8] sm:$0xff]
        %v3925 = vld [vmem:[#allocation6 + $0x2c0] sm:$0xff]
        %v3926 = vld [vmem:[#allocation6 + $0x2c8] sm:$0xff]
        %v3927 = vld [vmem:[#allocation6 + $0x2d0] sm:$0xff]
        %v3928 = vld [vmem:[#allocation6 + $0x2d8] sm:$0xff]
        %v3929 = vld [vmem:[#allocation6 + $0x2e0] sm:$0xff]
        %v3930 = vld [vmem:[#allocation6 + $0x2e8] sm:$0xff]
        %v3931 = vld [vmem:[#allocation6 + $0x2f0] sm:$0xff]
        %v3932 = vld [vmem:[#allocation6 + $0x2f8] sm:$0xff]
        %v3933 = vld [vmem:[#allocation6 + $0x300] sm:$0xff]
        %v3934 = vld [vmem:[#allocation6 + $0x308] sm:$0xff]
        %v3935 = vld [vmem:[#allocation6 + $0x310] sm:$0xff]
        %v3936 = vld [vmem:[#allocation6 + $0x318] sm:$0xff]
        %v3937 = vld [vmem:[#allocation6 + $0x320] sm:$0xff]
        %v3938 = vld [vmem:[#allocation6 + $0x328] sm:$0xff]
        %v3939 = vld [vmem:[#allocation6 + $0x330] sm:$0xff]
        %v3940 = vld [vmem:[#allocation6 + $0x338] sm:$0xff]
        %v3941 = vld [vmem:[#allocation6 + $0x340] sm:$0xff]
        %v3942 = vld [vmem:[#allocation6 + $0x348] sm:$0xff]
        %v3943 = vld [vmem:[#allocation6 + $0x350] sm:$0xff]
        %v3944 = vld [vmem:[#allocation6 + $0x358] sm:$0xff]
        %v3945 = vld [vmem:[#allocation6 + $0x360] sm:$0xff]
        %v3946 = vld [vmem:[#allocation6 + $0x368] sm:$0xff]
        %v3947 = vld [vmem:[#allocation6 + $0x370] sm:$0xff]
        %v3948 = vld [vmem:[#allocation6 + $0x378] sm:$0xff]
        %v3949 = vld [vmem:[#allocation6 + $0x380] sm:$0xff]
        %v3950 = vld [vmem:[#allocation6 + $0x388] sm:$0xff]
        %v3951 = vld [vmem:[#allocation6 + $0x390] sm:$0xff]
        %v3952 = vld [vmem:[#allocation6 + $0x398] sm:$0xff]
        %v3953 = vld [vmem:[#allocation6 + $0x3a0] sm:$0xff]
        %v3954 = vld [vmem:[#allocation6 + $0x3a8] sm:$0xff]
        %v3955 = vld [vmem:[#allocation6 + $0x3b0] sm:$0xff]
        %v3956 = vld [vmem:[#allocation6 + $0x3b8] sm:$0xff]
        %v3957 = vld [vmem:[#allocation6 + $0x3c0] sm:$0xff]
        %v3958 = vld [vmem:[#allocation6 + $0x3c8] sm:$0xff]
        %v3959 = vld [vmem:[#allocation6 + $0x3d0] sm:$0xff]
        %v3960 = vld [vmem:[#allocation6 + $0x3d8] sm:$0xff]
        %v3961 = vld [vmem:[#allocation6 + $0x3e0] sm:$0xff]
        %v3962 = vld [vmem:[#allocation6 + $0x3e8] sm:$0xff]
        %v3963 = vld [vmem:[#allocation6 + $0x3f0] sm:$0xff]
        %v3964 = vld [vmem:[#allocation6 + $0x3f8] sm:$0xff]
        %v3965 = vld [vmem:[%s10] sm:$0xf]
        %v4094 = vunpack.c.l.b16 %v3837
        %v4095 = vunpack.c.h.b16 %v3837
        %v4096 = vunpack.c.l.b16 %v3838
        %v4097 = vunpack.c.h.b16 %v3838
        %v4098 = vunpack.c.l.b16 %v3839
        %v4099 = vunpack.c.h.b16 %v3839
        %v4100 = vunpack.c.l.b16 %v3840
        %v4101 = vunpack.c.h.b16 %v3840
        %v4102 = vunpack.c.l.b16 %v3841
        %v4103 = vunpack.c.h.b16 %v3841
        %v4104 = vunpack.c.l.b16 %v3842
        %v4105 = vunpack.c.h.b16 %v3842
        %v4106 = vunpack.c.l.b16 %v3843
        %v4107 = vunpack.c.h.b16 %v3843
        %v4108 = vunpack.c.l.b16 %v3844
        %v4109 = vunpack.c.h.b16 %v3844
        %v4110 = vunpack.c.l.b16 %v3845
        %v4111 = vunpack.c.h.b16 %v3845
        %v4112 = vunpack.c.l.b16 %v3846
        %v4113 = vunpack.c.h.b16 %v3846
        %v4114 = vunpack.c.l.b16 %v3847
        %v4115 = vunpack.c.h.b16 %v3847
        %v4116 = vunpack.c.l.b16 %v3848
        %v4117 = vunpack.c.h.b16 %v3848
        %v4118 = vunpack.c.l.b16 %v3849
        %v4119 = vunpack.c.h.b16 %v3849
        %v4120 = vunpack.c.l.b16 %v3850
        %v4121 = vunpack.c.h.b16 %v3850
        %v4122 = vunpack.c.l.b16 %v3851
        %v4123 = vunpack.c.h.b16 %v3851
        %v4124 = vunpack.c.l.b16 %v3852
        %v4125 = vunpack.c.h.b16 %v3852
        %v4126 = vunpack.c.l.b16 %v3853
        %v4127 = vunpack.c.h.b16 %v3853
        %v4128 = vunpack.c.l.b16 %v3854
        %v4129 = vunpack.c.h.b16 %v3854
        %v4130 = vunpack.c.l.b16 %v3855
        %v4131 = vunpack.c.h.b16 %v3855
        %v4132 = vunpack.c.l.b16 %v3856
        %v4133 = vunpack.c.h.b16 %v3856
        %v4134 = vunpack.c.l.b16 %v3857
        %v4135 = vunpack.c.h.b16 %v3857
        %v4136 = vunpack.c.l.b16 %v3858
        %v4137 = vunpack.c.h.b16 %v3858
        %v4138 = vunpack.c.l.b16 %v3859
        %v4139 = vunpack.c.h.b16 %v3859
        %v4140 = vunpack.c.l.b16 %v3860
        %v4141 = vunpack.c.h.b16 %v3860
        %v4142 = vunpack.c.l.b16 %v3861
        %v4143 = vunpack.c.h.b16 %v3861
        %v4144 = vunpack.c.l.b16 %v3862
        %v4145 = vunpack.c.h.b16 %v3862
        %v4146 = vunpack.c.l.b16 %v3863
        %v4147 = vunpack.c.h.b16 %v3863
        %v4148 = vunpack.c.l.b16 %v3864
        %v4149 = vunpack.c.h.b16 %v3864
        %v4150 = vunpack.c.l.b16 %v3865
        %v4151 = vunpack.c.h.b16 %v3865
        %v4152 = vunpack.c.l.b16 %v3866
        %v4153 = vunpack.c.h.b16 %v3866
        %v4154 = vunpack.c.l.b16 %v3867
        %v4155 = vunpack.c.h.b16 %v3867
        %v4156 = vunpack.c.l.b16 %v3868
        %v4157 = vunpack.c.h.b16 %v3868
        %v4158 = vunpack.c.l.b16 %v3869
        %v4159 = vunpack.c.h.b16 %v3869
        %v4160 = vunpack.c.l.b16 %v3870
        %v4161 = vunpack.c.h.b16 %v3870
        %v4162 = vunpack.c.l.b16 %v3871
        %v4163 = vunpack.c.h.b16 %v3871
        %v4164 = vunpack.c.l.b16 %v3872
        %v4165 = vunpack.c.h.b16 %v3872
        %v4166 = vunpack.c.l.b16 %v3873
        %v4167 = vunpack.c.h.b16 %v3873
        %v4168 = vunpack.c.l.b16 %v3874
        %v4169 = vunpack.c.h.b16 %v3874
        %v4170 = vunpack.c.l.b16 %v3875
        %v4171 = vunpack.c.h.b16 %v3875
        %v4172 = vunpack.c.l.b16 %v3876
        %v4173 = vunpack.c.h.b16 %v3876
        %v4174 = vunpack.c.l.b16 %v3877
        %v4175 = vunpack.c.h.b16 %v3877
        %v4176 = vunpack.c.l.b16 %v3878
        %v4177 = vunpack.c.h.b16 %v3878
        %v4178 = vunpack.c.l.b16 %v3879
        %v4179 = vunpack.c.h.b16 %v3879
        %v4180 = vunpack.c.l.b16 %v3880
        %v4181 = vunpack.c.h.b16 %v3880
        %v4182 = vunpack.c.l.b16 %v3881
        %v4183 = vunpack.c.h.b16 %v3881
        %v4184 = vunpack.c.l.b16 %v3882
        %v4185 = vunpack.c.h.b16 %v3882
        %v4186 = vunpack.c.l.b16 %v3883
        %v4187 = vunpack.c.h.b16 %v3883
        %v4188 = vunpack.c.l.b16 %v3884
        %v4189 = vunpack.c.h.b16 %v3884
        %v4190 = vunpack.c.l.b16 %v3885
        %v4191 = vunpack.c.h.b16 %v3885
        %v4192 = vunpack.c.l.b16 %v3886
        %v4193 = vunpack.c.h.b16 %v3886
        %v4194 = vunpack.c.l.b16 %v3887
        %v4195 = vunpack.c.h.b16 %v3887
        %v4196 = vunpack.c.l.b16 %v3888
        %v4197 = vunpack.c.h.b16 %v3888
        %v4198 = vunpack.c.l.b16 %v3889
        %v4199 = vunpack.c.h.b16 %v3889
        %v4200 = vunpack.c.l.b16 %v3890
        %v4201 = vunpack.c.h.b16 %v3890
        %v4202 = vunpack.c.l.b16 %v3891
        %v4203 = vunpack.c.h.b16 %v3891
        %v4204 = vunpack.c.l.b16 %v3892
        %v4205 = vunpack.c.h.b16 %v3892
        %v4206 = vunpack.c.l.b16 %v3893
        %v4207 = vunpack.c.h.b16 %v3893
        %v4208 = vunpack.c.l.b16 %v3894
        %v4209 = vunpack.c.h.b16 %v3894
        %v4210 = vunpack.c.l.b16 %v3895
        %v4211 = vunpack.c.h.b16 %v3895
        %v4212 = vunpack.c.l.b16 %v3896
        %v4213 = vunpack.c.h.b16 %v3896
        %v4214 = vunpack.c.l.b16 %v3897
        %v4215 = vunpack.c.h.b16 %v3897
        %v4216 = vunpack.c.l.b16 %v3898
        %v4217 = vunpack.c.h.b16 %v3898
        %v4218 = vunpack.c.l.b16 %v3899
        %v4219 = vunpack.c.h.b16 %v3899
        %v4220 = vunpack.c.l.b16 %v3900
        %v4221 = vunpack.c.h.b16 %v3900
        %v4222 = vunpack.c.l.b16 %v3901
        %v4223 = vunpack.c.h.b16 %v3901
        %v4224 = vunpack.c.l.b16 %v3902
        %v4225 = vunpack.c.h.b16 %v3902
        %v4226 = vunpack.c.l.b16 %v3903
        %v4227 = vunpack.c.h.b16 %v3903
        %v4228 = vunpack.c.l.b16 %v3904
        %v4229 = vunpack.c.h.b16 %v3904
        %v4230 = vunpack.c.l.b16 %v3905
        %v4231 = vunpack.c.h.b16 %v3905
        %v4232 = vunpack.c.l.b16 %v3906
        %v4233 = vunpack.c.h.b16 %v3906
        %v4234 = vunpack.c.l.b16 %v3907
        %v4235 = vunpack.c.h.b16 %v3907
        %v4236 = vunpack.c.l.b16 %v3908
        %v4237 = vunpack.c.h.b16 %v3908
        %v4238 = vunpack.c.l.b16 %v3909
        %v4239 = vunpack.c.h.b16 %v3909
        %v4240 = vunpack.c.l.b16 %v3910
        %v4241 = vunpack.c.h.b16 %v3910
        %v4242 = vunpack.c.l.b16 %v3911
        %v4243 = vunpack.c.h.b16 %v3911
        %v4244 = vunpack.c.l.b16 %v3912
        %v4245 = vunpack.c.h.b16 %v3912
        %v4246 = vunpack.c.l.b16 %v3913
        %v4247 = vunpack.c.h.b16 %v3913
        %v4248 = vunpack.c.l.b16 %v3914
        %v4249 = vunpack.c.h.b16 %v3914
        %v4250 = vunpack.c.l.b16 %v3915
        %v4251 = vunpack.c.h.b16 %v3915
        %v4252 = vunpack.c.l.b16 %v3916
        %v4253 = vunpack.c.h.b16 %v3916
        %v4254 = vunpack.c.l.b16 %v3917
        %v4255 = vunpack.c.h.b16 %v3917
        %v4256 = vunpack.c.l.b16 %v3918
        %v4257 = vunpack.c.h.b16 %v3918
        %v4258 = vunpack.c.l.b16 %v3919
        %v4259 = vunpack.c.h.b16 %v3919
        %v4260 = vunpack.c.l.b16 %v3920
        %v4261 = vunpack.c.h.b16 %v3920
        %v4262 = vunpack.c.l.b16 %v3921
        %v4263 = vunpack.c.h.b16 %v3921
        %v4264 = vunpack.c.l.b16 %v3922
        %v4265 = vunpack.c.h.b16 %v3922
        %v4266 = vunpack.c.l.b16 %v3923
        %v4267 = vunpack.c.h.b16 %v3923
        %v4268 = vunpack.c.l.b16 %v3924
        %v4269 = vunpack.c.h.b16 %v3924
        %v4270 = vunpack.c.l.b16 %v3925
        %v4271 = vunpack.c.h.b16 %v3925
        %v4272 = vunpack.c.l.b16 %v3926
        %v4273 = vunpack.c.h.b16 %v3926
        %v4274 = vunpack.c.l.b16 %v3927
        %v4275 = vunpack.c.h.b16 %v3927
        %v4276 = vunpack.c.l.b16 %v3928
        %v4277 = vunpack.c.h.b16 %v3928
        %v4278 = vunpack.c.l.b16 %v3929
        %v4279 = vunpack.c.h.b16 %v3929
        %v4280 = vunpack.c.l.b16 %v3930
        %v4281 = vunpack.c.h.b16 %v3930
        %v4282 = vunpack.c.l.b16 %v3931
        %v4283 = vunpack.c.h.b16 %v3931
        %v4284 = vunpack.c.l.b16 %v3932
        %v4285 = vunpack.c.h.b16 %v3932
        %v4286 = vunpack.c.l.b16 %v3933
        %v4287 = vunpack.c.h.b16 %v3933
        %v4288 = vunpack.c.l.b16 %v3934
        %v4289 = vunpack.c.h.b16 %v3934
        %v4290 = vunpack.c.l.b16 %v3935
        %v4291 = vunpack.c.h.b16 %v3935
        %v4292 = vunpack.c.l.b16 %v3936
        %v4293 = vunpack.c.h.b16 %v3936
        %v4294 = vunpack.c.l.b16 %v3937
        %v4295 = vunpack.c.h.b16 %v3937
        %v4296 = vunpack.c.l.b16 %v3938
        %v4297 = vunpack.c.h.b16 %v3938
        %v4298 = vunpack.c.l.b16 %v3939
        %v4299 = vunpack.c.h.b16 %v3939
        %v4300 = vunpack.c.l.b16 %v3940
        %v4301 = vunpack.c.h.b16 %v3940
        %v4302 = vunpack.c.l.b16 %v3941
        %v4303 = vunpack.c.h.b16 %v3941
        %v4304 = vunpack.c.l.b16 %v3942
        %v4305 = vunpack.c.h.b16 %v3942
        %v4306 = vunpack.c.l.b16 %v3943
        %v4307 = vunpack.c.h.b16 %v3943
        %v4308 = vunpack.c.l.b16 %v3944
        %v4309 = vunpack.c.h.b16 %v3944
        %v4310 = vunpack.c.l.b16 %v3945
        %v4311 = vunpack.c.h.b16 %v3945
        %v4312 = vunpack.c.l.b16 %v3946
        %v4313 = vunpack.c.h.b16 %v3946
        %v4314 = vunpack.c.l.b16 %v3947
        %v4315 = vunpack.c.h.b16 %v3947
        %v4316 = vunpack.c.l.b16 %v3948
        %v4317 = vunpack.c.h.b16 %v3948
        %v4318 = vunpack.c.l.b16 %v3949
        %v4319 = vunpack.c.h.b16 %v3949
        %v4320 = vunpack.c.l.b16 %v3950
        %v4321 = vunpack.c.h.b16 %v3950
        %v4322 = vunpack.c.l.b16 %v3951
        %v4323 = vunpack.c.h.b16 %v3951
        %v4324 = vunpack.c.l.b16 %v3952
        %v4325 = vunpack.c.h.b16 %v3952
        %v4326 = vunpack.c.l.b16 %v3953
        %v4327 = vunpack.c.h.b16 %v3953
        %v4328 = vunpack.c.l.b16 %v3954
        %v4329 = vunpack.c.h.b16 %v3954
        %v4330 = vunpack.c.l.b16 %v3955
        %v4331 = vunpack.c.h.b16 %v3955
        %v4332 = vunpack.c.l.b16 %v3956
        %v4333 = vunpack.c.h.b16 %v3956
        %v4334 = vunpack.c.l.b16 %v3957
        %v4335 = vunpack.c.h.b16 %v3957
        %v4336 = vunpack.c.l.b16 %v3958
        %v4337 = vunpack.c.h.b16 %v3958
        %v4338 = vunpack.c.l.b16 %v3959
        %v4339 = vunpack.c.h.b16 %v3959
        %v4340 = vunpack.c.l.b16 %v3960
        %v4341 = vunpack.c.h.b16 %v3960
        %v4342 = vunpack.c.l.b16 %v3961
        %v4343 = vunpack.c.h.b16 %v3961
        %v4344 = vunpack.c.l.b16 %v3962
        %v4345 = vunpack.c.h.b16 %v3962
        %v4346 = vunpack.c.l.b16 %v3963
        %v4347 = vunpack.c.h.b16 %v3963
        %v4348 = vunpack.c.l.b16 %v3964
        %v4349 = vunpack.c.h.b16 %v3964
        %v4350 = vpack.c.b16 %v4098, %v4094
        %v4351 = vpack.c.b16 %v4099, %v4095
        %v4352 = vpack.c.b16 %v4100, %v4096
        %v4353 = vpack.c.b16 %v4101, %v4097
        %v4354 = vpack.c.b16 %v4106, %v4102
        %v4355 = vpack.c.b16 %v4107, %v4103
        %v4356 = vpack.c.b16 %v4108, %v4104
        %v4357 = vpack.c.b16 %v4109, %v4105
        %v4358 = vpack.c.b16 %v4114, %v4110
        %v4359 = vpack.c.b16 %v4115, %v4111
        %v4360 = vpack.c.b16 %v4116, %v4112
        %v4361 = vpack.c.b16 %v4117, %v4113
        %v4362 = vpack.c.b16 %v4122, %v4118
        %v4363 = vpack.c.b16 %v4123, %v4119
        %v4364 = vpack.c.b16 %v4124, %v4120
        %v4365 = vpack.c.b16 %v4125, %v4121
        %v4366 = vpack.c.b16 %v4130, %v4126
        %v4367 = vpack.c.b16 %v4131, %v4127
        %v4368 = vpack.c.b16 %v4132, %v4128
        %v4369 = vpack.c.b16 %v4133, %v4129
        %v4370 = vpack.c.b16 %v4138, %v4134
        %v4371 = vpack.c.b16 %v4139, %v4135
        %v4372 = vpack.c.b16 %v4140, %v4136
        %v4373 = vpack.c.b16 %v4141, %v4137
        %v4374 = vpack.c.b16 %v4146, %v4142
        %v4375 = vpack.c.b16 %v4147, %v4143
        %v4376 = vpack.c.b16 %v4148, %v4144
        %v4377 = vpack.c.b16 %v4149, %v4145
        %v4378 = vpack.c.b16 %v4154, %v4150
        %v4379 = vpack.c.b16 %v4155, %v4151
        %v4380 = vpack.c.b16 %v4156, %v4152
        %v4381 = vpack.c.b16 %v4157, %v4153
        %v4382 = vpack.c.b16 %v4162, %v4158
        %v4383 = vpack.c.b16 %v4163, %v4159
        %v4384 = vpack.c.b16 %v4164, %v4160
        %v4385 = vpack.c.b16 %v4165, %v4161
        %v4386 = vpack.c.b16 %v4170, %v4166
        %v4387 = vpack.c.b16 %v4171, %v4167
        %v4388 = vpack.c.b16 %v4172, %v4168
        %v4389 = vpack.c.b16 %v4173, %v4169
        %v4390 = vpack.c.b16 %v4178, %v4174
        %v4391 = vpack.c.b16 %v4179, %v4175
        %v4392 = vpack.c.b16 %v4180, %v4176
        %v4393 = vpack.c.b16 %v4181, %v4177
        %v4394 = vpack.c.b16 %v4186, %v4182
        %v4395 = vpack.c.b16 %v4187, %v4183
        %v4396 = vpack.c.b16 %v4188, %v4184
        %v4397 = vpack.c.b16 %v4189, %v4185
        %v4398 = vpack.c.b16 %v4194, %v4190
        %v4399 = vpack.c.b16 %v4195, %v4191
        %v4400 = vpack.c.b16 %v4196, %v4192
        %v4401 = vpack.c.b16 %v4197, %v4193
        %v4402 = vpack.c.b16 %v4202, %v4198
        %v4403 = vpack.c.b16 %v4203, %v4199
        %v4404 = vpack.c.b16 %v4204, %v4200
        %v4405 = vpack.c.b16 %v4205, %v4201
        %v4406 = vpack.c.b16 %v4210, %v4206
        %v4407 = vpack.c.b16 %v4211, %v4207
        %v4408 = vpack.c.b16 %v4212, %v4208
        %v4409 = vpack.c.b16 %v4213, %v4209
        %v4410 = vpack.c.b16 %v4218, %v4214
        %v4411 = vpack.c.b16 %v4219, %v4215
        %v4412 = vpack.c.b16 %v4220, %v4216
        %v4413 = vpack.c.b16 %v4221, %v4217
        %v4414 = vpack.c.b16 %v4226, %v4222
        %v4415 = vpack.c.b16 %v4227, %v4223
        %v4416 = vpack.c.b16 %v4228, %v4224
        %v4417 = vpack.c.b16 %v4229, %v4225
        %v4418 = vpack.c.b16 %v4234, %v4230
        %v4419 = vpack.c.b16 %v4235, %v4231
        %v4420 = vpack.c.b16 %v4236, %v4232
        %v4421 = vpack.c.b16 %v4237, %v4233
        %v4422 = vpack.c.b16 %v4242, %v4238
        %v4423 = vpack.c.b16 %v4243, %v4239
        %v4424 = vpack.c.b16 %v4244, %v4240
        %v4425 = vpack.c.b16 %v4245, %v4241
        %v4426 = vpack.c.b16 %v4250, %v4246
        %v4427 = vpack.c.b16 %v4251, %v4247
        %v4428 = vpack.c.b16 %v4252, %v4248
        %v4429 = vpack.c.b16 %v4253, %v4249
        %v4430 = vpack.c.b16 %v4258, %v4254
        %v4431 = vpack.c.b16 %v4259, %v4255
        %v4432 = vpack.c.b16 %v4260, %v4256
        %v4433 = vpack.c.b16 %v4261, %v4257
        %v4434 = vpack.c.b16 %v4266, %v4262
        %v4435 = vpack.c.b16 %v4267, %v4263
        %v4436 = vpack.c.b16 %v4268, %v4264
        %v4437 = vpack.c.b16 %v4269, %v4265
        %v4438 = vpack.c.b16 %v4274, %v4270
        %v4439 = vpack.c.b16 %v4275, %v4271
        %v4440 = vpack.c.b16 %v4276, %v4272
        %v4441 = vpack.c.b16 %v4277, %v4273
        %v4442 = vpack.c.b16 %v4282, %v4278
        %v4443 = vpack.c.b16 %v4283, %v4279
        %v4444 = vpack.c.b16 %v4284, %v4280
        %v4445 = vpack.c.b16 %v4285, %v4281
        %v4446 = vpack.c.b16 %v4290, %v4286
        %v4447 = vpack.c.b16 %v4291, %v4287
        %v4448 = vpack.c.b16 %v4292, %v4288
        %v4449 = vpack.c.b16 %v4293, %v4289
        %v4450 = vpack.c.b16 %v4298, %v4294
        %v4451 = vpack.c.b16 %v4299, %v4295
        %v4452 = vpack.c.b16 %v4300, %v4296
        %v4453 = vpack.c.b16 %v4301, %v4297
        %v4454 = vpack.c.b16 %v4306, %v4302
        %v4455 = vpack.c.b16 %v4307, %v4303
        %v4456 = vpack.c.b16 %v4308, %v4304
        %v4457 = vpack.c.b16 %v4309, %v4305
        %v4458 = vpack.c.b16 %v4314, %v4310
        %v4459 = vpack.c.b16 %v4315, %v4311
        %v4460 = vpack.c.b16 %v4316, %v4312
        %v4461 = vpack.c.b16 %v4317, %v4313
        %v4462 = vpack.c.b16 %v4322, %v4318
        %v4463 = vpack.c.b16 %v4323, %v4319
        %v4464 = vpack.c.b16 %v4324, %v4320
        %v4465 = vpack.c.b16 %v4325, %v4321
        %v4466 = vpack.c.b16 %v4330, %v4326
        %v4467 = vpack.c.b16 %v4331, %v4327
        %v4468 = vpack.c.b16 %v4332, %v4328
        %v4469 = vpack.c.b16 %v4333, %v4329
        %v4470 = vpack.c.b16 %v4338, %v4334
        %v4471 = vpack.c.b16 %v4339, %v4335
        %v4472 = vpack.c.b16 %v4340, %v4336
        %v4473 = vpack.c.b16 %v4341, %v4337
        %v4474 = vpack.c.b16 %v4346, %v4342
        %v4475 = vpack.c.b16 %v4347, %v4343
        %v4476 = vpack.c.b16 %v4348, %v4344
        %v4477 = vpack.c.b16 %v4349, %v4345
        %v4607 = vlaneseq
        %v4608 = vshrl.u32 %v4607, 7
        %v4609 = vsub.s32 0, %v4608
        %v4610 = vrot.slane %v3965, %v4609
        %v4611 = vlaneseq
        %v4612 = vshrl.u32 %v4611, 7
        %v4613 = vsub.s32 1, %v4612
        %v4614 = vrot.slane %v3965, %v4613
        %v4615 = vlaneseq
        %v4616 = vshrl.u32 %v4615, 7
        %v4617 = vsub.s32 2, %v4616
        %v4618 = vrot.slane %v3965, %v4617
        %v4619 = vlaneseq
        %v4620 = vshrl.u32 %v4619, 7
        %v4621 = vsub.s32 3, %v4620
        %v4622 = vrot.slane %v3965, %v4621
        %4627 = vmatprep.subr.bf16.mxu0 %v4351
        %4628 = vmatpush1.bf16.msra.mxu0 %v4350
        %4629 = vmatprep.subr.bf16.mxu0 %v4355
        %4630 = vmatpush1.bf16.msra.mxu0 %v4354
        %4631 = vmatprep.subr.bf16.mxu0 %v4359
        %4632 = vmatpush1.bf16.msra.mxu0 %v4358
        %4633 = vmatprep.subr.bf16.mxu0 %v4363
        %4634 = vmatpush1.bf16.msra.mxu0 %v4362
        %4635 = vmatprep.subr.bf16.mxu0 %v4367
        %4636 = vmatpush1.bf16.msra.mxu0 %v4366
        %4637 = vmatprep.subr.bf16.mxu0 %v4371
        %4638 = vmatpush1.bf16.msra.mxu0 %v4370
        %4639 = vmatprep.subr.bf16.mxu0 %v4375
        %4640 = vmatpush1.bf16.msra.mxu0 %v4374
        %4641 = vmatprep.subr.bf16.mxu0 %v4379
        %4642 = vmatpush1.bf16.msra.mxu0 %v4378
        %4643 = vmatprep.subr.bf16.mxu0 %v4383
        %4644 = vmatpush1.bf16.msra.mxu0 %v4382
        %4645 = vmatprep.subr.bf16.mxu0 %v4387
        %4646 = vmatpush1.bf16.msra.mxu0 %v4386
        %4647 = vmatprep.subr.bf16.mxu0 %v4391
        %4648 = vmatpush1.bf16.msra.mxu0 %v4390
        %4649 = vmatprep.subr.bf16.mxu0 %v4395
        %4650 = vmatpush1.bf16.msra.mxu0 %v4394
        %4651 = vmatprep.subr.bf16.mxu0 %v4399
        %4652 = vmatpush1.bf16.msra.mxu0 %v4398
        %4653 = vmatprep.subr.bf16.mxu0 %v4403
        %4654 = vmatpush1.bf16.msra.mxu0 %v4402
        %4655 = vmatprep.subr.bf16.mxu0 %v4407
        %4656 = vmatpush1.bf16.msra.mxu0 %v4406
        %4657 = vmatprep.subr.bf16.mxu0 %v4411
        %4658 = vmatpush1.bf16.msra.mxu0 %v4410
        %4659 = vmatprep.mubr.bf16.mxu0 %v3834
        %4660 = vmatmul.mubr.bf16.gmra.mrb[0].mxu0 %v3833
        %v4661 = vpop.f32.mrb[0].mxu0
        %v4662 = vadd.f32 %v4610, %v4661
        %v4663 = vpop.f32.mrb[0].mxu0
        %v4664 = vadd.f32 %v4614, %v4663
        %v4665 = vpop.f32.mrb[0].mxu0
        %v4666 = vpop.f32.mrb[0].mxu0
        %4667 = vdwg.mxu0
        %4668 = vmatprep.subr.bf16.mxu0 %v4415
        %4669 = vmatpush1.bf16.msra.mxu0 %v4414
        %4670 = vmatprep.subr.bf16.mxu0 %v4419
        %4671 = vmatpush1.bf16.msra.mxu0 %v4418
        %4672 = vmatprep.subr.bf16.mxu0 %v4423
        %4673 = vmatpush1.bf16.msra.mxu0 %v4422
        %4674 = vmatprep.subr.bf16.mxu0 %v4427
        %4675 = vmatpush1.bf16.msra.mxu0 %v4426
        %4676 = vmatprep.subr.bf16.mxu0 %v4431
        %4677 = vmatpush1.bf16.msra.mxu0 %v4430
        %4678 = vmatprep.subr.bf16.mxu0 %v4435
        %4679 = vmatpush1.bf16.msra.mxu0 %v4434
        %4680 = vmatprep.subr.bf16.mxu0 %v4439
        %4681 = vmatpush1.bf16.msra.mxu0 %v4438
        %4682 = vmatprep.subr.bf16.mxu0 %v4443
        %4683 = vmatpush1.bf16.msra.mxu0 %v4442
        %4684 = vmatprep.subr.bf16.mxu0 %v4447
        %4685 = vmatpush1.bf16.msra.mxu0 %v4446
        %4686 = vmatprep.subr.bf16.mxu0 %v4451
        %4687 = vmatpush1.bf16.msra.mxu0 %v4450
        %4688 = vmatprep.subr.bf16.mxu0 %v4455
        %4689 = vmatpush1.bf16.msra.mxu0 %v4454
        %4690 = vmatprep.subr.bf16.mxu0 %v4459
        %4691 = vmatpush1.bf16.msra.mxu0 %v4458
        %4692 = vmatprep.subr.bf16.mxu0 %v4463
        %4693 = vmatpush1.bf16.msra.mxu0 %v4462
        %4694 = vmatprep.subr.bf16.mxu0 %v4467
        %4695 = vmatpush1.bf16.msra.mxu0 %v4466
        %4696 = vmatprep.subr.bf16.mxu0 %v4471
        %4697 = vmatpush1.bf16.msra.mxu0 %v4470
        %4698 = vmatprep.subr.bf16.mxu0 %v4475
        %4699 = vmatpush1.bf16.msra.mxu0 %v4474
        %4700 = vmatprep.mubr.bf16.mxu0 %v3836
        %4701 = vmatmul.mubr.bf16.gmra.mrb[0].mxu0 %v3835
        %v4702 = vpop.f32.mrb[0].mxu0
        %v4703 = vadd.f32 %v4662, %v4702
        %v4704 = vpop.f32.mrb[0].mxu0
        %v4705 = vadd.f32 %v4664, %v4704
        %v4706 = vpop.f32.mrb[0].mxu0
        %v4707 = vpop.f32.mrb[0].mxu0
        %4708 = vdwg.mxu0
        %4709 = vmatprep.subr.bf16.mxu0 %v4353
        %4710 = vmatpush1.bf16.msra.mxu0 %v4352
        %4711 = vmatprep.subr.bf16.mxu0 %v4357
        %4712 = vmatpush1.bf16.msra.mxu0 %v4356
        %4713 = vmatprep.subr.bf16.mxu0 %v4361
        %4714 = vmatpush1.bf16.msra.mxu0 %v4360
        %4715 = vmatprep.subr.bf16.mxu0 %v4365
        %4716 = vmatpush1.bf16.msra.mxu0 %v4364
        %4717 = vmatprep.subr.bf16.mxu0 %v4369
        %4718 = vmatpush1.bf16.msra.mxu0 %v4368
        %4719 = vmatprep.subr.bf16.mxu0 %v4373
        %4720 = vmatpush1.bf16.msra.mxu0 %v4372
        %4721 = vmatprep.subr.bf16.mxu0 %v4377
        %4722 = vmatpush1.bf16.msra.mxu0 %v4376
        %4723 = vmatprep.subr.bf16.mxu0 %v4381
        %4724 = vmatpush1.bf16.msra.mxu0 %v4380
        %4725 = vmatprep.subr.bf16.mxu0 %v4385
        %4726 = vmatpush1.bf16.msra.mxu0 %v4384
        %4727 = vmatprep.subr.bf16.mxu0 %v4389
        %4728 = vmatpush1.bf16.msra.mxu0 %v4388
        %4729 = vmatprep.subr.bf16.mxu0 %v4393
        %4730 = vmatpush1.bf16.msra.mxu0 %v4392
        %4731 = vmatprep.subr.bf16.mxu0 %v4397
        %4732 = vmatpush1.bf16.msra.mxu0 %v4396
        %4733 = vmatprep.subr.bf16.mxu0 %v4401
        %4734 = vmatpush1.bf16.msra.mxu0 %v4400
        %4735 = vmatprep.subr.bf16.mxu0 %v4405
        %4736 = vmatpush1.bf16.msra.mxu0 %v4404
        %4737 = vmatprep.subr.bf16.mxu0 %v4409
        %4738 = vmatpush1.bf16.msra.mxu0 %v4408
        %4739 = vmatprep.subr.bf16.mxu0 %v4413
        %4740 = vmatpush1.bf16.msra.mxu0 %v4412
        %4741 = vmatprep.mubr.bf16.mxu0 %v3834
        %4742 = vmatmul.mubr.bf16.gmra.mrb[0].mxu0 %v3833
        %v4743 = vpop.f32.mrb[0].mxu0
        %v4744 = vadd.f32 %v4618, %v4743
        %v4745 = vpop.f32.mrb[0].mxu0
        %v4746 = vadd.f32 %v4622, %v4745
        %v4747 = vpop.f32.mrb[0].mxu0
        %v4748 = vpop.f32.mrb[0].mxu0
        %4749 = vdwg.mxu0
        %4750 = vmatprep.subr.bf16.mxu0 %v4417
        %4751 = vmatpush1.bf16.msra.mxu0 %v4416
        %4752 = vmatprep.subr.bf16.mxu0 %v4421
        %4753 = vmatpush1.bf16.msra.mxu0 %v4420
        %4754 = vmatprep.subr.bf16.mxu0 %v4425
        %4755 = vmatpush1.bf16.msra.mxu0 %v4424
        %4756 = vmatprep.subr.bf16.mxu0 %v4429
        %4757 = vmatpush1.bf16.msra.mxu0 %v4428
        %4758 = vmatprep.subr.bf16.mxu0 %v4433
        %4759 = vmatpush1.bf16.msra.mxu0 %v4432
        %4760 = vmatprep.subr.bf16.mxu0 %v4437
        %4761 = vmatpush1.bf16.msra.mxu0 %v4436
        %4762 = vmatprep.subr.bf16.mxu0 %v4441
        %4763 = vmatpush1.bf16.msra.mxu0 %v4440
        %4764 = vmatprep.subr.bf16.mxu0 %v4445
        %4765 = vmatpush1.bf16.msra.mxu0 %v4444
        %4766 = vmatprep.subr.bf16.mxu0 %v4449
        %4767 = vmatpush1.bf16.msra.mxu0 %v4448
        %4768 = vmatprep.subr.bf16.mxu0 %v4453
        %4769 = vmatpush1.bf16.msra.mxu0 %v4452
        %4770 = vmatprep.subr.bf16.mxu0 %v4457
        %4771 = vmatpush1.bf16.msra.mxu0 %v4456
        %4772 = vmatprep.subr.bf16.mxu0 %v4461
        %4773 = vmatpush1.bf16.msra.mxu0 %v4460
        %4774 = vmatprep.subr.bf16.mxu0 %v4465
        %4775 = vmatpush1.bf16.msra.mxu0 %v4464
        %4776 = vmatprep.subr.bf16.mxu0 %v4469
        %4777 = vmatpush1.bf16.msra.mxu0 %v4468
        %4778 = vmatprep.subr.bf16.mxu0 %v4473
        %4779 = vmatpush1.bf16.msra.mxu0 %v4472
        %4780 = vmatprep.subr.bf16.mxu0 %v4477
        %4781 = vmatpush1.bf16.msra.mxu0 %v4476
        %4782 = vmatprep.mubr.bf16.mxu0 %v3836
        %4783 = vmatmul.mubr.bf16.gmra.mrb[0].mxu0 %v3835
        %v4784 = vpop.f32.mrb[0].mxu0
        %v4785 = vadd.f32 %v4744, %v4784
        %v4786 = vpop.f32.mrb[0].mxu0
        %v4787 = vadd.f32 %v4746, %v4786
        %v4788 = vpop.f32.mrb[0].mxu0
        %v4789 = vpop.f32.mrb[0].mxu0
        %4790 = vdwg.mxu0
        %vm4791 = vcmask 1040384
        %v4792 = vsel %vm4791, %v4703, 0.0
        %v4793 = vsel %vm4791, %v4705, 0.0
        %v4794 = vadd.f32 %v4792, %v4793
        %v4795 = vsel %vm4791, %v4785, 0.0
        %v4796 = vadd.f32 %v4794, %v4795
        %v4797 = vsel %vm4791, %v4787, 0.0
        %v4798 = vadd.f32 %v4796, %v4797
        %4799 = vadd.xlane.f32.xlu0 %v4798
        %v4800 = vpop.xlane.xlu0 %4799
        %v4801 = vmul.f32 %v4800, %v3691
        %v4802 = vsub.f32 %v4703, %v4801
        %v4803 = vsub.f32 %v4705, %v4801
        %v4804 = vsub.f32 %v4785, %v4801
        %v4805 = vsub.f32 %v4787, %v4801
        %v4806 = vmul.f32 %v4802, %v4802
        %v4807 = vmul.f32 %v4803, %v4803
        %v4808 = vmul.f32 %v4804, %v4804
        %v4809 = vmul.f32 %v4805, %v4805
        %v4810 = vsel %vm4791, %v4806, 0.0
        %v4811 = vsel %vm4791, %v4807, 0.0
        %v4812 = vadd.f32 %v4810, %v4811
        %v4813 = vsel %vm4791, %v4808, 0.0
        %v4814 = vadd.f32 %v4812, %v4813
        %v4815 = vsel %vm4791, %v4809, 0.0
        %v4816 = vadd.f32 %v4814, %v4815
        %4817 = vadd.xlane.f32.xlu0 %v4816
        %v4818 = vpop.xlane.xlu0 %4817
        %v4819 = vmul.f32 %v4818, %v3691
        %v4820 = vadd.f32 %v4819, 1e-05
        %v4821 = vrsqrt.pop %v4820
        %v4822 = vmul.f32 %v4802, %v4821
        %v4823 = vmul.f32 %v4803, %v4821
        %v4824 = vmul.f32 %v4804, %v4821
        %v4825 = vmul.f32 %v4805, %v4821
        %v4826 = vmul.f32 %v4822, %v3717
        %v4827 = vmul.f32 %v4823, %v3721
        %v4828 = vmul.f32 %v4824, %v3725
        %v4829 = vmul.f32 %v4825, %v3729
        %v4830 = vadd.f32 %v4826, %v3742
        %v4831 = vadd.f32 %v4827, %v3746
        %v4832 = vadd.f32 %v4828, %v3750
        %v4833 = vadd.f32 %v4829, %v3754
        %v4838 = vcombine.low %v4830, %v4831
        %v4839 = vcombine.low %v4832, %v4833
        %v4841 = vunpack.c.l.s4 1966171168
        %v4842 = vunpack.c.0.s8 %v4841
        %v4843 = vlaneseq
        %v4844 = vshrl.u32 %v4843, 7
        %v4845 = vsub.s32 %v4842, %v4844
        %v4846 = vrot.slane %v4838, %v4845
        %v4848 = vunpack.c.l.s4 1966171168
        %v4849 = vunpack.c.0.s8 %v4848
        %v4850 = vlaneseq
        %v4851 = vshrl.u32 %v4850, 7
        %v4852 = vsub.s32 %v4849, %v4851
        %v4853 = vrot.slane %v4839, %v4852
        %v4854 = vcombine.low %v4846, %v4853
        %v4856 = vunpack.c.l.s4 1966171168
        %v4857 = vunpack.c.0.s8 %v4856
        %v4858 = vlaneseq
        %v4859 = vshrl.u32 %v4858, 7
        %v4860 = vsub.s32 %v4857, %v4859
        %v4861 = vrot.slane %v4854, %v4860
        %v4863 = vlaneseq
        %vm4864 = vcmp.ge.s32.totalorder %v4863, 0
        %vm4865 = vcmp.lt.s32.totalorder %v4863, 512
        %vm4866 = vmand %vm4864, %vm4865
        %4867 = vst.msk [vmem:[%s798] sm:$0xf] %vm4866, %v4861
        %v4868 = vpack.c.bf16 %v4830, %v4830
        %v4869 = vpack.c.bf16 %v4831, %v4831
        %v4870 = vpack.c.bf16 %v4832, %v4832
        %v4871 = vpack.c.bf16 %v4833, %v4833
        %v4872 = vld [vmem:[#allocation8] sm:$0xff]
        %v4873 = vld [vmem:[#allocation8 + $0x8] sm:$0xff]
        %v4874 = vld [vmem:[#allocation8 + $0x10] sm:$0xff]
        %v4875 = vld [vmem:[#allocation8 + $0x18] sm:$0xff]
        %v4876 = vld [vmem:[#allocation8 + $0x20] sm:$0xff]
        %v4877 = vld [vmem:[#allocation8 + $0x28] sm:$0xff]
        %v4878 = vld [vmem:[#allocation8 + $0x30] sm:$0xff]
        %v4879 = vld [vmem:[#allocation8 + $0x38] sm:$0xff]
        %v4880 = vld [vmem:[#allocation8 + $0x40] sm:$0xff]
        %v4881 = vld [vmem:[#allocation8 + $0x48] sm:$0xff]
        %v4882 = vld [vmem:[#allocation8 + $0x50] sm:$0xff]
        %v4883 = vld [vmem:[#allocation8 + $0x58] sm:$0xff]
        %v4884 = vld [vmem:[#allocation8 + $0x60] sm:$0xff]
        %v4885 = vld [vmem:[#allocation8 + $0x68] sm:$0xff]
        %v4886 = vld [vmem:[#allocation8 + $0x70] sm:$0xff]
        %v4887 = vld [vmem:[#allocation8 + $0x78] sm:$0xff]
        %v4888 = vld [vmem:[#allocation8 + $0x80] sm:$0xff]
        %v4889 = vld [vmem:[#allocation8 + $0x88] sm:$0xff]
        %v4890 = vld [vmem:[#allocation8 + $0x90] sm:$0xff]
        %v4891 = vld [vmem:[#allocation8 + $0x98] sm:$0xff]
        %v4892 = vld [vmem:[#allocation8 + $0xa0] sm:$0xff]
        %v4893 = vld [vmem:[#allocation8 + $0xa8] sm:$0xff]
        %v4894 = vld [vmem:[#allocation8 + $0xb0] sm:$0xff]
        %v4895 = vld [vmem:[#allocation8 + $0xb8] sm:$0xff]
        %v4896 = vld [vmem:[#allocation8 + $0xc0] sm:$0xff]
        %v4897 = vld [vmem:[#allocation8 + $0xc8] sm:$0xff]
        %v4898 = vld [vmem:[#allocation8 + $0xd0] sm:$0xff]
        %v4899 = vld [vmem:[#allocation8 + $0xd8] sm:$0xff]
        %v4900 = vld [vmem:[#allocation8 + $0xe0] sm:$0xff]
        %v4901 = vld [vmem:[#allocation8 + $0xe8] sm:$0xff]
        %v4902 = vld [vmem:[#allocation8 + $0xf0] sm:$0xff]
        %v4903 = vld [vmem:[#allocation8 + $0xf8] sm:$0xff]
        %v4904 = vld [vmem:[#allocation8 + $0x100] sm:$0xff]
        %v4905 = vld [vmem:[#allocation8 + $0x108] sm:$0xff]
        %v4906 = vld [vmem:[#allocation8 + $0x110] sm:$0xff]
        %v4907 = vld [vmem:[#allocation8 + $0x118] sm:$0xff]
        %v4908 = vld [vmem:[#allocation8 + $0x120] sm:$0xff]
        %v4909 = vld [vmem:[#allocation8 + $0x128] sm:$0xff]
        %v4910 = vld [vmem:[#allocation8 + $0x130] sm:$0xff]
        %v4911 = vld [vmem:[#allocation8 + $0x138] sm:$0xff]
        %v4912 = vld [vmem:[#allocation8 + $0x140] sm:$0xff]
        %v4913 = vld [vmem:[#allocation8 + $0x148] sm:$0xff]
        %v4914 = vld [vmem:[#allocation8 + $0x150] sm:$0xff]
        %v4915 = vld [vmem:[#allocation8 + $0x158] sm:$0xff]
        %v4916 = vld [vmem:[#allocation8 + $0x160] sm:$0xff]
        %v4917 = vld [vmem:[#allocation8 + $0x168] sm:$0xff]
        %v4918 = vld [vmem:[#allocation8 + $0x170] sm:$0xff]
        %v4919 = vld [vmem:[#allocation8 + $0x178] sm:$0xff]
        %v4920 = vld [vmem:[#allocation8 + $0x180] sm:$0xff]
        %v4921 = vld [vmem:[#allocation8 + $0x188] sm:$0xff]
        %v4922 = vld [vmem:[#allocation8 + $0x190] sm:$0xff]
        %v4923 = vld [vmem:[#allocation8 + $0x198] sm:$0xff]
        %v4924 = vld [vmem:[#allocation8 + $0x1a0] sm:$0xff]
        %v4925 = vld [vmem:[#allocation8 + $0x1a8] sm:$0xff]
        %v4926 = vld [vmem:[#allocation8 + $0x1b0] sm:$0xff]
        %v4927 = vld [vmem:[#allocation8 + $0x1b8] sm:$0xff]
        %v4928 = vld [vmem:[#allocation8 + $0x1c0] sm:$0xff]
        %v4929 = vld [vmem:[#allocation8 + $0x1c8] sm:$0xff]
        %v4930 = vld [vmem:[#allocation8 + $0x1d0] sm:$0xff]
        %v4931 = vld [vmem:[#allocation8 + $0x1d8] sm:$0xff]
        %v4932 = vld [vmem:[#allocation8 + $0x1e0] sm:$0xff]
        %v4933 = vld [vmem:[#allocation8 + $0x1e8] sm:$0xff]
        %v4934 = vld [vmem:[#allocation8 + $0x1f0] sm:$0xff]
        %v4935 = vld [vmem:[#allocation8 + $0x1f8] sm:$0xff]
        %v4936 = vld [vmem:[#allocation8 + $0x200] sm:$0xff]
        %v4937 = vld [vmem:[#allocation8 + $0x208] sm:$0xff]
        %v4938 = vld [vmem:[#allocation8 + $0x210] sm:$0xff]
        %v4939 = vld [vmem:[#allocation8 + $0x218] sm:$0xff]
        %v4940 = vld [vmem:[#allocation8 + $0x220] sm:$0xff]
        %v4941 = vld [vmem:[#allocation8 + $0x228] sm:$0xff]
        %v4942 = vld [vmem:[#allocation8 + $0x230] sm:$0xff]
        %v4943 = vld [vmem:[#allocation8 + $0x238] sm:$0xff]
        %v4944 = vld [vmem:[#allocation8 + $0x240] sm:$0xff]
        %v4945 = vld [vmem:[#allocation8 + $0x248] sm:$0xff]
        %v4946 = vld [vmem:[#allocation8 + $0x250] sm:$0xff]
        %v4947 = vld [vmem:[#allocation8 + $0x258] sm:$0xff]
        %v4948 = vld [vmem:[#allocation8 + $0x260] sm:$0xff]
        %v4949 = vld [vmem:[#allocation8 + $0x268] sm:$0xff]
        %v4950 = vld [vmem:[#allocation8 + $0x270] sm:$0xff]
        %v4951 = vld [vmem:[#allocation8 + $0x278] sm:$0xff]
        %v4952 = vld [vmem:[#allocation8 + $0x280] sm:$0xff]
        %v4953 = vld [vmem:[#allocation8 + $0x288] sm:$0xff]
        %v4954 = vld [vmem:[#allocation8 + $0x290] sm:$0xff]
        %v4955 = vld [vmem:[#allocation8 + $0x298] sm:$0xff]
        %v4956 = vld [vmem:[#allocation8 + $0x2a0] sm:$0xff]
        %v4957 = vld [vmem:[#allocation8 + $0x2a8] sm:$0xff]
        %v4958 = vld [vmem:[#allocation8 + $0x2b0] sm:$0xff]
        %v4959 = vld [vmem:[#allocation8 + $0x2b8] sm:$0xff]
        %v4960 = vld [vmem:[#allocation8 + $0x2c0] sm:$0xff]
        %v4961 = vld [vmem:[#allocation8 + $0x2c8] sm:$0xff]
        %v4962 = vld [vmem:[#allocation8 + $0x2d0] sm:$0xff]
        %v4963 = vld [vmem:[#allocation8 + $0x2d8] sm:$0xff]
        %v4964 = vld [vmem:[#allocation8 + $0x2e0] sm:$0xff]
        %v4965 = vld [vmem:[#allocation8 + $0x2e8] sm:$0xff]
        %v4966 = vld [vmem:[#allocation8 + $0x2f0] sm:$0xff]
        %v4967 = vld [vmem:[#allocation8 + $0x2f8] sm:$0xff]
        %v4968 = vld [vmem:[#allocation8 + $0x300] sm:$0xff]
        %v4969 = vld [vmem:[#allocation8 + $0x308] sm:$0xff]
        %v4970 = vld [vmem:[#allocation8 + $0x310] sm:$0xff]
        %v4971 = vld [vmem:[#allocation8 + $0x318] sm:$0xff]
        %v4972 = vld [vmem:[#allocation8 + $0x320] sm:$0xff]
        %v4973 = vld [vmem:[#allocation8 + $0x328] sm:$0xff]
        %v4974 = vld [vmem:[#allocation8 + $0x330] sm:$0xff]
        %v4975 = vld [vmem:[#allocation8 + $0x338] sm:$0xff]
        %v4976 = vld [vmem:[#allocation8 + $0x340] sm:$0xff]
        %v4977 = vld [vmem:[#allocation8 + $0x348] sm:$0xff]
        %v4978 = vld [vmem:[#allocation8 + $0x350] sm:$0xff]
        %v4979 = vld [vmem:[#allocation8 + $0x358] sm:$0xff]
        %v4980 = vld [vmem:[#allocation8 + $0x360] sm:$0xff]
        %v4981 = vld [vmem:[#allocation8 + $0x368] sm:$0xff]
        %v4982 = vld [vmem:[#allocation8 + $0x370] sm:$0xff]
        %v4983 = vld [vmem:[#allocation8 + $0x378] sm:$0xff]
        %v4984 = vld [vmem:[#allocation8 + $0x380] sm:$0xff]
        %v4985 = vld [vmem:[#allocation8 + $0x388] sm:$0xff]
        %v4986 = vld [vmem:[#allocation8 + $0x390] sm:$0xff]
        %v4987 = vld [vmem:[#allocation8 + $0x398] sm:$0xff]
        %v4988 = vld [vmem:[#allocation8 + $0x3a0] sm:$0xff]
        %v4989 = vld [vmem:[#allocation8 + $0x3a8] sm:$0xff]
        %v4990 = vld [vmem:[#allocation8 + $0x3b0] sm:$0xff]
        %v4991 = vld [vmem:[#allocation8 + $0x3b8] sm:$0xff]
        %v4992 = vld [vmem:[#allocation8 + $0x3c0] sm:$0xff]
        %v4993 = vld [vmem:[#allocation8 + $0x3c8] sm:$0xff]
        %v4994 = vld [vmem:[#allocation8 + $0x3d0] sm:$0xff]
        %v4995 = vld [vmem:[#allocation8 + $0x3d8] sm:$0xff]
        %v4996 = vld [vmem:[#allocation8 + $0x3e0] sm:$0xff]
        %v4997 = vld [vmem:[#allocation8 + $0x3e8] sm:$0xff]
        %v4998 = vld [vmem:[#allocation8 + $0x3f0] sm:$0xff]
        %v4999 = vld [vmem:[#allocation8 + $0x3f8] sm:$0xff]
        %v5000 = vld [vmem:[%s12] sm:$0xf]
        %v5129 = vunpack.c.l.b16 %v4872
        %v5130 = vunpack.c.h.b16 %v4872
        %v5131 = vunpack.c.l.b16 %v4873
        %v5132 = vunpack.c.h.b16 %v4873
        %v5133 = vunpack.c.l.b16 %v4874
        %v5134 = vunpack.c.h.b16 %v4874
        %v5135 = vunpack.c.l.b16 %v4875
        %v5136 = vunpack.c.h.b16 %v4875
        %v5137 = vunpack.c.l.b16 %v4876
        %v5138 = vunpack.c.h.b16 %v4876
        %v5139 = vunpack.c.l.b16 %v4877
        %v5140 = vunpack.c.h.b16 %v4877
        %v5141 = vunpack.c.l.b16 %v4878
        %v5142 = vunpack.c.h.b16 %v4878
        %v5143 = vunpack.c.l.b16 %v4879
        %v5144 = vunpack.c.h.b16 %v4879
        %v5145 = vunpack.c.l.b16 %v4880
        %v5146 = vunpack.c.h.b16 %v4880
        %v5147 = vunpack.c.l.b16 %v4881
        %v5148 = vunpack.c.h.b16 %v4881
        %v5149 = vunpack.c.l.b16 %v4882
        %v5150 = vunpack.c.h.b16 %v4882
        %v5151 = vunpack.c.l.b16 %v4883
        %v5152 = vunpack.c.h.b16 %v4883
        %v5153 = vunpack.c.l.b16 %v4884
        %v5154 = vunpack.c.h.b16 %v4884
        %v5155 = vunpack.c.l.b16 %v4885
        %v5156 = vunpack.c.h.b16 %v4885
        %v5157 = vunpack.c.l.b16 %v4886
        %v5158 = vunpack.c.h.b16 %v4886
        %v5159 = vunpack.c.l.b16 %v4887
        %v5160 = vunpack.c.h.b16 %v4887
        %v5161 = vunpack.c.l.b16 %v4888
        %v5162 = vunpack.c.h.b16 %v4888
        %v5163 = vunpack.c.l.b16 %v4889
        %v5164 = vunpack.c.h.b16 %v4889
        %v5165 = vunpack.c.l.b16 %v4890
        %v5166 = vunpack.c.h.b16 %v4890
        %v5167 = vunpack.c.l.b16 %v4891
        %v5168 = vunpack.c.h.b16 %v4891
        %v5169 = vunpack.c.l.b16 %v4892
        %v5170 = vunpack.c.h.b16 %v4892
        %v5171 = vunpack.c.l.b16 %v4893
        %v5172 = vunpack.c.h.b16 %v4893
        %v5173 = vunpack.c.l.b16 %v4894
        %v5174 = vunpack.c.h.b16 %v4894
        %v5175 = vunpack.c.l.b16 %v4895
        %v5176 = vunpack.c.h.b16 %v4895
        %v5177 = vunpack.c.l.b16 %v4896
        %v5178 = vunpack.c.h.b16 %v4896
        %v5179 = vunpack.c.l.b16 %v4897
        %v5180 = vunpack.c.h.b16 %v4897
        %v5181 = vunpack.c.l.b16 %v4898
        %v5182 = vunpack.c.h.b16 %v4898
        %v5183 = vunpack.c.l.b16 %v4899
        %v5184 = vunpack.c.h.b16 %v4899
        %v5185 = vunpack.c.l.b16 %v4900
        %v5186 = vunpack.c.h.b16 %v4900
        %v5187 = vunpack.c.l.b16 %v4901
        %v5188 = vunpack.c.h.b16 %v4901
        %v5189 = vunpack.c.l.b16 %v4902
        %v5190 = vunpack.c.h.b16 %v4902
        %v5191 = vunpack.c.l.b16 %v4903
        %v5192 = vunpack.c.h.b16 %v4903
        %v5193 = vunpack.c.l.b16 %v4904
        %v5194 = vunpack.c.h.b16 %v4904
        %v5195 = vunpack.c.l.b16 %v4905
        %v5196 = vunpack.c.h.b16 %v4905
        %v5197 = vunpack.c.l.b16 %v4906
        %v5198 = vunpack.c.h.b16 %v4906
        %v5199 = vunpack.c.l.b16 %v4907
        %v5200 = vunpack.c.h.b16 %v4907
        %v5201 = vunpack.c.l.b16 %v4908
        %v5202 = vunpack.c.h.b16 %v4908
        %v5203 = vunpack.c.l.b16 %v4909
        %v5204 = vunpack.c.h.b16 %v4909
        %v5205 = vunpack.c.l.b16 %v4910
        %v5206 = vunpack.c.h.b16 %v4910
        %v5207 = vunpack.c.l.b16 %v4911
        %v5208 = vunpack.c.h.b16 %v4911
        %v5209 = vunpack.c.l.b16 %v4912
        %v5210 = vunpack.c.h.b16 %v4912
        %v5211 = vunpack.c.l.b16 %v4913
        %v5212 = vunpack.c.h.b16 %v4913
        %v5213 = vunpack.c.l.b16 %v4914
        %v5214 = vunpack.c.h.b16 %v4914
        %v5215 = vunpack.c.l.b16 %v4915
        %v5216 = vunpack.c.h.b16 %v4915
        %v5217 = vunpack.c.l.b16 %v4916
        %v5218 = vunpack.c.h.b16 %v4916
        %v5219 = vunpack.c.l.b16 %v4917
        %v5220 = vunpack.c.h.b16 %v4917
        %v5221 = vunpack.c.l.b16 %v4918
        %v5222 = vunpack.c.h.b16 %v4918
        %v5223 = vunpack.c.l.b16 %v4919
        %v5224 = vunpack.c.h.b16 %v4919
        %v5225 = vunpack.c.l.b16 %v4920
        %v5226 = vunpack.c.h.b16 %v4920
        %v5227 = vunpack.c.l.b16 %v4921
        %v5228 = vunpack.c.h.b16 %v4921
        %v5229 = vunpack.c.l.b16 %v4922
        %v5230 = vunpack.c.h.b16 %v4922
        %v5231 = vunpack.c.l.b16 %v4923
        %v5232 = vunpack.c.h.b16 %v4923
        %v5233 = vunpack.c.l.b16 %v4924
        %v5234 = vunpack.c.h.b16 %v4924
        %v5235 = vunpack.c.l.b16 %v4925
        %v5236 = vunpack.c.h.b16 %v4925
        %v5237 = vunpack.c.l.b16 %v4926
        %v5238 = vunpack.c.h.b16 %v4926
        %v5239 = vunpack.c.l.b16 %v4927
        %v5240 = vunpack.c.h.b16 %v4927
        %v5241 = vunpack.c.l.b16 %v4928
        %v5242 = vunpack.c.h.b16 %v4928
        %v5243 = vunpack.c.l.b16 %v4929
        %v5244 = vunpack.c.h.b16 %v4929
        %v5245 = vunpack.c.l.b16 %v4930
        %v5246 = vunpack.c.h.b16 %v4930
        %v5247 = vunpack.c.l.b16 %v4931
        %v5248 = vunpack.c.h.b16 %v4931
        %v5249 = vunpack.c.l.b16 %v4932
        %v5250 = vunpack.c.h.b16 %v4932
        %v5251 = vunpack.c.l.b16 %v4933
        %v5252 = vunpack.c.h.b16 %v4933
        %v5253 = vunpack.c.l.b16 %v4934
        %v5254 = vunpack.c.h.b16 %v4934
        %v5255 = vunpack.c.l.b16 %v4935
        %v5256 = vunpack.c.h.b16 %v4935
        %v5257 = vunpack.c.l.b16 %v4936
        %v5258 = vunpack.c.h.b16 %v4936
        %v5259 = vunpack.c.l.b16 %v4937
        %v5260 = vunpack.c.h.b16 %v4937
        %v5261 = vunpack.c.l.b16 %v4938
        %v5262 = vunpack.c.h.b16 %v4938
        %v5263 = vunpack.c.l.b16 %v4939
        %v5264 = vunpack.c.h.b16 %v4939
        %v5265 = vunpack.c.l.b16 %v4940
        %v5266 = vunpack.c.h.b16 %v4940
        %v5267 = vunpack.c.l.b16 %v4941
        %v5268 = vunpack.c.h.b16 %v4941
        %v5269 = vunpack.c.l.b16 %v4942
        %v5270 = vunpack.c.h.b16 %v4942
        %v5271 = vunpack.c.l.b16 %v4943
        %v5272 = vunpack.c.h.b16 %v4943
        %v5273 = vunpack.c.l.b16 %v4944
        %v5274 = vunpack.c.h.b16 %v4944
        %v5275 = vunpack.c.l.b16 %v4945
        %v5276 = vunpack.c.h.b16 %v4945
        %v5277 = vunpack.c.l.b16 %v4946
        %v5278 = vunpack.c.h.b16 %v4946
        %v5279 = vunpack.c.l.b16 %v4947
        %v5280 = vunpack.c.h.b16 %v4947
        %v5281 = vunpack.c.l.b16 %v4948
        %v5282 = vunpack.c.h.b16 %v4948
        %v5283 = vunpack.c.l.b16 %v4949
        %v5284 = vunpack.c.h.b16 %v4949
        %v5285 = vunpack.c.l.b16 %v4950
        %v5286 = vunpack.c.h.b16 %v4950
        %v5287 = vunpack.c.l.b16 %v4951
        %v5288 = vunpack.c.h.b16 %v4951
        %v5289 = vunpack.c.l.b16 %v4952
        %v5290 = vunpack.c.h.b16 %v4952
        %v5291 = vunpack.c.l.b16 %v4953
        %v5292 = vunpack.c.h.b16 %v4953
        %v5293 = vunpack.c.l.b16 %v4954
        %v5294 = vunpack.c.h.b16 %v4954
        %v5295 = vunpack.c.l.b16 %v4955
        %v5296 = vunpack.c.h.b16 %v4955
        %v5297 = vunpack.c.l.b16 %v4956
        %v5298 = vunpack.c.h.b16 %v4956
        %v5299 = vunpack.c.l.b16 %v4957
        %v5300 = vunpack.c.h.b16 %v4957
        %v5301 = vunpack.c.l.b16 %v4958
        %v5302 = vunpack.c.h.b16 %v4958
        %v5303 = vunpack.c.l.b16 %v4959
        %v5304 = vunpack.c.h.b16 %v4959
        %v5305 = vunpack.c.l.b16 %v4960
        %v5306 = vunpack.c.h.b16 %v4960
        %v5307 = vunpack.c.l.b16 %v4961
        %v5308 = vunpack.c.h.b16 %v4961
        %v5309 = vunpack.c.l.b16 %v4962
        %v5310 = vunpack.c.h.b16 %v4962
        %v5311 = vunpack.c.l.b16 %v4963
        %v5312 = vunpack.c.h.b16 %v4963
        %v5313 = vunpack.c.l.b16 %v4964
        %v5314 = vunpack.c.h.b16 %v4964
        %v5315 = vunpack.c.l.b16 %v4965
        %v5316 = vunpack.c.h.b16 %v4965
        %v5317 = vunpack.c.l.b16 %v4966
        %v5318 = vunpack.c.h.b16 %v4966
        %v5319 = vunpack.c.l.b16 %v4967
        %v5320 = vunpack.c.h.b16 %v4967
        %v5321 = vunpack.c.l.b16 %v4968
        %v5322 = vunpack.c.h.b16 %v4968
        %v5323 = vunpack.c.l.b16 %v4969
        %v5324 = vunpack.c.h.b16 %v4969
        %v5325 = vunpack.c.l.b16 %v4970
        %v5326 = vunpack.c.h.b16 %v4970
        %v5327 = vunpack.c.l.b16 %v4971
        %v5328 = vunpack.c.h.b16 %v4971
        %v5329 = vunpack.c.l.b16 %v4972
        %v5330 = vunpack.c.h.b16 %v4972
        %v5331 = vunpack.c.l.b16 %v4973
        %v5332 = vunpack.c.h.b16 %v4973
        %v5333 = vunpack.c.l.b16 %v4974
        %v5334 = vunpack.c.h.b16 %v4974
        %v5335 = vunpack.c.l.b16 %v4975
        %v5336 = vunpack.c.h.b16 %v4975
        %v5337 = vunpack.c.l.b16 %v4976
        %v5338 = vunpack.c.h.b16 %v4976
        %v5339 = vunpack.c.l.b16 %v4977
        %v5340 = vunpack.c.h.b16 %v4977
        %v5341 = vunpack.c.l.b16 %v4978
        %v5342 = vunpack.c.h.b16 %v4978
        %v5343 = vunpack.c.l.b16 %v4979
        %v5344 = vunpack.c.h.b16 %v4979
        %v5345 = vunpack.c.l.b16 %v4980
        %v5346 = vunpack.c.h.b16 %v4980
        %v5347 = vunpack.c.l.b16 %v4981
        %v5348 = vunpack.c.h.b16 %v4981
        %v5349 = vunpack.c.l.b16 %v4982
        %v5350 = vunpack.c.h.b16 %v4982
        %v5351 = vunpack.c.l.b16 %v4983
        %v5352 = vunpack.c.h.b16 %v4983
        %v5353 = vunpack.c.l.b16 %v4984
        %v5354 = vunpack.c.h.b16 %v4984
        %v5355 = vunpack.c.l.b16 %v4985
        %v5356 = vunpack.c.h.b16 %v4985
        %v5357 = vunpack.c.l.b16 %v4986
        %v5358 = vunpack.c.h.b16 %v4986
        %v5359 = vunpack.c.l.b16 %v4987
        %v5360 = vunpack.c.h.b16 %v4987
        %v5361 = vunpack.c.l.b16 %v4988
        %v5362 = vunpack.c.h.b16 %v4988
        %v5363 = vunpack.c.l.b16 %v4989
        %v5364 = vunpack.c.h.b16 %v4989
        %v5365 = vunpack.c.l.b16 %v4990
        %v5366 = vunpack.c.h.b16 %v4990
        %v5367 = vunpack.c.l.b16 %v4991
        %v5368 = vunpack.c.h.b16 %v4991
        %v5369 = vunpack.c.l.b16 %v4992
        %v5370 = vunpack.c.h.b16 %v4992
        %v5371 = vunpack.c.l.b16 %v4993
        %v5372 = vunpack.c.h.b16 %v4993
        %v5373 = vunpack.c.l.b16 %v4994
        %v5374 = vunpack.c.h.b16 %v4994
        %v5375 = vunpack.c.l.b16 %v4995
        %v5376 = vunpack.c.h.b16 %v4995
        %v5377 = vunpack.c.l.b16 %v4996
        %v5378 = vunpack.c.h.b16 %v4996
        %v5379 = vunpack.c.l.b16 %v4997
        %v5380 = vunpack.c.h.b16 %v4997
        %v5381 = vunpack.c.l.b16 %v4998
        %v5382 = vunpack.c.h.b16 %v4998
        %v5383 = vunpack.c.l.b16 %v4999
        %v5384 = vunpack.c.h.b16 %v4999
        %v5385 = vpack.c.b16 %v5133, %v5129
        %v5386 = vpack.c.b16 %v5134, %v5130
        %v5387 = vpack.c.b16 %v5135, %v5131
        %v5388 = vpack.c.b16 %v5136, %v5132
        %v5389 = vpack.c.b16 %v5141, %v5137
        %v5390 = vpack.c.b16 %v5142, %v5138
        %v5391 = vpack.c.b16 %v5143, %v5139
        %v5392 = vpack.c.b16 %v5144, %v5140
        %v5393 = vpack.c.b16 %v5149, %v5145
        %v5394 = vpack.c.b16 %v5150, %v5146
        %v5395 = vpack.c.b16 %v5151, %v5147
        %v5396 = vpack.c.b16 %v5152, %v5148
        %v5397 = vpack.c.b16 %v5157, %v5153
        %v5398 = vpack.c.b16 %v5158, %v5154
        %v5399 = vpack.c.b16 %v5159, %v5155
        %v5400 = vpack.c.b16 %v5160, %v5156
        %v5401 = vpack.c.b16 %v5165, %v5161
        %v5402 = vpack.c.b16 %v5166, %v5162
        %v5403 = vpack.c.b16 %v5167, %v5163
        %v5404 = vpack.c.b16 %v5168, %v5164
        %v5405 = vpack.c.b16 %v5173, %v5169
        %v5406 = vpack.c.b16 %v5174, %v5170
        %v5407 = vpack.c.b16 %v5175, %v5171
        %v5408 = vpack.c.b16 %v5176, %v5172
        %v5409 = vpack.c.b16 %v5181, %v5177
        %v5410 = vpack.c.b16 %v5182, %v5178
        %v5411 = vpack.c.b16 %v5183, %v5179
        %v5412 = vpack.c.b16 %v5184, %v5180
        %v5413 = vpack.c.b16 %v5189, %v5185
        %v5414 = vpack.c.b16 %v5190, %v5186
        %v5415 = vpack.c.b16 %v5191, %v5187
        %v5416 = vpack.c.b16 %v5192, %v5188
        %v5417 = vpack.c.b16 %v5197, %v5193
        %v5418 = vpack.c.b16 %v5198, %v5194
        %v5419 = vpack.c.b16 %v5199, %v5195
        %v5420 = vpack.c.b16 %v5200, %v5196
        %v5421 = vpack.c.b16 %v5205, %v5201
        %v5422 = vpack.c.b16 %v5206, %v5202
        %v5423 = vpack.c.b16 %v5207, %v5203
        %v5424 = vpack.c.b16 %v5208, %v5204
        %v5425 = vpack.c.b16 %v5213, %v5209
        %v5426 = vpack.c.b16 %v5214, %v5210
        %v5427 = vpack.c.b16 %v5215, %v5211
        %v5428 = vpack.c.b16 %v5216, %v5212
        %v5429 = vpack.c.b16 %v5221, %v5217
        %v5430 = vpack.c.b16 %v5222, %v5218
        %v5431 = vpack.c.b16 %v5223, %v5219
        %v5432 = vpack.c.b16 %v5224, %v5220
        %v5433 = vpack.c.b16 %v5229, %v5225
        %v5434 = vpack.c.b16 %v5230, %v5226
        %v5435 = vpack.c.b16 %v5231, %v5227
        %v5436 = vpack.c.b16 %v5232, %v5228
        %v5437 = vpack.c.b16 %v5237, %v5233
        %v5438 = vpack.c.b16 %v5238, %v5234
        %v5439 = vpack.c.b16 %v5239, %v5235
        %v5440 = vpack.c.b16 %v5240, %v5236
        %v5441 = vpack.c.b16 %v5245, %v5241
        %v5442 = vpack.c.b16 %v5246, %v5242
        %v5443 = vpack.c.b16 %v5247, %v5243
        %v5444 = vpack.c.b16 %v5248, %v5244
        %v5445 = vpack.c.b16 %v5253, %v5249
        %v5446 = vpack.c.b16 %v5254, %v5250
        %v5447 = vpack.c.b16 %v5255, %v5251
        %v5448 = vpack.c.b16 %v5256, %v5252
        %v5449 = vpack.c.b16 %v5261, %v5257
        %v5450 = vpack.c.b16 %v5262, %v5258
        %v5451 = vpack.c.b16 %v5263, %v5259
        %v5452 = vpack.c.b16 %v5264, %v5260
        %v5453 = vpack.c.b16 %v5269, %v5265
        %v5454 = vpack.c.b16 %v5270, %v5266
        %v5455 = vpack.c.b16 %v5271, %v5267
        %v5456 = vpack.c.b16 %v5272, %v5268
        %v5457 = vpack.c.b16 %v5277, %v5273
        %v5458 = vpack.c.b16 %v5278, %v5274
        %v5459 = vpack.c.b16 %v5279, %v5275
        %v5460 = vpack.c.b16 %v5280, %v5276
        %v5461 = vpack.c.b16 %v5285, %v5281
        %v5462 = vpack.c.b16 %v5286, %v5282
        %v5463 = vpack.c.b16 %v5287, %v5283
        %v5464 = vpack.c.b16 %v5288, %v5284
        %v5465 = vpack.c.b16 %v5293, %v5289
        %v5466 = vpack.c.b16 %v5294, %v5290
        %v5467 = vpack.c.b16 %v5295, %v5291
        %v5468 = vpack.c.b16 %v5296, %v5292
        %v5469 = vpack.c.b16 %v5301, %v5297
        %v5470 = vpack.c.b16 %v5302, %v5298
        %v5471 = vpack.c.b16 %v5303, %v5299
        %v5472 = vpack.c.b16 %v5304, %v5300
        %v5473 = vpack.c.b16 %v5309, %v5305
        %v5474 = vpack.c.b16 %v5310, %v5306
        %v5475 = vpack.c.b16 %v5311, %v5307
        %v5476 = vpack.c.b16 %v5312, %v5308
        %v5477 = vpack.c.b16 %v5317, %v5313
        %v5478 = vpack.c.b16 %v5318, %v5314
        %v5479 = vpack.c.b16 %v5319, %v5315
        %v5480 = vpack.c.b16 %v5320, %v5316
        %v5481 = vpack.c.b16 %v5325, %v5321
        %v5482 = vpack.c.b16 %v5326, %v5322
        %v5483 = vpack.c.b16 %v5327, %v5323
        %v5484 = vpack.c.b16 %v5328, %v5324
        %v5485 = vpack.c.b16 %v5333, %v5329
        %v5486 = vpack.c.b16 %v5334, %v5330
        %v5487 = vpack.c.b16 %v5335, %v5331
        %v5488 = vpack.c.b16 %v5336, %v5332
        %v5489 = vpack.c.b16 %v5341, %v5337
        %v5490 = vpack.c.b16 %v5342, %v5338
        %v5491 = vpack.c.b16 %v5343, %v5339
        %v5492 = vpack.c.b16 %v5344, %v5340
        %v5493 = vpack.c.b16 %v5349, %v5345
        %v5494 = vpack.c.b16 %v5350, %v5346
        %v5495 = vpack.c.b16 %v5351, %v5347
        %v5496 = vpack.c.b16 %v5352, %v5348
        %v5497 = vpack.c.b16 %v5357, %v5353
        %v5498 = vpack.c.b16 %v5358, %v5354
        %v5499 = vpack.c.b16 %v5359, %v5355
        %v5500 = vpack.c.b16 %v5360, %v5356
        %v5501 = vpack.c.b16 %v5365, %v5361
        %v5502 = vpack.c.b16 %v5366, %v5362
        %v5503 = vpack.c.b16 %v5367, %v5363
        %v5504 = vpack.c.b16 %v5368, %v5364
        %v5505 = vpack.c.b16 %v5373, %v5369
        %v5506 = vpack.c.b16 %v5374, %v5370
        %v5507 = vpack.c.b16 %v5375, %v5371
        %v5508 = vpack.c.b16 %v5376, %v5372
        %v5509 = vpack.c.b16 %v5381, %v5377
        %v5510 = vpack.c.b16 %v5382, %v5378
        %v5511 = vpack.c.b16 %v5383, %v5379
        %v5512 = vpack.c.b16 %v5384, %v5380
        %v5642 = vlaneseq
        %v5643 = vshrl.u32 %v5642, 7
        %v5644 = vsub.s32 0, %v5643
        %v5645 = vrot.slane %v5000, %v5644
        %v5646 = vlaneseq
        %v5647 = vshrl.u32 %v5646, 7
        %v5648 = vsub.s32 1, %v5647
        %v5649 = vrot.slane %v5000, %v5648
        %v5650 = vlaneseq
        %v5651 = vshrl.u32 %v5650, 7
        %v5652 = vsub.s32 2, %v5651
        %v5653 = vrot.slane %v5000, %v5652
        %v5654 = vlaneseq
        %v5655 = vshrl.u32 %v5654, 7
        %v5656 = vsub.s32 3, %v5655
        %v5657 = vrot.slane %v5000, %v5656
        %5662 = vmatprep.subr.bf16.mxu0 %v5386
        %5663 = vmatpush1.bf16.msra.mxu0 %v5385
        %5664 = vmatprep.subr.bf16.mxu0 %v5390
        %5665 = vmatpush1.bf16.msra.mxu0 %v5389
        %5666 = vmatprep.subr.bf16.mxu0 %v5394
        %5667 = vmatpush1.bf16.msra.mxu0 %v5393
        %5668 = vmatprep.subr.bf16.mxu0 %v5398
        %5669 = vmatpush1.bf16.msra.mxu0 %v5397
        %5670 = vmatprep.subr.bf16.mxu0 %v5402
        %5671 = vmatpush1.bf16.msra.mxu0 %v5401
        %5672 = vmatprep.subr.bf16.mxu0 %v5406
        %5673 = vmatpush1.bf16.msra.mxu0 %v5405
        %5674 = vmatprep.subr.bf16.mxu0 %v5410
        %5675 = vmatpush1.bf16.msra.mxu0 %v5409
        %5676 = vmatprep.subr.bf16.mxu0 %v5414
        %5677 = vmatpush1.bf16.msra.mxu0 %v5413
        %5678 = vmatprep.subr.bf16.mxu0 %v5418
        %5679 = vmatpush1.bf16.msra.mxu0 %v5417
        %5680 = vmatprep.subr.bf16.mxu0 %v5422
        %5681 = vmatpush1.bf16.msra.mxu0 %v5421
        %5682 = vmatprep.subr.bf16.mxu0 %v5426
        %5683 = vmatpush1.bf16.msra.mxu0 %v5425
        %5684 = vmatprep.subr.bf16.mxu0 %v5430
        %5685 = vmatpush1.bf16.msra.mxu0 %v5429
        %5686 = vmatprep.subr.bf16.mxu0 %v5434
        %5687 = vmatpush1.bf16.msra.mxu0 %v5433
        %5688 = vmatprep.subr.bf16.mxu0 %v5438
        %5689 = vmatpush1.bf16.msra.mxu0 %v5437
        %5690 = vmatprep.subr.bf16.mxu0 %v5442
        %5691 = vmatpush1.bf16.msra.mxu0 %v5441
        %5692 = vmatprep.subr.bf16.mxu0 %v5446
        %5693 = vmatpush1.bf16.msra.mxu0 %v5445
        %5694 = vmatprep.mubr.bf16.mxu0 %v4869
        %5695 = vmatmul.mubr.bf16.gmra.mrb[0].mxu0 %v4868
        %v5696 = vpop.f32.mrb[0].mxu0
        %v5697 = vadd.f32 %v5645, %v5696
        %v5698 = vpop.f32.mrb[0].mxu0
        %v5699 = vadd.f32 %v5649, %v5698
        %v5700 = vpop.f32.mrb[0].mxu0
        %v5701 = vpop.f32.mrb[0].mxu0
        %5702 = vdwg.mxu0
        %5703 = vmatprep.subr.bf16.mxu0 %v5450
        %5704 = vmatpush1.bf16.msra.mxu0 %v5449
        %5705 = vmatprep.subr.bf16.mxu0 %v5454
        %5706 = vmatpush1.bf16.msra.mxu0 %v5453
        %5707 = vmatprep.subr.bf16.mxu0 %v5458
        %5708 = vmatpush1.bf16.msra.mxu0 %v5457
        %5709 = vmatprep.subr.bf16.mxu0 %v5462
        %5710 = vmatpush1.bf16.msra.mxu0 %v5461
        %5711 = vmatprep.subr.bf16.mxu0 %v5466
        %5712 = vmatpush1.bf16.msra.mxu0 %v5465
        %5713 = vmatprep.subr.bf16.mxu0 %v5470
        %5714 = vmatpush1.bf16.msra.mxu0 %v5469
        %5715 = vmatprep.subr.bf16.mxu0 %v5474
        %5716 = vmatpush1.bf16.msra.mxu0 %v5473
        %5717 = vmatprep.subr.bf16.mxu0 %v5478
        %5718 = vmatpush1.bf16.msra.mxu0 %v5477
        %5719 = vmatprep.subr.bf16.mxu0 %v5482
        %5720 = vmatpush1.bf16.msra.mxu0 %v5481
        %5721 = vmatprep.subr.bf16.mxu0 %v5486
        %5722 = vmatpush1.bf16.msra.mxu0 %v5485
        %5723 = vmatprep.subr.bf16.mxu0 %v5490
        %5724 = vmatpush1.bf16.msra.mxu0 %v5489
        %5725 = vmatprep.subr.bf16.mxu0 %v5494
        %5726 = vmatpush1.bf16.msra.mxu0 %v5493
        %5727 = vmatprep.subr.bf16.mxu0 %v5498
        %5728 = vmatpush1.bf16.msra.mxu0 %v5497
        %5729 = vmatprep.subr.bf16.mxu0 %v5502
        %5730 = vmatpush1.bf16.msra.mxu0 %v5501
        %5731 = vmatprep.subr.bf16.mxu0 %v5506
        %5732 = vmatpush1.bf16.msra.mxu0 %v5505
        %5733 = vmatprep.subr.bf16.mxu0 %v5510
        %5734 = vmatpush1.bf16.msra.mxu0 %v5509
        %5735 = vmatprep.mubr.bf16.mxu0 %v4871
        %5736 = vmatmul.mubr.bf16.gmra.mrb[0].mxu0 %v4870
        %v5737 = vpop.f32.mrb[0].mxu0
        %v5738 = vadd.f32 %v5697, %v5737
        %v5739 = vpop.f32.mrb[0].mxu0
        %v5740 = vadd.f32 %v5699, %v5739
        %v5741 = vpop.f32.mrb[0].mxu0
        %v5742 = vpop.f32.mrb[0].mxu0
        %5743 = vdwg.mxu0
        %5744 = vmatprep.subr.bf16.mxu0 %v5388
        %5745 = vmatpush1.bf16.msra.mxu0 %v5387
        %5746 = vmatprep.subr.bf16.mxu0 %v5392
        %5747 = vmatpush1.bf16.msra.mxu0 %v5391
        %5748 = vmatprep.subr.bf16.mxu0 %v5396
        %5749 = vmatpush1.bf16.msra.mxu0 %v5395
        %5750 = vmatprep.subr.bf16.mxu0 %v5400
        %5751 = vmatpush1.bf16.msra.mxu0 %v5399
        %5752 = vmatprep.subr.bf16.mxu0 %v5404
        %5753 = vmatpush1.bf16.msra.mxu0 %v5403
        %5754 = vmatprep.subr.bf16.mxu0 %v5408
        %5755 = vmatpush1.bf16.msra.mxu0 %v5407
        %5756 = vmatprep.subr.bf16.mxu0 %v5412
        %5757 = vmatpush1.bf16.msra.mxu0 %v5411
        %5758 = vmatprep.subr.bf16.mxu0 %v5416
        %5759 = vmatpush1.bf16.msra.mxu0 %v5415
        %5760 = vmatprep.subr.bf16.mxu0 %v5420
        %5761 = vmatpush1.bf16.msra.mxu0 %v5419
        %5762 = vmatprep.subr.bf16.mxu0 %v5424
        %5763 = vmatpush1.bf16.msra.mxu0 %v5423
        %5764 = vmatprep.subr.bf16.mxu0 %v5428
        %5765 = vmatpush1.bf16.msra.mxu0 %v5427
        %5766 = vmatprep.subr.bf16.mxu0 %v5432
        %5767 = vmatpush1.bf16.msra.mxu0 %v5431
        %5768 = vmatprep.subr.bf16.mxu0 %v5436
        %5769 = vmatpush1.bf16.msra.mxu0 %v5435
        %5770 = vmatprep.subr.bf16.mxu0 %v5440
        %5771 = vmatpush1.bf16.msra.mxu0 %v5439
        %5772 = vmatprep.subr.bf16.mxu0 %v5444
        %5773 = vmatpush1.bf16.msra.mxu0 %v5443
        %5774 = vmatprep.subr.bf16.mxu0 %v5448
        %5775 = vmatpush1.bf16.msra.mxu0 %v5447
        %5776 = vmatprep.mubr.bf16.mxu0 %v4869
        %5777 = vmatmul.mubr.bf16.gmra.mrb[0].mxu0 %v4868
        %v5778 = vpop.f32.mrb[0].mxu0
        %v5779 = vadd.f32 %v5653, %v5778
        %v5780 = vpop.f32.mrb[0].mxu0
        %v5781 = vadd.f32 %v5657, %v5780
        %v5782 = vpop.f32.mrb[0].mxu0
        %v5783 = vpop.f32.mrb[0].mxu0
        %5784 = vdwg.mxu0
        %5785 = vmatprep.subr.bf16.mxu0 %v5452
        %5786 = vmatpush1.bf16.msra.mxu0 %v5451
        %5787 = vmatprep.subr.bf16.mxu0 %v5456
        %5788 = vmatpush1.bf16.msra.mxu0 %v5455
        %5789 = vmatprep.subr.bf16.mxu0 %v5460
        %5790 = vmatpush1.bf16.msra.mxu0 %v5459
        %5791 = vmatprep.subr.bf16.mxu0 %v5464
        %5792 = vmatpush1.bf16.msra.mxu0 %v5463
        %5793 = vmatprep.subr.bf16.mxu0 %v5468
        %5794 = vmatpush1.bf16.msra.mxu0 %v5467
        %5795 = vmatprep.subr.bf16.mxu0 %v5472
        %5796 = vmatpush1.bf16.msra.mxu0 %v5471
        %5797 = vmatprep.subr.bf16.mxu0 %v5476
        %5798 = vmatpush1.bf16.msra.mxu0 %v5475
        %5799 = vmatprep.subr.bf16.mxu0 %v5480
        %5800 = vmatpush1.bf16.msra.mxu0 %v5479
        %5801 = vmatprep.subr.bf16.mxu0 %v5484
        %5802 = vmatpush1.bf16.msra.mxu0 %v5483
        %5803 = vmatprep.subr.bf16.mxu0 %v5488
        %5804 = vmatpush1.bf16.msra.mxu0 %v5487
        %5805 = vmatprep.subr.bf16.mxu0 %v5492
        %5806 = vmatpush1.bf16.msra.mxu0 %v5491
        %5807 = vmatprep.subr.bf16.mxu0 %v5496
        %5808 = vmatpush1.bf16.msra.mxu0 %v5495
        %5809 = vmatprep.subr.bf16.mxu0 %v5500
        %5810 = vmatpush1.bf16.msra.mxu0 %v5499
        %5811 = vmatprep.subr.bf16.mxu0 %v5504
        %5812 = vmatpush1.bf16.msra.mxu0 %v5503
        %5813 = vmatprep.subr.bf16.mxu0 %v5508
        %5814 = vmatpush1.bf16.msra.mxu0 %v5507
        %5815 = vmatprep.subr.bf16.mxu0 %v5512
        %5816 = vmatpush1.bf16.msra.mxu0 %v5511
        %5817 = vmatprep.mubr.bf16.mxu0 %v4871
        %5818 = vmatmul.mubr.bf16.gmra.mrb[0].mxu0 %v4870
        %v5819 = vpop.f32.mrb[0].mxu0
        %v5820 = vadd.f32 %v5779, %v5819
        %v5821 = vpop.f32.mrb[0].mxu0
        %v5822 = vadd.f32 %v5781, %v5821
        %v5823 = vpop.f32.mrb[0].mxu0
        %v5824 = vpop.f32.mrb[0].mxu0
        %5825 = vdwg.mxu0
        %v5830 = vcombine.low %v5738, %v5740
        %v5831 = vcombine.low %v5820, %v5822
        %v5833 = vunpack.c.l.s4 1966171168
        %v5834 = vunpack.c.0.s8 %v5833
        %v5835 = vlaneseq
        %v5836 = vshrl.u32 %v5835, 7
        %v5837 = vsub.s32 %v5834, %v5836
        %v5838 = vrot.slane %v5830, %v5837
        %v5840 = vunpack.c.l.s4 1966171168
        %v5841 = vunpack.c.0.s8 %v5840
        %v5842 = vlaneseq
        %v5843 = vshrl.u32 %v5842, 7
        %v5844 = vsub.s32 %v5841, %v5843
        %v5845 = vrot.slane %v5831, %v5844
        %v5846 = vcombine.low %v5838, %v5845
        %v5848 = vunpack.c.l.s4 1966171168
        %v5849 = vunpack.c.0.s8 %v5848
        %v5850 = vlaneseq
        %v5851 = vshrl.u32 %v5850, 7
        %v5852 = vsub.s32 %v5849, %v5851
        %v5853 = vrot.slane %v5846, %v5852
        %5855 = vst.msk [vmem:[%s802] sm:$0xf] %vm4866, %v5853
        %v5856 = vmax.f32 %v5738, 0.0
        %v5857 = vmax.f32 %v5740, 0.0
        %v5858 = vmax.f32 %v5820, 0.0
        %v5859 = vmax.f32 %v5822, 0.0
        %v5860 = vpack.c.bf16 %v5856, %v5856
        %v5861 = vpack.c.bf16 %v5857, %v5857
        %v5862 = vpack.c.bf16 %v5858, %v5858
        %v5863 = vpack.c.bf16 %v5859, %v5859
        %v5864 = vld [vmem:[#allocation9] sm:$0xff]
        %v5865 = vld [vmem:[#allocation9 + $0x8] sm:$0xff]
        %v5866 = vld [vmem:[#allocation9 + $0x10] sm:$0xff]
        %v5867 = vld [vmem:[#allocation9 + $0x18] sm:$0xff]
        %v5868 = vld [vmem:[#allocation9 + $0x20] sm:$0xff]
        %v5869 = vld [vmem:[#allocation9 + $0x28] sm:$0xff]
        %v5870 = vld [vmem:[#allocation9 + $0x30] sm:$0xff]
        %v5871 = vld [vmem:[#allocation9 + $0x38] sm:$0xff]
        %v5872 = vld [vmem:[#allocation9 + $0x40] sm:$0xff]
        %v5873 = vld [vmem:[#allocation9 + $0x48] sm:$0xff]
        %v5874 = vld [vmem:[#allocation9 + $0x50] sm:$0xff]
        %v5875 = vld [vmem:[#allocation9 + $0x58] sm:$0xff]
        %v5876 = vld [vmem:[#allocation9 + $0x60] sm:$0xff]
        %v5877 = vld [vmem:[#allocation9 + $0x68] sm:$0xff]
        %v5878 = vld [vmem:[#allocation9 + $0x70] sm:$0xff]
        %v5879 = vld [vmem:[#allocation9 + $0x78] sm:$0xff]
        %v5880 = vld [vmem:[#allocation9 + $0x80] sm:$0xff]
        %v5881 = vld [vmem:[#allocation9 + $0x88] sm:$0xff]
        %v5882 = vld [vmem:[#allocation9 + $0x90] sm:$0xff]
        %v5883 = vld [vmem:[#allocation9 + $0x98] sm:$0xff]
        %v5884 = vld [vmem:[#allocation9 + $0xa0] sm:$0xff]
        %v5885 = vld [vmem:[#allocation9 + $0xa8] sm:$0xff]
        %v5886 = vld [vmem:[#allocation9 + $0xb0] sm:$0xff]
        %v5887 = vld [vmem:[#allocation9 + $0xb8] sm:$0xff]
        %v5888 = vld [vmem:[#allocation9 + $0xc0] sm:$0xff]
        %v5889 = vld [vmem:[#allocation9 + $0xc8] sm:$0xff]
        %v5890 = vld [vmem:[#allocation9 + $0xd0] sm:$0xff]
        %v5891 = vld [vmem:[#allocation9 + $0xd8] sm:$0xff]
        %v5892 = vld [vmem:[#allocation9 + $0xe0] sm:$0xff]
        %v5893 = vld [vmem:[#allocation9 + $0xe8] sm:$0xff]
        %v5894 = vld [vmem:[#allocation9 + $0xf0] sm:$0xff]
        %v5895 = vld [vmem:[#allocation9 + $0xf8] sm:$0xff]
        %v5896 = vld [vmem:[#allocation9 + $0x100] sm:$0xff]
        %v5897 = vld [vmem:[#allocation9 + $0x108] sm:$0xff]
        %v5898 = vld [vmem:[#allocation9 + $0x110] sm:$0xff]
        %v5899 = vld [vmem:[#allocation9 + $0x118] sm:$0xff]
        %v5900 = vld [vmem:[#allocation9 + $0x120] sm:$0xff]
        %v5901 = vld [vmem:[#allocation9 + $0x128] sm:$0xff]
        %v5902 = vld [vmem:[#allocation9 + $0x130] sm:$0xff]
        %v5903 = vld [vmem:[#allocation9 + $0x138] sm:$0xff]
        %v5904 = vld [vmem:[#allocation9 + $0x140] sm:$0xff]
        %v5905 = vld [vmem:[#allocation9 + $0x148] sm:$0xff]
        %v5906 = vld [vmem:[#allocation9 + $0x150] sm:$0xff]
        %v5907 = vld [vmem:[#allocation9 + $0x158] sm:$0xff]
        %v5908 = vld [vmem:[#allocation9 + $0x160] sm:$0xff]
        %v5909 = vld [vmem:[#allocation9 + $0x168] sm:$0xff]
        %v5910 = vld [vmem:[#allocation9 + $0x170] sm:$0xff]
        %v5911 = vld [vmem:[#allocation9 + $0x178] sm:$0xff]
        %v5912 = vld [vmem:[#allocation9 + $0x180] sm:$0xff]
        %v5913 = vld [vmem:[#allocation9 + $0x188] sm:$0xff]
        %v5914 = vld [vmem:[#allocation9 + $0x190] sm:$0xff]
        %v5915 = vld [vmem:[#allocation9 + $0x198] sm:$0xff]
        %v5916 = vld [vmem:[#allocation9 + $0x1a0] sm:$0xff]
        %v5917 = vld [vmem:[#allocation9 + $0x1a8] sm:$0xff]
        %v5918 = vld [vmem:[#allocation9 + $0x1b0] sm:$0xff]
        %v5919 = vld [vmem:[#allocation9 + $0x1b8] sm:$0xff]
        %v5920 = vld [vmem:[#allocation9 + $0x1c0] sm:$0xff]
        %v5921 = vld [vmem:[#allocation9 + $0x1c8] sm:$0xff]
        %v5922 = vld [vmem:[#allocation9 + $0x1d0] sm:$0xff]
        %v5923 = vld [vmem:[#allocation9 + $0x1d8] sm:$0xff]
        %v5924 = vld [vmem:[#allocation9 + $0x1e0] sm:$0xff]
        %v5925 = vld [vmem:[#allocation9 + $0x1e8] sm:$0xff]
        %v5926 = vld [vmem:[#allocation9 + $0x1f0] sm:$0xff]
        %v5927 = vld [vmem:[#allocation9 + $0x1f8] sm:$0xff]
        %v5928 = vld [vmem:[%s14] sm:$0x3]
        %v5993 = vunpack.c.l.b16 %v5864
        %v5994 = vunpack.c.h.b16 %v5864
        %v5995 = vunpack.c.l.b16 %v5865
        %v5996 = vunpack.c.h.b16 %v5865
        %v5997 = vunpack.c.l.b16 %v5866
        %v5998 = vunpack.c.h.b16 %v5866
        %v5999 = vunpack.c.l.b16 %v5867
        %v6000 = vunpack.c.h.b16 %v5867
        %v6001 = vunpack.c.l.b16 %v5868
        %v6002 = vunpack.c.h.b16 %v5868
        %v6003 = vunpack.c.l.b16 %v5869
        %v6004 = vunpack.c.h.b16 %v5869
        %v6005 = vunpack.c.l.b16 %v5870
        %v6006 = vunpack.c.h.b16 %v5870
        %v6007 = vunpack.c.l.b16 %v5871
        %v6008 = vunpack.c.h.b16 %v5871
        %v6009 = vunpack.c.l.b16 %v5872
        %v6010 = vunpack.c.h.b16 %v5872
        %v6011 = vunpack.c.l.b16 %v5873
        %v6012 = vunpack.c.h.b16 %v5873
        %v6013 = vunpack.c.l.b16 %v5874
        %v6014 = vunpack.c.h.b16 %v5874
        %v6015 = vunpack.c.l.b16 %v5875
        %v6016 = vunpack.c.h.b16 %v5875
        %v6017 = vunpack.c.l.b16 %v5876
        %v6018 = vunpack.c.h.b16 %v5876
        %v6019 = vunpack.c.l.b16 %v5877
        %v6020 = vunpack.c.h.b16 %v5877
        %v6021 = vunpack.c.l.b16 %v5878
        %v6022 = vunpack.c.h.b16 %v5878
        %v6023 = vunpack.c.l.b16 %v5879
        %v6024 = vunpack.c.h.b16 %v5879
        %v6025 = vunpack.c.l.b16 %v5880
        %v6026 = vunpack.c.h.b16 %v5880
        %v6027 = vunpack.c.l.b16 %v5881
        %v6028 = vunpack.c.h.b16 %v5881
        %v6029 = vunpack.c.l.b16 %v5882
        %v6030 = vunpack.c.h.b16 %v5882
        %v6031 = vunpack.c.l.b16 %v5883
        %v6032 = vunpack.c.h.b16 %v5883
        %v6033 = vunpack.c.l.b16 %v5884
        %v6034 = vunpack.c.h.b16 %v5884
        %v6035 = vunpack.c.l.b16 %v5885
        %v6036 = vunpack.c.h.b16 %v5885
        %v6037 = vunpack.c.l.b16 %v5886
        %v6038 = vunpack.c.h.b16 %v5886
        %v6039 = vunpack.c.l.b16 %v5887
        %v6040 = vunpack.c.h.b16 %v5887
        %v6041 = vunpack.c.l.b16 %v5888
        %v6042 = vunpack.c.h.b16 %v5888
        %v6043 = vunpack.c.l.b16 %v5889
        %v6044 = vunpack.c.h.b16 %v5889
        %v6045 = vunpack.c.l.b16 %v5890
        %v6046 = vunpack.c.h.b16 %v5890
        %v6047 = vunpack.c.l.b16 %v5891
        %v6048 = vunpack.c.h.b16 %v5891
        %v6049 = vunpack.c.l.b16 %v5892
        %v6050 = vunpack.c.h.b16 %v5892
        %v6051 = vunpack.c.l.b16 %v5893
        %v6052 = vunpack.c.h.b16 %v5893
        %v6053 = vunpack.c.l.b16 %v5894
        %v6054 = vunpack.c.h.b16 %v5894
        %v6055 = vunpack.c.l.b16 %v5895
        %v6056 = vunpack.c.h.b16 %v5895
        %v6057 = vunpack.c.l.b16 %v5896
        %v6058 = vunpack.c.h.b16 %v5896
        %v6059 = vunpack.c.l.b16 %v5897
        %v6060 = vunpack.c.h.b16 %v5897
        %v6061 = vunpack.c.l.b16 %v5898
        %v6062 = vunpack.c.h.b16 %v5898
        %v6063 = vunpack.c.l.b16 %v5899
        %v6064 = vunpack.c.h.b16 %v5899
        %v6065 = vunpack.c.l.b16 %v5900
        %v6066 = vunpack.c.h.b16 %v5900
        %v6067 = vunpack.c.l.b16 %v5901
        %v6068 = vunpack.c.h.b16 %v5901
        %v6069 = vunpack.c.l.b16 %v5902
        %v6070 = vunpack.c.h.b16 %v5902
        %v6071 = vunpack.c.l.b16 %v5903
        %v6072 = vunpack.c.h.b16 %v5903
        %v6073 = vunpack.c.l.b16 %v5904
        %v6074 = vunpack.c.h.b16 %v5904
        %v6075 = vunpack.c.l.b16 %v5905
        %v6076 = vunpack.c.h.b16 %v5905
        %v6077 = vunpack.c.l.b16 %v5906
        %v6078 = vunpack.c.h.b16 %v5906
        %v6079 = vunpack.c.l.b16 %v5907
        %v6080 = vunpack.c.h.b16 %v5907
        %v6081 = vunpack.c.l.b16 %v5908
        %v6082 = vunpack.c.h.b16 %v5908
        %v6083 = vunpack.c.l.b16 %v5909
        %v6084 = vunpack.c.h.b16 %v5909
        %v6085 = vunpack.c.l.b16 %v5910
        %v6086 = vunpack.c.h.b16 %v5910
        %v6087 = vunpack.c.l.b16 %v5911
        %v6088 = vunpack.c.h.b16 %v5911
        %v6089 = vunpack.c.l.b16 %v5912
        %v6090 = vunpack.c.h.b16 %v5912
        %v6091 = vunpack.c.l.b16 %v5913
        %v6092 = vunpack.c.h.b16 %v5913
        %v6093 = vunpack.c.l.b16 %v5914
        %v6094 = vunpack.c.h.b16 %v5914
        %v6095 = vunpack.c.l.b16 %v5915
        %v6096 = vunpack.c.h.b16 %v5915
        %v6097 = vunpack.c.l.b16 %v5916
        %v6098 = vunpack.c.h.b16 %v5916
        %v6099 = vunpack.c.l.b16 %v5917
        %v6100 = vunpack.c.h.b16 %v5917
        %v6101 = vunpack.c.l.b16 %v5918
        %v6102 = vunpack.c.h.b16 %v5918
        %v6103 = vunpack.c.l.b16 %v5919
        %v6104 = vunpack.c.h.b16 %v5919
        %v6105 = vunpack.c.l.b16 %v5920
        %v6106 = vunpack.c.h.b16 %v5920
        %v6107 = vunpack.c.l.b16 %v5921
        %v6108 = vunpack.c.h.b16 %v5921
        %v6109 = vunpack.c.l.b16 %v5922
        %v6110 = vunpack.c.h.b16 %v5922
        %v6111 = vunpack.c.l.b16 %v5923
        %v6112 = vunpack.c.h.b16 %v5923
        %v6113 = vunpack.c.l.b16 %v5924
        %v6114 = vunpack.c.h.b16 %v5924
        %v6115 = vunpack.c.l.b16 %v5925
        %v6116 = vunpack.c.h.b16 %v5925
        %v6117 = vunpack.c.l.b16 %v5926
        %v6118 = vunpack.c.h.b16 %v5926
        %v6119 = vunpack.c.l.b16 %v5927
        %v6120 = vunpack.c.h.b16 %v5927
        %v6121 = vpack.c.b16 %v5995, %v5993
        %v6122 = vpack.c.b16 %v5996, %v5994
        %v6123 = vpack.c.b16 %v5999, %v5997
        %v6124 = vpack.c.b16 %v6000, %v5998
        %v6125 = vpack.c.b16 %v6003, %v6001
        %v6126 = vpack.c.b16 %v6004, %v6002
        %v6127 = vpack.c.b16 %v6007, %v6005
        %v6128 = vpack.c.b16 %v6008, %v6006
        %v6129 = vpack.c.b16 %v6011, %v6009
        %v6130 = vpack.c.b16 %v6012, %v6010
        %v6131 = vpack.c.b16 %v6015, %v6013
        %v6132 = vpack.c.b16 %v6016, %v6014
        %v6133 = vpack.c.b16 %v6019, %v6017
        %v6134 = vpack.c.b16 %v6020, %v6018
        %v6135 = vpack.c.b16 %v6023, %v6021
        %v6136 = vpack.c.b16 %v6024, %v6022
        %v6137 = vpack.c.b16 %v6027, %v6025
        %v6138 = vpack.c.b16 %v6028, %v6026
        %v6139 = vpack.c.b16 %v6031, %v6029
        %v6140 = vpack.c.b16 %v6032, %v6030
        %v6141 = vpack.c.b16 %v6035, %v6033
        %v6142 = vpack.c.b16 %v6036, %v6034
        %v6143 = vpack.c.b16 %v6039, %v6037
        %v6144 = vpack.c.b16 %v6040, %v6038
        %v6145 = vpack.c.b16 %v6043, %v6041
        %v6146 = vpack.c.b16 %v6044, %v6042
        %v6147 = vpack.c.b16 %v6047, %v6045
        %v6148 = vpack.c.b16 %v6048, %v6046
        %v6149 = vpack.c.b16 %v6051, %v6049
        %v6150 = vpack.c.b16 %v6052, %v6050
        %v6151 = vpack.c.b16 %v6055, %v6053
        %v6152 = vpack.c.b16 %v6056, %v6054
        %v6153 = vpack.c.b16 %v6059, %v6057
        %v6154 = vpack.c.b16 %v6060, %v6058
        %v6155 = vpack.c.b16 %v6063, %v6061
        %v6156 = vpack.c.b16 %v6064, %v6062
        %v6157 = vpack.c.b16 %v6067, %v6065
        %v6158 = vpack.c.b16 %v6068, %v6066
        %v6159 = vpack.c.b16 %v6071, %v6069
        %v6160 = vpack.c.b16 %v6072, %v6070
        %v6161 = vpack.c.b16 %v6075, %v6073
        %v6162 = vpack.c.b16 %v6076, %v6074
        %v6163 = vpack.c.b16 %v6079, %v6077
        %v6164 = vpack.c.b16 %v6080, %v6078
        %v6165 = vpack.c.b16 %v6083, %v6081
        %v6166 = vpack.c.b16 %v6084, %v6082
        %v6167 = vpack.c.b16 %v6087, %v6085
        %v6168 = vpack.c.b16 %v6088, %v6086
        %v6169 = vpack.c.b16 %v6091, %v6089
        %v6170 = vpack.c.b16 %v6092, %v6090
        %v6171 = vpack.c.b16 %v6095, %v6093
        %v6172 = vpack.c.b16 %v6096, %v6094
        %v6173 = vpack.c.b16 %v6099, %v6097
        %v6174 = vpack.c.b16 %v6100, %v6098
        %v6175 = vpack.c.b16 %v6103, %v6101
        %v6176 = vpack.c.b16 %v6104, %v6102
        %v6177 = vpack.c.b16 %v6107, %v6105
        %v6178 = vpack.c.b16 %v6108, %v6106
        %v6179 = vpack.c.b16 %v6111, %v6109
        %v6180 = vpack.c.b16 %v6112, %v6110
        %v6181 = vpack.c.b16 %v6115, %v6113
        %v6182 = vpack.c.b16 %v6116, %v6114
        %v6183 = vpack.c.b16 %v6119, %v6117
        %v6184 = vpack.c.b16 %v6120, %v6118
        %v6250 = vlaneseq
        %v6251 = vshrl.u32 %v6250, 7
        %v6252 = vsub.s32 0, %v6251
        %v6253 = vrot.slane %v5928, %v6252
        %v6254 = vlaneseq
        %v6255 = vshrl.u32 %v6254, 7
        %v6256 = vsub.s32 1, %v6255
        %v6257 = vrot.slane %v5928, %v6256
        %6260 = vmatprep.subr.bf16.mxu0 %v6122
        %6261 = vmatpush1.bf16.msra.mxu0 %v6121
        %6262 = vmatprep.subr.bf16.mxu0 %v6124
        %6263 = vmatpush1.bf16.msra.mxu0 %v6123
        %6264 = vmatprep.subr.bf16.mxu0 %v6126
        %6265 = vmatpush1.bf16.msra.mxu0 %v6125
        %6266 = vmatprep.subr.bf16.mxu0 %v6128
        %6267 = vmatpush1.bf16.msra.mxu0 %v6127
        %6268 = vmatprep.subr.bf16.mxu0 %v6130
        %6269 = vmatpush1.bf16.msra.mxu0 %v6129
        %6270 = vmatprep.subr.bf16.mxu0 %v6132
        %6271 = vmatpush1.bf16.msra.mxu0 %v6131
        %6272 = vmatprep.subr.bf16.mxu0 %v6134
        %6273 = vmatpush1.bf16.msra.mxu0 %v6133
        %6274 = vmatprep.subr.bf16.mxu0 %v6136
        %6275 = vmatpush1.bf16.msra.mxu0 %v6135
        %6276 = vmatprep.subr.bf16.mxu0 %v6138
        %6277 = vmatpush1.bf16.msra.mxu0 %v6137
        %6278 = vmatprep.subr.bf16.mxu0 %v6140
        %6279 = vmatpush1.bf16.msra.mxu0 %v6139
        %6280 = vmatprep.subr.bf16.mxu0 %v6142
        %6281 = vmatpush1.bf16.msra.mxu0 %v6141
        %6282 = vmatprep.subr.bf16.mxu0 %v6144
        %6283 = vmatpush1.bf16.msra.mxu0 %v6143
        %6284 = vmatprep.subr.bf16.mxu0 %v6146
        %6285 = vmatpush1.bf16.msra.mxu0 %v6145
        %6286 = vmatprep.subr.bf16.mxu0 %v6148
        %6287 = vmatpush1.bf16.msra.mxu0 %v6147
        %6288 = vmatprep.subr.bf16.mxu0 %v6150
        %6289 = vmatpush1.bf16.msra.mxu0 %v6149
        %6290 = vmatprep.subr.bf16.mxu0 %v6152
        %6291 = vmatpush1.bf16.msra.mxu0 %v6151
        %6292 = vmatprep.mubr.bf16.mxu0 %v5861
        %6293 = vmatmul.mubr.bf16.gmra.mrb[0].mxu0 %v5860
        %v6294 = vpop.f32.mrb[0].mxu0
        %v6295 = vadd.f32 %v6253, %v6294
        %v6296 = vpop.f32.mrb[0].mxu0
        %v6297 = vadd.f32 %v6257, %v6296
        %v6298 = vpop.f32.mrb[0].mxu0
        %v6299 = vpop.f32.mrb[0].mxu0
        %6300 = vdwg.mxu0
        %6301 = vmatprep.subr.bf16.mxu0 %v6154
        %6302 = vmatpush1.bf16.msra.mxu0 %v6153
        %6303 = vmatprep.subr.bf16.mxu0 %v6156
        %6304 = vmatpush1.bf16.msra.mxu0 %v6155
        %6305 = vmatprep.subr.bf16.mxu0 %v6158
        %6306 = vmatpush1.bf16.msra.mxu0 %v6157
        %6307 = vmatprep.subr.bf16.mxu0 %v6160
        %6308 = vmatpush1.bf16.msra.mxu0 %v6159
        %6309 = vmatprep.subr.bf16.mxu0 %v6162
        %6310 = vmatpush1.bf16.msra.mxu0 %v6161
        %6311 = vmatprep.subr.bf16.mxu0 %v6164
        %6312 = vmatpush1.bf16.msra.mxu0 %v6163
        %6313 = vmatprep.subr.bf16.mxu0 %v6166
        %6314 = vmatpush1.bf16.msra.mxu0 %v6165
        %6315 = vmatprep.subr.bf16.mxu0 %v6168
        %6316 = vmatpush1.bf16.msra.mxu0 %v6167
        %6317 = vmatprep.subr.bf16.mxu0 %v6170
        %6318 = vmatpush1.bf16.msra.mxu0 %v6169
        %6319 = vmatprep.subr.bf16.mxu0 %v6172
        %6320 = vmatpush1.bf16.msra.mxu0 %v6171
        %6321 = vmatprep.subr.bf16.mxu0 %v6174
        %6322 = vmatpush1.bf16.msra.mxu0 %v6173
        %6323 = vmatprep.subr.bf16.mxu0 %v6176
        %6324 = vmatpush1.bf16.msra.mxu0 %v6175
        %6325 = vmatprep.subr.bf16.mxu0 %v6178
        %6326 = vmatpush1.bf16.msra.mxu0 %v6177
        %6327 = vmatprep.subr.bf16.mxu0 %v6180
        %6328 = vmatpush1.bf16.msra.mxu0 %v6179
        %6329 = vmatprep.subr.bf16.mxu0 %v6182
        %6330 = vmatpush1.bf16.msra.mxu0 %v6181
        %6331 = vmatprep.subr.bf16.mxu0 %v6184
        %6332 = vmatpush1.bf16.msra.mxu0 %v6183
        %6333 = vmatprep.mubr.bf16.mxu0 %v5863
        %6334 = vmatmul.mubr.bf16.gmra.mrb[0].mxu0 %v5862
        %v6335 = vpop.f32.mrb[0].mxu0
        %v6336 = vadd.f32 %v6295, %v6335
        %v6337 = vpop.f32.mrb[0].mxu0
        %v6338 = vadd.f32 %v6297, %v6337
        %v6339 = vpop.f32.mrb[0].mxu0
        %v6340 = vpop.f32.mrb[0].mxu0
        %6341 = vdwg.mxu0
        %v6342 = vmax.f32 %v6336, 0.0
        %v6343 = vmax.f32 %v6338, 0.0
        %v6344 = vpack.c.bf16 %v6342, %v6342
        %v6345 = vpack.c.bf16 %v6343, %v6343
        %v6346 = vld [vmem:[#allocation11] sm:$0xf]
        %v6347 = vld [vmem:[#allocation11 + $0x4] sm:$0xf]
        %v6348 = vld [vmem:[#allocation11 + $0x8] sm:$0xf]
        %v6349 = vld [vmem:[#allocation11 + $0xc] sm:$0xf]
        %v6350 = vld [vmem:[#allocation11 + $0x10] sm:$0xf]
        %v6351 = vld [vmem:[#allocation11 + $0x14] sm:$0xf]
        %v6352 = vld [vmem:[#allocation11 + $0x18] sm:$0xf]
        %v6353 = vld [vmem:[#allocation11 + $0x1c] sm:$0xf]
        %v6354 = vld [vmem:[#allocation11 + $0x20] sm:$0xf]
        %v6355 = vld [vmem:[#allocation11 + $0x24] sm:$0xf]
        %v6356 = vld [vmem:[#allocation11 + $0x28] sm:$0xf]
        %v6357 = vld [vmem:[#allocation11 + $0x2c] sm:$0xf]
        %v6358 = vld [vmem:[#allocation11 + $0x30] sm:$0xf]
        %v6359 = vld [vmem:[#allocation11 + $0x34] sm:$0xf]
        %v6360 = vld [vmem:[#allocation11 + $0x38] sm:$0xf]
        %v6361 = vld [vmem:[#allocation11 + $0x3c] sm:$0xf]
        %v6362 = vld [vmem:[#allocation11 + $0x40] sm:$0xf]
        %v6363 = vld [vmem:[#allocation11 + $0x44] sm:$0xf]
        %v6364 = vld [vmem:[#allocation11 + $0x48] sm:$0xf]
        %v6365 = vld [vmem:[#allocation11 + $0x4c] sm:$0xf]
        %v6366 = vld [vmem:[#allocation11 + $0x50] sm:$0xf]
        %v6367 = vld [vmem:[#allocation11 + $0x54] sm:$0xf]
        %v6368 = vld [vmem:[#allocation11 + $0x58] sm:$0xf]
        %v6369 = vld [vmem:[#allocation11 + $0x5c] sm:$0xf]
        %v6370 = vld [vmem:[#allocation11 + $0x60] sm:$0xf]
        %v6371 = vld [vmem:[#allocation11 + $0x64] sm:$0xf]
        %v6372 = vld [vmem:[#allocation11 + $0x68] sm:$0xf]
        %v6373 = vld [vmem:[#allocation11 + $0x6c] sm:$0xf]
        %v6374 = vld [vmem:[#allocation11 + $0x70] sm:$0xf]
        %v6375 = vld [vmem:[#allocation11 + $0x74] sm:$0xf]
        %v6376 = vld [vmem:[#allocation11 + $0x78] sm:$0xf]
        %v6377 = vld [vmem:[#allocation11 + $0x7c] sm:$0xf]
        %v6378 = vld [vmem:[%s16] sm:$0x1]
        %v6411 = vunpack.c.l.b16 %v6346
        %v6412 = vunpack.c.l.b16 %v6347
        %v6413 = vunpack.c.l.b16 %v6348
        %v6414 = vunpack.c.l.b16 %v6349
        %v6415 = vunpack.c.l.b16 %v6350
        %v6416 = vunpack.c.l.b16 %v6351
        %v6417 = vunpack.c.l.b16 %v6352
        %v6418 = vunpack.c.l.b16 %v6353
        %v6419 = vunpack.c.l.b16 %v6354
        %v6420 = vunpack.c.l.b16 %v6355
        %v6421 = vunpack.c.l.b16 %v6356
        %v6422 = vunpack.c.l.b16 %v6357
        %v6423 = vunpack.c.l.b16 %v6358
        %v6424 = vunpack.c.l.b16 %v6359
        %v6425 = vunpack.c.l.b16 %v6360
        %v6426 = vunpack.c.l.b16 %v6361
        %v6427 = vunpack.c.l.b16 %v6362
        %v6428 = vunpack.c.l.b16 %v6363
        %v6429 = vunpack.c.l.b16 %v6364
        %v6430 = vunpack.c.l.b16 %v6365
        %v6431 = vunpack.c.l.b16 %v6366
        %v6432 = vunpack.c.l.b16 %v6367
        %v6433 = vunpack.c.l.b16 %v6368
        %v6434 = vunpack.c.l.b16 %v6369
        %v6435 = vunpack.c.l.b16 %v6370
        %v6436 = vunpack.c.l.b16 %v6371
        %v6437 = vunpack.c.l.b16 %v6372
        %v6438 = vunpack.c.l.b16 %v6373
        %v6439 = vunpack.c.l.b16 %v6374
        %v6440 = vunpack.c.l.b16 %v6375
        %v6441 = vunpack.c.l.b16 %v6376
        %v6442 = vunpack.c.l.b16 %v6377
        %v6443 = vpack.c.b16 %v6412, %v6411
        %v6444 = vpack.c.b16 %v6414, %v6413
        %v6445 = vpack.c.b16 %v6416, %v6415
        %v6446 = vpack.c.b16 %v6418, %v6417
        %v6447 = vpack.c.b16 %v6420, %v6419
        %v6448 = vpack.c.b16 %v6422, %v6421
        %v6449 = vpack.c.b16 %v6424, %v6423
        %v6450 = vpack.c.b16 %v6426, %v6425
        %v6451 = vpack.c.b16 %v6428, %v6427
        %v6452 = vpack.c.b16 %v6430, %v6429
        %v6453 = vpack.c.b16 %v6432, %v6431
        %v6454 = vpack.c.b16 %v6434, %v6433
        %v6455 = vpack.c.b16 %v6436, %v6435
        %v6456 = vpack.c.b16 %v6438, %v6437
        %v6457 = vpack.c.b16 %v6440, %v6439
        %v6458 = vpack.c.b16 %v6442, %v6441
        %6475 = vmatprep.subr.bf16.mxu0 0
        %6476 = vmatpush1.bf16.msra.mxu0 %v6443
        %6477 = vmatprep.subr.bf16.mxu0 0
        %6478 = vmatpush1.bf16.msra.mxu0 %v6444
        %6479 = vmatprep.subr.bf16.mxu0 0
        %6480 = vmatpush1.bf16.msra.mxu0 %v6445
        %6481 = vmatprep.subr.bf16.mxu0 0
        %6482 = vmatpush1.bf16.msra.mxu0 %v6446
        %6483 = vmatprep.subr.bf16.mxu0 0
        %6484 = vmatpush1.bf16.msra.mxu0 %v6447
        %6485 = vmatprep.subr.bf16.mxu0 0
        %6486 = vmatpush1.bf16.msra.mxu0 %v6448
        %6487 = vmatprep.subr.bf16.mxu0 0
        %6488 = vmatpush1.bf16.msra.mxu0 %v6449
        %6489 = vmatprep.subr.bf16.mxu0 0
        %6490 = vmatpush1.bf16.msra.mxu0 %v6450
        %6491 = vmatprep.subr.bf16.mxu0 0
        %6492 = vmatpush1.bf16.msra.mxu0 %v6451
        %6493 = vmatprep.subr.bf16.mxu0 0
        %6494 = vmatpush1.bf16.msra.mxu0 %v6452
        %6495 = vmatprep.subr.bf16.mxu0 0
        %6496 = vmatpush1.bf16.msra.mxu0 %v6453
        %6497 = vmatprep.subr.bf16.mxu0 0
        %6498 = vmatpush1.bf16.msra.mxu0 %v6454
        %6499 = vmatprep.subr.bf16.mxu0 0
        %6500 = vmatpush1.bf16.msra.mxu0 %v6455
        %6501 = vmatprep.subr.bf16.mxu0 0
        %6502 = vmatpush1.bf16.msra.mxu0 %v6456
        %6503 = vmatprep.subr.bf16.mxu0 0
        %6504 = vmatpush1.bf16.msra.mxu0 %v6457
        %6505 = vmatprep.subr.bf16.mxu0 0
        %6506 = vmatpush1.bf16.msra.mxu0 %v6458
        %6507 = vmatprep.mubr.bf16.mxu0 %v6345
        %6508 = vmatmul.mubr.bf16.gmra.mrb[0].mxu0 %v6344
        %v6509 = vpop.f32.mrb[0].mxu0
        %v6510 = vadd.f32 %v6378, %v6509
        %v6511 = vpop.f32.mrb[0].mxu0
        %v6512 = vpop.f32.mrb[0].mxu0
        %v6513 = vpop.f32.mrb[0].mxu0
        %6514 = vdwg.mxu0
        %6515 = vst [vmem:[%s785] sm:$0x1] %v6510
        %s6516 = sand.u32 %s414, 1
        %s6517 = scalar_lea.sflag [#allocation5], %s6516
        %s6518 = sand.u32 %s414, 1
        %s6519 = smul.addr %s6518, 32
        %s6520 = scalar_lea.vmem [#allocation12], %s6519
        %s6521 = sand.u32 %s44, 1
        %s6522 = scalar_lea.sflag [#allocation14], %s6521
        %s6523 = sand.u32 %s440, 1
        %s6524 = smul.addr %s6523, 32
        %s6525 = scalar_lea.vmem [#allocation13], %s6524
        %p6526 = scmp.lt.s32.totalorder %s44, 1
        %s6527 = scalar_select %p6526, %s44, 1
        %s6528 = smul.addr %s6527, 8
        %s6529 = scalar_lea.vmem %s19, %s6528
        %p6530 = scmp.lt.s32.totalorder %s44, 1
        %s6531 = scalar_select %p6530, %s44, 1
        %s6532 = smul.addr %s6531, 4
        %s6533 = scalar_lea.vmem %s20, %s6532
        %p6534 = scmp.lt.s32.totalorder %s44, 1
        %s6535 = scalar_select %p6534, %s44, 1
        %s6536 = smul.addr %s6535, 4
        %s6537 = scalar_lea.vmem %s21, %s6536
        %s6538 = sand.u32 %s44, 1
        %s6539 = scalar_lea.sflag [#allocation14], %s6538
        %s6540 = sand.u32 %s544, 1
        %s6541 = scalar_lea.vmem [#allocation15], %s6540
        // Predicated region
        $region109: #{gmvit_mini_forward.1} parent=87 // pred_check
          %p6542 = pneg %p424
        $region110: #{gmvit_mini_forward.1} parent=87 // pred_check_branch
          %6544 = sbr.rel (%p6542) target = $region112
        $region111: #{gmvit_mini_forward.1} parent=87 // pred_region
          %s6546 = ssub.s32 512, 512
          %6547 = vsyncadd %s6517, %s6546
          %s6548 = smul.addr %s44, 4
          %s6549 = smul.addr %s6548, 128
          %s6550 = scalar_lea.hbm %s17, %s6549
          %s6552 = sshll.u32 %s6520, 4
          %s6553 = int_to_ptr.vmem [resolvable:$true] %s6552
          %6555 = dma.vmem_to_hbm [thread:$0]  %s6553, 512, %s6550, %s6517
        $region112: #{gmvit_mini_forward.1} parent=87 // pred_fallthru
          _
        // Predicated region
        $region113: #{gmvit_mini_forward.1} parent=87 // pred_check
          %p6556 = pneg %p450
        $region114: #{gmvit_mini_forward.1} parent=87 // pred_check_branch
          %6558 = sbr.rel (%p6556) target = $region116
        $region115: #{gmvit_mini_forward.1} parent=87 // pred_region
          %s6560 = ssub.s32 512, 512
          %6561 = vsyncadd %s6522, %s6560
          %s6562 = smul.addr %s44, 4
          %s6563 = smul.addr %s6562, 128
          %s6564 = scalar_lea.hbm %s18, %s6563
          %s6566 = sshll.u32 %s6525, 4
          %s6567 = int_to_ptr.vmem [resolvable:$true] %s6566
          %6569 = dma.vmem_to_hbm [thread:$0]  %s6567, 512, %s6564, %s6522
        $region116: #{gmvit_mini_forward.1} parent=87 // pred_fallthru
          _
        // Predicated region
        $region117: #{gmvit_mini_forward.1} parent=87 // pred_check
          %p6570 = pneg %p476
        $region118: #{gmvit_mini_forward.1} parent=87 // pred_check_branch
          %6572 = sbr.rel (%p6570) target = $region120
        $region119: #{gmvit_mini_forward.1} parent=87 // pred_region
          _
        $region120: #{gmvit_mini_forward.1} parent=87 // pred_fallthru
          _
        // Predicated region
        $region121: #{gmvit_mini_forward.1} parent=87 // pred_check
          %p6573 = pneg %p502
        $region122: #{gmvit_mini_forward.1} parent=87 // pred_check_branch
          %6575 = sbr.rel (%p6573) target = $region124
        $region123: #{gmvit_mini_forward.1} parent=87 // pred_region
          _
        $region124: #{gmvit_mini_forward.1} parent=87 // pred_fallthru
          _
        // Predicated region
        $region125: #{gmvit_mini_forward.1} parent=87 // pred_check
          %p6576 = pneg %p528
        $region126: #{gmvit_mini_forward.1} parent=87 // pred_check_branch
          %6578 = sbr.rel (%p6576) target = $region128
        $region127: #{gmvit_mini_forward.1} parent=87 // pred_region
          _
        $region128: #{gmvit_mini_forward.1} parent=87 // pred_fallthru
          _
        // Predicated region
        $region129: #{gmvit_mini_forward.1} parent=87 // pred_check
          %p6579 = pneg %p554
        $region130: #{gmvit_mini_forward.1} parent=87 // pred_check_branch
          %6581 = sbr.rel (%p6579) target = $region132
        $region131: #{gmvit_mini_forward.1} parent=87 // pred_region
          %s6583 = ssub.s32 16, 16
          %6584 = vsyncadd %s6539, %s6583
          %s6585 = smul.addr %s44, 16
          %s6586 = scalar_lea.hbm %s22, %s6585
          %s6588 = sshll.u32 %s6541, 4
          %s6589 = int_to_ptr.vmem [resolvable:$true] %s6588
          %6591 = dma.vmem_to_hbm [thread:$0]  %s6589, 16, %s6586, %s6539
        $region132: #{gmvit_mini_forward.1} parent=87 // pred_fallthru
          _
      $region88: #{gmvit_mini_forward.1} parent=5 // pred_fallthru
        _
      %p6592 = scmp.le.s32.totalorder 2, %s39
      // Predicated region
      $region133: #{gmvit_mini_forward.1} parent=5 // pred_check
        %p6593 = pneg %p6592
      $region134: #{gmvit_mini_forward.1} parent=5 // pred_check_branch
        %6595 = sbr.rel (%p6593) target = $region136
      $region135: #{gmvit_mini_forward.1} parent=5 // pred_region
        %s6596 = ssub.s32 %s39, 2
        // Predicated region
        $region137: #{gmvit_mini_forward.1} parent=135 // pred_check
          %p6597 = pneg %p430
        $region138: #{gmvit_mini_forward.1} parent=135 // pred_check_branch
          %6599 = sbr.rel (%p6597) target = $region140
        $region139: #{gmvit_mini_forward.1} parent=135 // pred_region
          %s6600 = sand.u32 %s415, 1
          %s6601 = scalar_lea.sflag [#allocation5], %s6600
          %s6602 = sand.u32 %s415, 1
          %s6603 = smul.addr %s6602, 32
          %s6604 = scalar_lea.vmem [#allocation12], %s6603
          %6605 = dma.done %s6601, 512
        $region140: #{gmvit_mini_forward.1} parent=135 // pred_fallthru
          _
        // Predicated region
        $region141: #{gmvit_mini_forward.1} parent=135 // pred_check
          %p6606 = pneg %p456
        $region142: #{gmvit_mini_forward.1} parent=135 // pred_check_branch
          %6608 = sbr.rel (%p6606) target = $region144
        $region143: #{gmvit_mini_forward.1} parent=135 // pred_region
          %s6609 = sand.u32 %s45, 1
          %s6610 = scalar_lea.sflag [#allocation14], %s6609
          %s6611 = sand.u32 %s441, 1
          %s6612 = smul.addr %s6611, 32
          %s6613 = scalar_lea.vmem [#allocation13], %s6612
          %6614 = dma.done %s6610, 512
        $region144: #{gmvit_mini_forward.1} parent=135 // pred_fallthru
          _
        // Predicated region
        $region145: #{gmvit_mini_forward.1} parent=135 // pred_check
          %p6615 = pneg %p482
        $region146: #{gmvit_mini_forward.1} parent=135 // pred_check_branch
          %6617 = sbr.rel (%p6615) target = $region148
        $region147: #{gmvit_mini_forward.1} parent=135 // pred_region
          %p6618 = scmp.lt.s32.totalorder %s45, 1
          %s6619 = scalar_select %p6618, %s45, 1
          %s6620 = smul.addr %s6619, 8
          %s6621 = scalar_lea.vmem %s19, %s6620
        $region148: #{gmvit_mini_forward.1} parent=135 // pred_fallthru
          _
        // Predicated region
        $region149: #{gmvit_mini_forward.1} parent=135 // pred_check
          %p6622 = pneg %p508
        $region150: #{gmvit_mini_forward.1} parent=135 // pred_check_branch
          %6624 = sbr.rel (%p6622) target = $region152
        $region151: #{gmvit_mini_forward.1} parent=135 // pred_region
          %p6625 = scmp.lt.s32.totalorder %s45, 1
          %s6626 = scalar_select %p6625, %s45, 1
          %s6627 = smul.addr %s6626, 4
          %s6628 = scalar_lea.vmem %s20, %s6627
        $region152: #{gmvit_mini_forward.1} parent=135 // pred_fallthru
          _
        // Predicated region
        $region153: #{gmvit_mini_forward.1} parent=135 // pred_check
          %p6629 = pneg %p534
        $region154: #{gmvit_mini_forward.1} parent=135 // pred_check_branch
          %6631 = sbr.rel (%p6629) target = $region156
        $region155: #{gmvit_mini_forward.1} parent=135 // pred_region
          %p6632 = scmp.lt.s32.totalorder %s45, 1
          %s6633 = scalar_select %p6632, %s45, 1
          %s6634 = smul.addr %s6633, 4
          %s6635 = scalar_lea.vmem %s21, %s6634
        $region156: #{gmvit_mini_forward.1} parent=135 // pred_fallthru
          _
        // Predicated region
        $region157: #{gmvit_mini_forward.1} parent=135 // pred_check
          %p6636 = pneg %p560
        $region158: #{gmvit_mini_forward.1} parent=135 // pred_check_branch
          %6638 = sbr.rel (%p6636) target = $region160
        $region159: #{gmvit_mini_forward.1} parent=135 // pred_region
          %s6639 = sand.u32 %s45, 1
          %s6640 = scalar_lea.sflag [#allocation14], %s6639
          %s6641 = sand.u32 %s545, 1
          %s6642 = scalar_lea.vmem [#allocation15], %s6641
          %6643 = dma.done %s6640, 16
        $region160: #{gmvit_mini_forward.1} parent=135 // pred_fallthru
          _
      $region136: #{gmvit_mini_forward.1} parent=5 // pred_fallthru
        _
    $region6: #{gmvit_mini_forward.1} parent=1 // loop_footer
      %s43 = sadd.s32 1, %s39
    $region7: #{gmvit_mini_forward.1} parent=1 // loop_footer_branch
      %38 = sbr.rel target = $region3
    $region8: #{gmvit_mini_forward.1} parent=1 // loop_exit
      _
    %6644 = vsyncpa [#allocation4], 1
    %s6645 = scalar_lea.sflag [#allocation4], 1
    %6646 = vsyncpa %s6645, 1
    %6647 = vsyncpa [#allocation7], 1
    %6648 = vsyncpa [#allocation10], 1
    %6649 = vsyncpa [#allocation5], 1
    %s6650 = scalar_lea.sflag [#allocation5], 1
    %6651 = vsyncpa %s6650, 1
    %6652 = vsyncpa [#allocation14], 1
    %s6653 = scalar_lea.sflag [#allocation14], 1
    %6654 = vsyncpa %s6653, 1

</llo_original>
